<compile_context>
chip_gen: v6e
topology: v6e:2x2x1
jax: 0.10.0
libtpu: 0.0.40
codegen_flags: <defaults>
</compile_context>

<pallas_src>
import functools

import jax
import jax.numpy as jnp
from jax import lax
from jax.experimental import pallas as pl
from jax.experimental.pallas import tpu as pltpu

F32 = jnp.float32


# ------------------------------- fused GATv2 kernel (one batch element per grid step) --------
def _gatv2_kernel(x_ref, adj_ref, ioh_ref, joh_ref, ioht_ref,
                  w1_ref, b1_ref,
                  p1_ref, aw1_ref,
                  wet_ref,
                  w2g_ref, w2h_ref, b2_ref,
                  p2_ref, aw2_ref,
                  wag_ref, wao_ref, ba_ref,
                  wb_ref, bb_ref, wc_ref, bc_ref,
                  q_ref, *, n_nodes):
    N = n_nodes
    NN = N * N

    # constant 0/1 selectors (flat index k = i*N + j):
    #   ioh[k, m]  = [m == k // N],  joh[k, m] = [m == k % N],  ioht = ioh^T
    ioh = ioh_ref[...]                   # [NN, N]
    joh = joh_ref[...]                   # [NN, N]
    ioht = ioht_ref[...]                 # [N, NN]
    spair = ioh + joh                    # pair-sum selector: (spair @ g)[k] = g[i_k] + g[j_k]

    # ---------------- adjacency preprocessing ([N, N]; row = i, lane = j) ----------------
    adj = adj_ref[0]                                             # [N, N]
    masked = jnp.where(adj == 0.0, jnp.inf, adj)                 # masked_fill(adj == 0, inf)
    d = jnp.min(masked, axis=1, keepdims=True) * 0.5             # min over dim=2, / 2
    row = lax.broadcasted_iota(jnp.int32, (N, N), 0)
    col = lax.broadcasted_iota(jnp.int32, (N, N), 1)
    adj2 = adj + jnp.where(row == col, d, 0.0)                   # adj + diag_embed(d)
    norm = jnp.maximum(
        jnp.sqrt(jnp.sum(adj2 * adj2, axis=1, keepdims=True)), 1e-12)
    has_edge = adj2 != 0.0                                       # direct no-edge detection
    mask_mat = has_edge.astype(F32)                              # mask_no_edge, [N, N]
    # 1 / F.normalize(adj2, p=2, dim=2)  ==  norm / adj2 on edges, 0 elsewhere
    inv = jnp.where(has_edge, norm / jnp.where(has_edge, adj2, 1.0), 0.0)

    # flatten to the column layout inv_col[k] = inv[k//N, k%N] via a selector matmul
    # (no lane<->sublane reshape is emitted inside the kernel)
    inv_col = jnp.sum(jnp.dot(ioh, inv, preferred_element_type=F32) * joh,
                      axis=1, keepdims=True)                     # [NN, 1]

    # -------- lin_n_node edge attention for BOTH layers in ONE merged matmul -------------
    ea_both = jnp.tanh(jnp.dot(wet_ref[...], inv_col,
                               preferred_element_type=F32))      # [2*NN, 1]
    ea1_col = ea_both[:NN, :]                                    # layer-1 tanh(lin_n_node(inv))
    ea2_col = ea_both[NN:, :]                                    # layer-2

    # ---------------------------- GATv2 attention (one layer) ----------------------------
    def attend(g, ea_col, attn_w):
        # g: [N, Hd] projected nodes; ea_col: [NN, 1]; attn_w: [1, Hd]
        pair = jnp.dot(spair, g, preferred_element_type=F32)     # [NN, Hd]  g[i] + g[j]
        tw = jnp.tanh(pair) * attn_w                             # 2-D dense EUP/VPU work
        scores_col = jnp.sum(tw, axis=1, keepdims=True)          # attn(tanh(.)), [NN, 1]
        e_col = scores_col * ea_col                              # e_flat * tanh(lin_n_node)
        # unflatten to [N, N] (row = i, lane = j) via selector matmul, then apply the
        # no-edge mask (exact: mask is {0, 1}, so order of the product is irrelevant)
        e = jnp.dot(ioht, e_col * joh, preferred_element_type=F32)
        e = e * mask_mat
        e = jnp.where(e == 0.0, -10000.0, e)                     # masked_fill(e == 0, -1e4)
        e = e - jnp.max(e, axis=1, keepdims=True)                # softmax over j (torch dim=2)
        p = jnp.exp(e)
        a = p / jnp.sum(p, axis=1, keepdims=True)                # exact divide (fidelity)
        res = jnp.dot(a, g, preferred_element_type=F32)          # einsum('ij,jf->if')
        return jnp.tanh(res)                                     # act_tahn after the GAT layer

    # ------------------------------------ network body -----------------------------------
    x = x_ref[0]                                                 # [N, Fin]
    h_in = jnp.dot(x, w1_ref[...], preferred_element_type=F32) + b1_ref[...]
    g1 = jnp.dot(h_in, p1_ref[...], preferred_element_type=F32)  # shared-weight projection
    gat1 = attend(g1, ea1_col, aw1_ref[...])
    # linear2(cat(gat1, h_in)) folded into a split-K matmul (no concatenated intermediate)
    out1 = jnp.tanh(jnp.dot(gat1, w2g_ref[...], preferred_element_type=F32)
                    + jnp.dot(h_in, w2h_ref[...], preferred_element_type=F32)
                    + b2_ref[...])
    g2 = jnp.dot(out1, p2_ref[...], preferred_element_type=F32)
    gat2 = attend(g2, ea2_col, aw2_ref[...])
    # MLP head; cat(gat2, out1) folded into a split-K first matmul
    z = (jnp.dot(gat2, wag_ref[...], preferred_element_type=F32)
         + jnp.dot(out1, wao_ref[...], preferred_element_type=F32) + ba_ref[...])
    z = jnp.maximum(z, 0.0)
    z = jnp.maximum(jnp.dot(z, wb_ref[...], preferred_element_type=F32) + bb_ref[...], 0.0)
    logits = jnp.dot(z, wc_ref[...], preferred_element_type=F32) + bc_ref[...]
    logits = logits - jnp.max(logits, axis=1, keepdims=True)     # class softmax
    pz = jnp.exp(logits)
    q_ref[0] = (pz / jnp.sum(pz, axis=1, keepdims=True)).astype(q_ref.dtype)


# --------------------------------------- GATv2 forward ---------------------------------------
def gatv2_forward(x, adj, params):
    B, N, Fin = x.shape
    Hd = params["W1"].shape[1]
    C = params["Wc"].shape[1]
    NN = N * N

    # tiny constant selector matrices (flat index k = i*N + j)
    k = jnp.arange(NN)
    m = jnp.arange(N)
    ioh = ((k // N)[:, None] == m[None, :]).astype(F32)          # [NN, N]
    joh = ((k % N)[:, None] == m[None, :]).astype(F32)           # [NN, N]
    ioh_t = ioh.T                                                # [N, NN]

    # merged, transposed lin_n_node weights: ea_col = [W1^T; W2^T] @ inv_col
    we_t = jnp.concatenate([params["gat1"]["w_edge"].T,
                            params["gat2"]["w_edge"].T], axis=0)  # [2*NN, NN]

    def w_spec(shape):
        return pl.BlockSpec(shape, lambda b: (0, 0))

    in_specs = [
        pl.BlockSpec((1, N, Fin), lambda b: (b, 0, 0)),          # x
        pl.BlockSpec((1, N, N), lambda b: (b, 0, 0)),            # adj
        w_spec((NN, N)), w_spec((NN, N)), w_spec((N, NN)),       # ioh, joh, ioh_t
        w_spec((Fin, Hd)), w_spec((1, Hd)),                      # W1, b1
        w_spec((Hd, Hd)), w_spec((1, Hd)),                       # gat1 proj, attn
        w_spec((2 * NN, NN)),                                    # merged edge weights
        w_spec((Hd, 2 * Hd)), w_spec((Hd, 2 * Hd)), w_spec((1, 2 * Hd)),   # W2 split, b2
        w_spec((2 * Hd, Hd)), w_spec((1, Hd)),                   # gat2 proj, attn
        w_spec((Hd, 2 * Hd)), w_spec((2 * Hd, 2 * Hd)), w_spec((1, 2 * Hd)),  # Wa split, ba
        w_spec((2 * Hd, Hd)), w_spec((1, Hd)),                   # Wb, bb
        w_spec((Hd, C)), w_spec((1, C)),                         # Wc, bc
    ]

    q = pl.pallas_call(
        functools.partial(_gatv2_kernel, n_nodes=N),
        grid=(B,),
        in_specs=in_specs,
        out_specs=pl.BlockSpec((1, N, C), lambda b: (b, 0, 0)),
        out_shape=jax.ShapeDtypeStruct((B, N, C), F32),
        compiler_params=pltpu.CompilerParams(dimension_semantics=("parallel",)),
        cost_estimate=pl.CostEstimate(flops=1_200_000, transcendentals=16_000,
                                      bytes_accessed=180_000),
    )(x, adj, ioh, joh, ioh_t,
      params["W1"], params["b1"],
      params["gat1"]["w_proj"], params["gat1"]["attn_w"],
      we_t,
      params["W2"][:Hd], params["W2"][Hd:], params["b2"],
      params["gat2"]["w_proj"], params["gat2"]["attn_w"],
      params["Wa"][:Hd], params["Wa"][Hd:], params["ba"],
      params["Wb"], params["bb"], params["Wc"], params["bc"])
    return q


# ------------------------- plain-JAX reference (mirrors the torch forward) -------------------
def _reference_forward(x, adj, params):
    B, N, _ = x.shape
    NN = N * N

    def gat_layer(h, lp):
        g = h @ lp["w_proj"]
        gsum = g[:, :, None, :] + g[:, None, :, :]
        e = jnp.einsum('bijh,h->bij', jnp.tanh(gsum), lp["attn_w"][0])
        d = jnp.min(jnp.where(adj == 0.0, jnp.inf, adj), axis=2) / 2.0
        adj2 = adj + jax.vmap(jnp.diag)(d)
        norm = jnp.sqrt(jnp.sum(adj2 * adj2, axis=2, keepdims=True))
        adj_n = adj2 / jnp.maximum(norm, 1e-12)
        inv = jnp.where(adj_n == 0.0, 0.0, 1.0 / adj_n)
        mask = jnp.where(adj_n == 0.0, 0.0, 1.0)
        edge_att = jnp.tanh(inv.reshape(B, NN) @ lp["w_edge"]) * mask.reshape(B, NN)
        e_flat = e.reshape(B, NN) * edge_att
        e_flat = jnp.where(e_flat == 0.0, -10000.0, e_flat)
        a = jax.nn.softmax(e_flat.reshape(B, N, N), axis=2)
        return jnp.einsum('bij,bjf->bif', a, g)

    h_in = x @ params["W1"] + params["b1"]
    o1 = jnp.tanh(gat_layer(h_in, params["gat1"]))
    o1 = jnp.tanh(jnp.concatenate([o1, h_in], axis=2) @ params["W2"] + params["b2"])
    o2 = jnp.tanh(gat_layer(o1, params["gat2"]))
    z = jnp.concatenate([o2, o1], axis=2) @ params["Wa"] + params["ba"]
    z = jnp.maximum(z, 0.0)
    z = jnp.maximum(z @ params["Wb"] + params["bb"], 0.0)
    logits = z @ params["Wc"] + params["bc"]
    return jax.nn.softmax(logits, axis=-1)


def init_params(key, in_features, n_hidden, n_classes, n_nodes):
    ks = jax.random.split(key, 11)
    NN = n_nodes * n_nodes

    def w(k, shape):
        return jax.random.normal(k, shape, F32) / jnp.sqrt(jnp.float32(shape[0]))

    return {
        "W1": w(ks[0], (in_features, n_hidden)),
        "b1": jnp.full((1, n_hidden), 0.01, F32),
        "gat1": {
            "w_proj": w(ks[1], (n_hidden, n_hidden)),      # linear_l (== linear_r), no bias
            "attn_w": w(ks[2], (1, n_hidden)),             # attn: Linear(n_hidden, 1)
            "w_edge": w(ks[3], (NN, NN)),                  # lin_n_node (stored input-major)
        },
        "W2": w(ks[4], (2 * n_hidden, 2 * n_hidden)),
        "b2": jnp.full((1, 2 * n_hidden), 0.01, F32),
        "gat2": {
            "w_proj": w(ks[5], (2 * n_hidden, n_hidden)),
            "attn_w": w(ks[6], (1, n_hidden)),
            "w_edge": w(ks[7], (NN, NN)),
        },
        "Wa": w(ks[8], (3 * n_hidden, 2 * n_hidden)),
        "ba": jnp.full((1, 2 * n_hidden), 0.01, F32),
        "Wb": w(ks[9], (2 * n_hidden, n_hidden)),
        "bb": jnp.full((1, n_hidden), 0.01, F32),
        "Wc": w(ks[10], (n_hidden, n_classes)),
        "bc": jnp.zeros((1, n_classes), F32),
    }


if __name__ == "__main__":
    B, N = 2, 10
    in_features, n_hidden, n_classes = 8, 32, 2   # n_heads = 1 (see header note)

    key = jax.random.PRNGKey(0)
    kx, kadj, kmask = jax.random.split(key, 3)
    x = jax.random.normal(kx, (B, N, in_features), F32)
    vals = jax.random.uniform(kadj, (B, N, N), F32, minval=0.5, maxval=1.5)
    edge_mask = (jax.random.uniform(kmask, (B, N, N), F32) > 0.5).astype(F32)
    adj = vals * edge_mask
    diag = jnp.arange(N)
    adj = adj.at[:, diag, diag].set(1.0)   # every row has an edge -> finite row minimum

    params = init_params(jax.random.PRNGKey(1), in_features, n_hidden, n_classes, N)

    fwd = jax.jit(gatv2_forward)
    q = jax.block_until_ready(fwd(x, adj, params))
    assert q.shape == (B, N, n_classes)
    assert bool(jnp.all(jnp.isfinite(q)))

    # loose end-to-end check against a plain-JAX reference of the same forward pass
    q_ref = _reference_forward(x, adj, params)
    assert float(jnp.max(jnp.abs(q - q_ref))) < 1e-1

    print("KERNEL_OK")
</pallas_src>

<mosaic_0001>
module attributes {stable_mosaic.version = 11 : i64} {
  func.func @_gatv2_kernel(%arg0: i32, %arg1: memref<1x10x8xf32, #tpu.memory_space<vmem>>, %arg2: memref<1x10x10xf32, #tpu.memory_space<vmem>>, %arg3: memref<100x10xf32, #tpu.memory_space<vmem>>, %arg4: memref<100x10xf32, #tpu.memory_space<vmem>>, %arg5: memref<10x100xf32, #tpu.memory_space<vmem>>, %arg6: memref<8x32xf32, #tpu.memory_space<vmem>>, %arg7: memref<1x32xf32, #tpu.memory_space<vmem>>, %arg8: memref<32x32xf32, #tpu.memory_space<vmem>>, %arg9: memref<1x32xf32, #tpu.memory_space<vmem>>, %arg10: memref<200x100xf32, #tpu.memory_space<vmem>>, %arg11: memref<32x64xf32, #tpu.memory_space<vmem>>, %arg12: memref<32x64xf32, #tpu.memory_space<vmem>>, %arg13: memref<1x64xf32, #tpu.memory_space<vmem>>, %arg14: memref<64x32xf32, #tpu.memory_space<vmem>>, %arg15: memref<1x32xf32, #tpu.memory_space<vmem>>, %arg16: memref<32x64xf32, #tpu.memory_space<vmem>>, %arg17: memref<64x64xf32, #tpu.memory_space<vmem>>, %arg18: memref<1x64xf32, #tpu.memory_space<vmem>>, %arg19: memref<64x32xf32, #tpu.memory_space<vmem>>, %arg20: memref<1x32xf32, #tpu.memory_space<vmem>>, %arg21: memref<32x2xf32, #tpu.memory_space<vmem>>, %arg22: memref<1x2xf32, #tpu.memory_space<vmem>>, %arg23: memref<1x10x2xf32, #tpu.memory_space<vmem>>) attributes {dimension_semantics = [#tpu.dimension_semantics<parallel>], iteration_bounds = array<i64: 2>, scalar_prefetch = 0 : i64, scratch_operands = 0 : i64, tpu.core_type = #tpu.core_type<tc>, window_params = [{transform_indices = @transform_0, window_bounds = array<i64: 1, 10, 8>}, {transform_indices = @transform_1, window_bounds = array<i64: 1, 10, 10>}, {pipeline_mode = #tpu.pipeline_mode<synchronous>, transform_indices = @transform_2, window_bounds = array<i64: 100, 10>}, {pipeline_mode = #tpu.pipeline_mode<synchronous>, transform_indices = @transform_3, window_bounds = array<i64: 100, 10>}, {pipeline_mode = #tpu.pipeline_mode<synchronous>, transform_indices = @transform_4, window_bounds = array<i64: 10, 100>}, {pipeline_mode = #tpu.pipeline_mode<synchronous>, transform_indices = @transform_5, window_bounds = array<i64: 8, 32>}, {pipeline_mode = #tpu.pipeline_mode<synchronous>, transform_indices = @transform_6, window_bounds = array<i64: 1, 32>}, {pipeline_mode = #tpu.pipeline_mode<synchronous>, transform_indices = @transform_7, window_bounds = array<i64: 32, 32>}, {pipeline_mode = #tpu.pipeline_mode<synchronous>, transform_indices = @transform_8, window_bounds = array<i64: 1, 32>}, {pipeline_mode = #tpu.pipeline_mode<synchronous>, transform_indices = @transform_9, window_bounds = array<i64: 200, 100>}, {pipeline_mode = #tpu.pipeline_mode<synchronous>, transform_indices = @transform_10, window_bounds = array<i64: 32, 64>}, {pipeline_mode = #tpu.pipeline_mode<synchronous>, transform_indices = @transform_11, window_bounds = array<i64: 32, 64>}, {pipeline_mode = #tpu.pipeline_mode<synchronous>, transform_indices = @transform_12, window_bounds = array<i64: 1, 64>}, {pipeline_mode = #tpu.pipeline_mode<synchronous>, transform_indices = @transform_13, window_bounds = array<i64: 64, 32>}, {pipeline_mode = #tpu.pipeline_mode<synchronous>, transform_indices = @transform_14, window_bounds = array<i64: 1, 32>}, {pipeline_mode = #tpu.pipeline_mode<synchronous>, transform_indices = @transform_15, window_bounds = array<i64: 32, 64>}, {pipeline_mode = #tpu.pipeline_mode<synchronous>, transform_indices = @transform_16, window_bounds = array<i64: 64, 64>}, {pipeline_mode = #tpu.pipeline_mode<synchronous>, transform_indices = @transform_17, window_bounds = array<i64: 1, 64>}, {pipeline_mode = #tpu.pipeline_mode<synchronous>, transform_indices = @transform_18, window_bounds = array<i64: 64, 32>}, {pipeline_mode = #tpu.pipeline_mode<synchronous>, transform_indices = @transform_19, window_bounds = array<i64: 1, 32>}, {pipeline_mode = #tpu.pipeline_mode<synchronous>, transform_indices = @transform_20, window_bounds = array<i64: 32, 2>}, {pipeline_mode = #tpu.pipeline_mode<synchronous>, transform_indices = @transform_21, window_bounds = array<i64: 1, 2>}, {transform_indices = @transform_22, window_bounds = array<i64: 1, 10, 2>}]} {
    %c0 = arith.constant 0 : index
    %c0_0 = arith.constant 0 : index
    %0 = vector.load %arg3[%c0, %c0_0] : memref<100x10xf32, #tpu.memory_space<vmem>>, vector<100x10xf32>
    %c0_1 = arith.constant 0 : index
    %c0_2 = arith.constant 0 : index
    %1 = vector.load %arg4[%c0_1, %c0_2] : memref<100x10xf32, #tpu.memory_space<vmem>>, vector<100x10xf32>
    %c0_3 = arith.constant 0 : index
    %c0_4 = arith.constant 0 : index
    %2 = vector.load %arg5[%c0_3, %c0_4] : memref<10x100xf32, #tpu.memory_space<vmem>>, vector<10x100xf32>
    %3 = arith.addf %0, %1 : vector<100x10xf32>
    %c0_5 = arith.constant 0 : index
    %c0_6 = arith.constant 0 : index
    %c0_7 = arith.constant 0 : index
    %4 = vector.load %arg2[%c0_5, %c0_6, %c0_7] : memref<1x10x10xf32, #tpu.memory_space<vmem>>, vector<1x10x10xf32>
    %5 = vector.shape_cast %4 : vector<1x10x10xf32> to vector<10x10xf32>
    %cst = arith.constant 0.000000e+00 : f32
    %6 = vector.broadcast %cst : f32 to vector<10x10xf32>
    %7 = arith.cmpf oeq, %5, %6 : vector<10x10xf32>
    %cst_8 = arith.constant 0x7F800000 : f32
    %8 = vector.broadcast %cst_8 : f32 to vector<10x10xf32>
    %9 = arith.select %7, %8, %5 : vector<10x10xi1>, vector<10x10xf32>
    %cst_9 = arith.constant dense<0x7F800000> : vector<10xf32>
    %10 = vector.multi_reduction <minimumf>, %9, %cst_9 [1] : vector<10x10xf32> to vector<10xf32>
    %11 = vector.shape_cast %10 : vector<10xf32> to vector<10x1xf32>
    %cst_10 = arith.constant 5.000000e-01 : f32
    %12 = vector.broadcast %cst_10 : f32 to vector<10x1xf32>
    %13 = arith.mulf %11, %12 : vector<10x1xf32>
    %14 = tpu.iota {dimensions = array<i32: 0>} : vector<10x10xi32>
    %15 = tpu.iota {dimensions = array<i32: 1>} : vector<10x10xi32>
    %16 = arith.cmpi eq, %14, %15 : vector<10x10xi32>
    %cst_11 = arith.constant 0.000000e+00 : f32
    %17 = vector.shape_cast %13 : vector<10x1xf32> to vector<10x1xf32>
    %18 = vector.broadcast %17 : vector<10x1xf32> to vector<10x10xf32>
    %19 = vector.broadcast %cst_11 : f32 to vector<10x10xf32>
    %20 = arith.select %16, %18, %19 : vector<10x10xi1>, vector<10x10xf32>
    %21 = arith.addf %5, %20 : vector<10x10xf32>
    %22 = arith.mulf %21, %21 : vector<10x10xf32>
    %cst_12 = arith.constant dense<0.000000e+00> : vector<10xf32>
    %23 = vector.multi_reduction <add>, %22, %cst_12 [1] : vector<10x10xf32> to vector<10xf32>
    %24 = vector.shape_cast %23 : vector<10xf32> to vector<10x1xf32>
    %25 = math.sqrt %24 : vector<10x1xf32>
    %cst_13 = arith.constant 9.99999996E-13 : f32
    %26 = vector.broadcast %cst_13 : f32 to vector<10x1xf32>
    %27 = arith.maximumf %25, %26 : vector<10x1xf32>
    %cst_14 = arith.constant 0.000000e+00 : f32
    %28 = vector.broadcast %cst_14 : f32 to vector<10x10xf32>
    %29 = arith.cmpf one, %21, %28 : vector<10x10xf32>
    %30 = arith.extui %29 : vector<10x10xi1> to vector<10x10xi32>
    %31 = arith.sitofp %30 : vector<10x10xi32> to vector<10x10xf32>
    %cst_15 = arith.constant 1.000000e+00 : f32
    %32 = vector.broadcast %cst_15 : f32 to vector<10x10xf32>
    %33 = arith.select %29, %21, %32 : vector<10x10xi1>, vector<10x10xf32>
    %34 = vector.broadcast %27 : vector<10x1xf32> to vector<10x10xf32>
    %35 = arith.divf %34, %33 : vector<10x10xf32>
    %cst_16 = arith.constant 0.000000e+00 : f32
    %36 = vector.broadcast %cst_16 : f32 to vector<10x10xf32>
    %37 = arith.select %29, %35, %36 : vector<10x10xi1>, vector<10x10xf32>
    %cst_17 = arith.constant dense<0.000000e+00> : vector<100x10xf32>
    %38 = tpu.matmul %0, %37, %cst_17 {dimension_numbers = #tpu.dot_dimension_numbers<[1], [0], [0], [1], [0, 0, 1, 1], [], []>} : vector<100x10xf32>, vector<10x10xf32>, vector<100x10xf32> -> vector<100x10xf32>
    %39 = arith.mulf %38, %1 : vector<100x10xf32>
    %cst_18 = arith.constant dense<0.000000e+00> : vector<100xf32>
    %40 = vector.multi_reduction <add>, %39, %cst_18 [1] : vector<100x10xf32> to vector<100xf32>
    %41 = vector.shape_cast %40 : vector<100xf32> to vector<100x1xf32>
    %c0_19 = arith.constant 0 : index
    %c0_20 = arith.constant 0 : index
    %42 = vector.load %arg10[%c0_19, %c0_20] : memref<200x100xf32, #tpu.memory_space<vmem>>, vector<200x100xf32>
    %cst_21 = arith.constant dense<0.000000e+00> : vector<200x1xf32>
    %43 = tpu.matmul %42, %41, %cst_21 {dimension_numbers = #tpu.dot_dimension_numbers<[1], [0], [0], [1], [0, 0, 1, 1], [], []>} : vector<200x100xf32>, vector<100x1xf32>, vector<200x1xf32> -> vector<200x1xf32>
    %44 = math.tanh %43 : vector<200x1xf32>
    %45 = vector.extract_strided_slice %44 {offsets = [0, 0], sizes = [100, 1], strides = [1, 1]} : vector<200x1xf32> to vector<100x1xf32>
    %46 = vector.extract_strided_slice %44 {offsets = [100, 0], sizes = [100, 1], strides = [1, 1]} : vector<200x1xf32> to vector<100x1xf32>
    %c0_22 = arith.constant 0 : index
    %c0_23 = arith.constant 0 : index
    %c0_24 = arith.constant 0 : index
    %47 = vector.load %arg1[%c0_22, %c0_23, %c0_24] : memref<1x10x8xf32, #tpu.memory_space<vmem>>, vector<1x10x8xf32>
    %48 = vector.shape_cast %47 : vector<1x10x8xf32> to vector<10x8xf32>
    %c0_25 = arith.constant 0 : index
    %c0_26 = arith.constant 0 : index
    %49 = vector.load %arg6[%c0_25, %c0_26] : memref<8x32xf32, #tpu.memory_space<vmem>>, vector<8x32xf32>
    %cst_27 = arith.constant dense<0.000000e+00> : vector<10x32xf32>
    %50 = tpu.matmul %48, %49, %cst_27 {dimension_numbers = #tpu.dot_dimension_numbers<[1], [0], [0], [1], [0, 0, 1, 1], [], []>} : vector<10x8xf32>, vector<8x32xf32>, vector<10x32xf32> -> vector<10x32xf32>
    %c0_28 = arith.constant 0 : index
    %c0_29 = arith.constant 0 : index
    %51 = vector.load %arg7[%c0_28, %c0_29] : memref<1x32xf32, #tpu.memory_space<vmem>>, vector<1x32xf32>
    %52 = vector.broadcast %51 : vector<1x32xf32> to vector<10x32xf32>
    %53 = arith.addf %50, %52 : vector<10x32xf32>
    %c0_30 = arith.constant 0 : index
    %c0_31 = arith.constant 0 : index
    %54 = vector.load %arg8[%c0_30, %c0_31] : memref<32x32xf32, #tpu.memory_space<vmem>>, vector<32x32xf32>
    %cst_32 = arith.constant dense<0.000000e+00> : vector<10x32xf32>
    %55 = tpu.matmul %53, %54, %cst_32 {dimension_numbers = #tpu.dot_dimension_numbers<[1], [0], [0], [1], [0, 0, 1, 1], [], []>} : vector<10x32xf32>, vector<32x32xf32>, vector<10x32xf32> -> vector<10x32xf32>
    %c0_33 = arith.constant 0 : index
    %c0_34 = arith.constant 0 : index
    %56 = vector.load %arg9[%c0_33, %c0_34] : memref<1x32xf32, #tpu.memory_space<vmem>>, vector<1x32xf32>
    %cst_35 = arith.constant dense<0.000000e+00> : vector<100x32xf32>
    %57 = tpu.matmul %3, %55, %cst_35 {dimension_numbers = #tpu.dot_dimension_numbers<[1], [0], [0], [1], [0, 0, 1, 1], [], []>} : vector<100x10xf32>, vector<10x32xf32>, vector<100x32xf32> -> vector<100x32xf32>
    %58 = math.tanh %57 : vector<100x32xf32>
    %59 = vector.broadcast %56 : vector<1x32xf32> to vector<100x32xf32>
    %60 = arith.mulf %58, %59 : vector<100x32xf32>
    %cst_36 = arith.constant dense<0.000000e+00> : vector<100xf32>
    %61 = vector.multi_reduction <add>, %60, %cst_36 [1] : vector<100x32xf32> to vector<100xf32>
    %62 = vector.shape_cast %61 : vector<100xf32> to vector<100x1xf32>
    %63 = arith.mulf %62, %45 : vector<100x1xf32>
    %64 = vector.broadcast %63 : vector<100x1xf32> to vector<100x10xf32>
    %65 = arith.mulf %64, %1 : vector<100x10xf32>
    %cst_37 = arith.constant dense<0.000000e+00> : vector<10x10xf32>
    %66 = tpu.matmul %2, %65, %cst_37 {dimension_numbers = #tpu.dot_dimension_numbers<[1], [0], [0], [1], [0, 0, 1, 1], [], []>} : vector<10x100xf32>, vector<100x10xf32>, vector<10x10xf32> -> vector<10x10xf32>
    %67 = arith.mulf %66, %31 : vector<10x10xf32>
    %cst_38 = arith.constant 0.000000e+00 : f32
    %68 = vector.broadcast %cst_38 : f32 to vector<10x10xf32>
    %69 = arith.cmpf oeq, %67, %68 : vector<10x10xf32>
    %cst_39 = arith.constant -1.000000e+04 : f32
    %70 = vector.broadcast %cst_39 : f32 to vector<10x10xf32>
    %71 = arith.select %69, %70, %67 : vector<10x10xi1>, vector<10x10xf32>
    %cst_40 = arith.constant dense<0xFF800000> : vector<10xf32>
    %72 = vector.multi_reduction <maximumf>, %71, %cst_40 [1] : vector<10x10xf32> to vector<10xf32>
    %73 = vector.shape_cast %72 : vector<10xf32> to vector<10x1xf32>
    %74 = vector.broadcast %73 : vector<10x1xf32> to vector<10x10xf32>
    %75 = arith.subf %71, %74 : vector<10x10xf32>
    %76 = math.exp %75 : vector<10x10xf32>
    %cst_41 = arith.constant dense<0.000000e+00> : vector<10xf32>
    %77 = vector.multi_reduction <add>, %76, %cst_41 [1] : vector<10x10xf32> to vector<10xf32>
    %78 = vector.shape_cast %77 : vector<10xf32> to vector<10x1xf32>
    %79 = vector.broadcast %78 : vector<10x1xf32> to vector<10x10xf32>
    %80 = arith.divf %76, %79 : vector<10x10xf32>
    %cst_42 = arith.constant dense<0.000000e+00> : vector<10x32xf32>
    %81 = tpu.matmul %80, %55, %cst_42 {dimension_numbers = #tpu.dot_dimension_numbers<[1], [0], [0], [1], [0, 0, 1, 1], [], []>} : vector<10x10xf32>, vector<10x32xf32>, vector<10x32xf32> -> vector<10x32xf32>
    %82 = math.tanh %81 : vector<10x32xf32>
    %c0_43 = arith.constant 0 : index
    %c0_44 = arith.constant 0 : index
    %83 = vector.load %arg11[%c0_43, %c0_44] : memref<32x64xf32, #tpu.memory_space<vmem>>, vector<32x64xf32>
    %cst_45 = arith.constant dense<0.000000e+00> : vector<10x64xf32>
    %84 = tpu.matmul %82, %83, %cst_45 {dimension_numbers = #tpu.dot_dimension_numbers<[1], [0], [0], [1], [0, 0, 1, 1], [], []>} : vector<10x32xf32>, vector<32x64xf32>, vector<10x64xf32> -> vector<10x64xf32>
    %c0_46 = arith.constant 0 : index
    %c0_47 = arith.constant 0 : index
    %85 = vector.load %arg12[%c0_46, %c0_47] : memref<32x64xf32, #tpu.memory_space<vmem>>, vector<32x64xf32>
    %cst_48 = arith.constant dense<0.000000e+00> : vector<10x64xf32>
    %86 = tpu.matmul %53, %85, %cst_48 {dimension_numbers = #tpu.dot_dimension_numbers<[1], [0], [0], [1], [0, 0, 1, 1], [], []>} : vector<10x32xf32>, vector<32x64xf32>, vector<10x64xf32> -> vector<10x64xf32>
    %87 = arith.addf %84, %86 : vector<10x64xf32>
    %c0_49 = arith.constant 0 : index
    %c0_50 = arith.constant 0 : index
    %88 = vector.load %arg13[%c0_49, %c0_50] : memref<1x64xf32, #tpu.memory_space<vmem>>, vector<1x64xf32>
    %89 = vector.broadcast %88 : vector<1x64xf32> to vector<10x64xf32>
    %90 = arith.addf %87, %89 : vector<10x64xf32>
    %91 = math.tanh %90 : vector<10x64xf32>
    %c0_51 = arith.constant 0 : index
    %c0_52 = arith.constant 0 : index
    %92 = vector.load %arg14[%c0_51, %c0_52] : memref<64x32xf32, #tpu.memory_space<vmem>>, vector<64x32xf32>
    %cst_53 = arith.constant dense<0.000000e+00> : vector<10x32xf32>
    %93 = tpu.matmul %91, %92, %cst_53 {dimension_numbers = #tpu.dot_dimension_numbers<[1], [0], [0], [1], [0, 0, 1, 1], [], []>} : vector<10x64xf32>, vector<64x32xf32>, vector<10x32xf32> -> vector<10x32xf32>
    %c0_54 = arith.constant 0 : index
    %c0_55 = arith.constant 0 : index
    %94 = vector.load %arg15[%c0_54, %c0_55] : memref<1x32xf32, #tpu.memory_space<vmem>>, vector<1x32xf32>
    %cst_56 = arith.constant dense<0.000000e+00> : vector<100x32xf32>
    %95 = tpu.matmul %3, %93, %cst_56 {dimension_numbers = #tpu.dot_dimension_numbers<[1], [0], [0], [1], [0, 0, 1, 1], [], []>} : vector<100x10xf32>, vector<10x32xf32>, vector<100x32xf32> -> vector<100x32xf32>
    %96 = math.tanh %95 : vector<100x32xf32>
    %97 = vector.broadcast %94 : vector<1x32xf32> to vector<100x32xf32>
    %98 = arith.mulf %96, %97 : vector<100x32xf32>
    %cst_57 = arith.constant dense<0.000000e+00> : vector<100xf32>
    %99 = vector.multi_reduction <add>, %98, %cst_57 [1] : vector<100x32xf32> to vector<100xf32>
    %100 = vector.shape_cast %99 : vector<100xf32> to vector<100x1xf32>
    %101 = arith.mulf %100, %46 : vector<100x1xf32>
    %102 = vector.broadcast %101 : vector<100x1xf32> to vector<100x10xf32>
    %103 = arith.mulf %102, %1 : vector<100x10xf32>
    %cst_58 = arith.constant dense<0.000000e+00> : vector<10x10xf32>
    %104 = tpu.matmul %2, %103, %cst_58 {dimension_numbers = #tpu.dot_dimension_numbers<[1], [0], [0], [1], [0, 0, 1, 1], [], []>} : vector<10x100xf32>, vector<100x10xf32>, vector<10x10xf32> -> vector<10x10xf32>
    %105 = arith.mulf %104, %31 : vector<10x10xf32>
    %cst_59 = arith.constant 0.000000e+00 : f32
    %106 = vector.broadcast %cst_59 : f32 to vector<10x10xf32>
    %107 = arith.cmpf oeq, %105, %106 : vector<10x10xf32>
    %cst_60 = arith.constant -1.000000e+04 : f32
    %108 = vector.broadcast %cst_60 : f32 to vector<10x10xf32>
    %109 = arith.select %107, %108, %105 : vector<10x10xi1>, vector<10x10xf32>
    %cst_61 = arith.constant dense<0xFF800000> : vector<10xf32>
    %110 = vector.multi_reduction <maximumf>, %109, %cst_61 [1] : vector<10x10xf32> to vector<10xf32>
    %111 = vector.shape_cast %110 : vector<10xf32> to vector<10x1xf32>
    %112 = vector.broadcast %111 : vector<10x1xf32> to vector<10x10xf32>
    %113 = arith.subf %109, %112 : vector<10x10xf32>
    %114 = math.exp %113 : vector<10x10xf32>
    %cst_62 = arith.constant dense<0.000000e+00> : vector<10xf32>
    %115 = vector.multi_reduction <add>, %114, %cst_62 [1] : vector<10x10xf32> to vector<10xf32>
    %116 = vector.shape_cast %115 : vector<10xf32> to vector<10x1xf32>
    %117 = vector.broadcast %116 : vector<10x1xf32> to vector<10x10xf32>
    %118 = arith.divf %114, %117 : vector<10x10xf32>
    %cst_63 = arith.constant dense<0.000000e+00> : vector<10x32xf32>
    %119 = tpu.matmul %118, %93, %cst_63 {dimension_numbers = #tpu.dot_dimension_numbers<[1], [0], [0], [1], [0, 0, 1, 1], [], []>} : vector<10x10xf32>, vector<10x32xf32>, vector<10x32xf32> -> vector<10x32xf32>
    %120 = math.tanh %119 : vector<10x32xf32>
    %c0_64 = arith.constant 0 : index
    %c0_65 = arith.constant 0 : index
    %121 = vector.load %arg16[%c0_64, %c0_65] : memref<32x64xf32, #tpu.memory_space<vmem>>, vector<32x64xf32>
    %cst_66 = arith.constant dense<0.000000e+00> : vector<10x64xf32>
    %122 = tpu.matmul %120, %121, %cst_66 {dimension_numbers = #tpu.dot_dimension_numbers<[1], [0], [0], [1], [0, 0, 1, 1], [], []>} : vector<10x32xf32>, vector<32x64xf32>, vector<10x64xf32> -> vector<10x64xf32>
    %c0_67 = arith.constant 0 : index
    %c0_68 = arith.constant 0 : index
    %123 = vector.load %arg17[%c0_67, %c0_68] : memref<64x64xf32, #tpu.memory_space<vmem>>, vector<64x64xf32>
    %cst_69 = arith.constant dense<0.000000e+00> : vector<10x64xf32>
    %124 = tpu.matmul %91, %123, %cst_69 {dimension_numbers = #tpu.dot_dimension_numbers<[1], [0], [0], [1], [0, 0, 1, 1], [], []>} : vector<10x64xf32>, vector<64x64xf32>, vector<10x64xf32> -> vector<10x64xf32>
    %125 = arith.addf %122, %124 : vector<10x64xf32>
    %c0_70 = arith.constant 0 : index
    %c0_71 = arith.constant 0 : index
    %126 = vector.load %arg18[%c0_70, %c0_71] : memref<1x64xf32, #tpu.memory_space<vmem>>, vector<1x64xf32>
    %127 = vector.broadcast %126 : vector<1x64xf32> to vector<10x64xf32>
    %128 = arith.addf %125, %127 : vector<10x64xf32>
    %cst_72 = arith.constant 0.000000e+00 : f32
    %129 = vector.broadcast %cst_72 : f32 to vector<10x64xf32>
    %130 = arith.maximumf %128, %129 : vector<10x64xf32>
    %c0_73 = arith.constant 0 : index
    %c0_74 = arith.constant 0 : index
    %131 = vector.load %arg19[%c0_73, %c0_74] : memref<64x32xf32, #tpu.memory_space<vmem>>, vector<64x32xf32>
    %cst_75 = arith.constant dense<0.000000e+00> : vector<10x32xf32>
    %132 = tpu.matmul %130, %131, %cst_75 {dimension_numbers = #tpu.dot_dimension_numbers<[1], [0], [0], [1], [0, 0, 1, 1], [], []>} : vector<10x64xf32>, vector<64x32xf32>, vector<10x32xf32> -> vector<10x32xf32>
    %c0_76 = arith.constant 0 : index
    %c0_77 = arith.constant 0 : index
    %133 = vector.load %arg20[%c0_76, %c0_77] : memref<1x32xf32, #tpu.memory_space<vmem>>, vector<1x32xf32>
    %134 = vector.broadcast %133 : vector<1x32xf32> to vector<10x32xf32>
    %135 = arith.addf %132, %134 : vector<10x32xf32>
    %cst_78 = arith.constant 0.000000e+00 : f32
    %136 = vector.broadcast %cst_78 : f32 to vector<10x32xf32>
    %137 = arith.maximumf %135, %136 : vector<10x32xf32>
    %c0_79 = arith.constant 0 : index
    %c0_80 = arith.constant 0 : index
    %138 = vector.load %arg21[%c0_79, %c0_80] : memref<32x2xf32, #tpu.memory_space<vmem>>, vector<32x2xf32>
    %cst_81 = arith.constant dense<0.000000e+00> : vector<10x2xf32>
    %139 = tpu.matmul %137, %138, %cst_81 {dimension_numbers = #tpu.dot_dimension_numbers<[1], [0], [0], [1], [0, 0, 1, 1], [], []>} : vector<10x32xf32>, vector<32x2xf32>, vector<10x2xf32> -> vector<10x2xf32>
    %c0_82 = arith.constant 0 : index
    %c0_83 = arith.constant 0 : index
    %140 = vector.load %arg22[%c0_82, %c0_83] : memref<1x2xf32, #tpu.memory_space<vmem>>, vector<1x2xf32>
    %141 = vector.broadcast %140 : vector<1x2xf32> to vector<10x2xf32>
    %142 = arith.addf %139, %141 : vector<10x2xf32>
    %cst_84 = arith.constant dense<0xFF800000> : vector<10xf32>
    %143 = vector.multi_reduction <maximumf>, %142, %cst_84 [1] : vector<10x2xf32> to vector<10xf32>
    %144 = vector.shape_cast %143 : vector<10xf32> to vector<10x1xf32>
    %145 = vector.broadcast %144 : vector<10x1xf32> to vector<10x2xf32>
    %146 = arith.subf %142, %145 : vector<10x2xf32>
    %147 = math.exp %146 : vector<10x2xf32>
    %cst_85 = arith.constant dense<0.000000e+00> : vector<10xf32>
    %148 = vector.multi_reduction <add>, %147, %cst_85 [1] : vector<10x2xf32> to vector<10xf32>
    %149 = vector.shape_cast %148 : vector<10xf32> to vector<10x1xf32>
    %150 = vector.broadcast %149 : vector<10x1xf32> to vector<10x2xf32>
    %151 = arith.divf %147, %150 : vector<10x2xf32>
    %c0_86 = arith.constant 0 : index
    %c0_87 = arith.constant 0 : index
    %c0_88 = arith.constant 0 : index
    %152 = vector.load %arg23[%c0_86, %c0_87, %c0_88] : memref<1x10x2xf32, #tpu.memory_space<vmem>>, vector<1x10x2xf32>
    %153 = vector.shape_cast %152 : vector<1x10x2xf32> to vector<10x2xf32>
    %154 = vector.shape_cast %151 : vector<10x2xf32> to vector<1x10x2xf32>
    tpu.vector_store %arg23[%c0_86, %c0_87, %c0_88], %154 {strides = array<i32>} : memref<1x10x2xf32, #tpu.memory_space<vmem>>, vector<1x10x2xf32>,
    return
  }
  func.func @transform_0(%arg0: i32) -> (i32, i32, i32) {
    %c0_i32 = arith.constant 0 : i32
    %c0_i32_0 = arith.constant 0 : i32
    %c0_i32_1 = arith.constant 0 : i32
    return %arg0, %c0_i32, %c0_i32_0 : i32, i32, i32
  }
  func.func @transform_1(%arg0: i32) -> (i32, i32, i32) {
    %c0_i32 = arith.constant 0 : i32
    %c0_i32_0 = arith.constant 0 : i32
    %c0_i32_1 = arith.constant 0 : i32
    return %arg0, %c0_i32, %c0_i32_0 : i32, i32, i32
  }
  func.func @transform_2(%arg0: i32) -> (i32, i32) {
    %c0_i32 = arith.constant 0 : i32
    %c0_i32_0 = arith.constant 0 : i32
    %c0_i32_1 = arith.constant 0 : i32
    return %c0_i32, %c0_i32_0 : i32, i32
  }
  func.func @transform_3(%arg0: i32) -> (i32, i32) {
    %c0_i32 = arith.constant 0 : i32
    %c0_i32_0 = arith.constant 0 : i32
    %c0_i32_1 = arith.constant 0 : i32
    return %c0_i32, %c0_i32_0 : i32, i32
  }
  func.func @transform_4(%arg0: i32) -> (i32, i32) {
    %c0_i32 = arith.constant 0 : i32
    %c0_i32_0 = arith.constant 0 : i32
    %c0_i32_1 = arith.constant 0 : i32
    return %c0_i32, %c0_i32_0 : i32, i32
  }
  func.func @transform_5(%arg0: i32) -> (i32, i32) {
    %c0_i32 = arith.constant 0 : i32
    %c0_i32_0 = arith.constant 0 : i32
    %c0_i32_1 = arith.constant 0 : i32
    return %c0_i32, %c0_i32_0 : i32, i32
  }
  func.func @transform_6(%arg0: i32) -> (i32, i32) {
    %c0_i32 = arith.constant 0 : i32
    %c0_i32_0 = arith.constant 0 : i32
    %c0_i32_1 = arith.constant 0 : i32
    return %c0_i32, %c0_i32_0 : i32, i32
  }
  func.func @transform_7(%arg0: i32) -> (i32, i32) {
    %c0_i32 = arith.constant 0 : i32
    %c0_i32_0 = arith.constant 0 : i32
    %c0_i32_1 = arith.constant 0 : i32
    return %c0_i32, %c0_i32_0 : i32, i32
  }
  func.func @transform_8(%arg0: i32) -> (i32, i32) {
    %c0_i32 = arith.constant 0 : i32
    %c0_i32_0 = arith.constant 0 : i32
    %c0_i32_1 = arith.constant 0 : i32
    return %c0_i32, %c0_i32_0 : i32, i32
  }
  func.func @transform_9(%arg0: i32) -> (i32, i32) {
    %c0_i32 = arith.constant 0 : i32
    %c0_i32_0 = arith.constant 0 : i32
    %c0_i32_1 = arith.constant 0 : i32
    return %c0_i32, %c0_i32_0 : i32, i32
  }
  func.func @transform_10(%arg0: i32) -> (i32, i32) {
    %c0_i32 = arith.constant 0 : i32
    %c0_i32_0 = arith.constant 0 : i32
    %c0_i32_1 = arith.constant 0 : i32
    return %c0_i32, %c0_i32_0 : i32, i32
  }
  func.func @transform_11(%arg0: i32) -> (i32, i32) {
    %c0_i32 = arith.constant 0 : i32
    %c0_i32_0 = arith.constant 0 : i32
    %c0_i32_1 = arith.constant 0 : i32
    return %c0_i32, %c0_i32_0 : i32, i32
  }
  func.func @transform_12(%arg0: i32) -> (i32, i32) {
    %c0_i32 = arith.constant 0 : i32
    %c0_i32_0 = arith.constant 0 : i32
    %c0_i32_1 = arith.constant 0 : i32
    return %c0_i32, %c0_i32_0 : i32, i32
  }
  func.func @transform_13(%arg0: i32) -> (i32, i32) {
    %c0_i32 = arith.constant 0 : i32
    %c0_i32_0 = arith.constant 0 : i32
    %c0_i32_1 = arith.constant 0 : i32
    return %c0_i32, %c0_i32_0 : i32, i32
  }
  func.func @transform_14(%arg0: i32) -> (i32, i32) {
    %c0_i32 = arith.constant 0 : i32
    %c0_i32_0 = arith.constant 0 : i32
    %c0_i32_1 = arith.constant 0 : i32
    return %c0_i32, %c0_i32_0 : i32, i32
  }
  func.func @transform_15(%arg0: i32) -> (i32, i32) {
    %c0_i32 = arith.constant 0 : i32
    %c0_i32_0 = arith.constant 0 : i32
    %c0_i32_1 = arith.constant 0 : i32
    return %c0_i32, %c0_i32_0 : i32, i32
  }
  func.func @transform_16(%arg0: i32) -> (i32, i32) {
    %c0_i32 = arith.constant 0 : i32
    %c0_i32_0 = arith.constant 0 : i32
    %c0_i32_1 = arith.constant 0 : i32
    return %c0_i32, %c0_i32_0 : i32, i32
  }
  func.func @transform_17(%arg0: i32) -> (i32, i32) {
    %c0_i32 = arith.constant 0 : i32
    %c0_i32_0 = arith.constant 0 : i32
    %c0_i32_1 = arith.constant 0 : i32
    return %c0_i32, %c0_i32_0 : i32, i32
  }
  func.func @transform_18(%arg0: i32) -> (i32, i32) {
    %c0_i32 = arith.constant 0 : i32
    %c0_i32_0 = arith.constant 0 : i32
    %c0_i32_1 = arith.constant 0 : i32
    return %c0_i32, %c0_i32_0 : i32, i32
  }
  func.func @transform_19(%arg0: i32) -> (i32, i32) {
    %c0_i32 = arith.constant 0 : i32
    %c0_i32_0 = arith.constant 0 : i32
    %c0_i32_1 = arith.constant 0 : i32
    return %c0_i32, %c0_i32_0 : i32, i32
  }
  func.func @transform_20(%arg0: i32) -> (i32, i32) {
    %c0_i32 = arith.constant 0 : i32
    %c0_i32_0 = arith.constant 0 : i32
    %c0_i32_1 = arith.constant 0 : i32
    return %c0_i32, %c0_i32_0 : i32, i32
  }
  func.func @transform_21(%arg0: i32) -> (i32, i32) {
    %c0_i32 = arith.constant 0 : i32
    %c0_i32_0 = arith.constant 0 : i32
    %c0_i32_1 = arith.constant 0 : i32
    return %c0_i32, %c0_i32_0 : i32, i32
  }
  func.func @transform_22(%arg0: i32) -> (i32, i32, i32) {
    %c0_i32 = arith.constant 0 : i32
    %c0_i32_0 = arith.constant 0 : i32
    %c0_i32_1 = arith.constant 0 : i32
    return %arg0, %c0_i32, %c0_i32_0 : i32, i32, i32
  }
}

</mosaic_0001>

<llo_original>
// kernel: gatv2_forward.1
$region0: #{gatv2_forward.1}
  #allocation0 [shape = 'u32[]', space=smem, size = 0x4, offset = 0x4, fixed_abs, tag = 'smem constant byte address 0x4 - core index']
  #allocation1 [shape = 'u32[144,128]{1,0:T(1,128)}', space=vmem, size = 0x12000, scoped, tag = 'internal scratch']
  %s0 = inlined_call_operand.vmem [shape: f32[2,10,8], index: 0, kind: input, shape index: {}]
  %s1 = inlined_call_operand.vmem [shape: f32[2,10,10], index: 1, kind: input, shape index: {}]
  %s2 = inlined_call_operand.vmem [shape: f32[100,10], index: 2, kind: input, shape index: {}]
  %s3 = inlined_call_operand.vmem [shape: f32[100,10], index: 3, kind: input, shape index: {}]
  %s4 = inlined_call_operand.vmem [shape: f32[10,100], index: 4, kind: input, shape index: {}]
  %s5 = inlined_call_operand.vmem [shape: f32[8,32], index: 5, kind: input, shape index: {}]
  %s6 = inlined_call_operand.vmem [shape: f32[1,32], index: 6, kind: input, shape index: {}]
  %s7 = inlined_call_operand.vmem [shape: f32[32,32], index: 7, kind: input, shape index: {}]
  %s8 = inlined_call_operand.vmem [shape: f32[1,32], index: 8, kind: input, shape index: {}]
  %s9 = inlined_call_operand.vmem [shape: f32[200,100], index: 9, kind: input, shape index: {}]
  %s10 = inlined_call_operand.vmem [shape: f32[32,64], index: 10, kind: input, shape index: {}]
  %s11 = inlined_call_operand.vmem [shape: f32[32,64], index: 11, kind: input, shape index: {}]
  %s12 = inlined_call_operand.vmem [shape: f32[1,64], index: 12, kind: input, shape index: {}]
  %s13 = inlined_call_operand.vmem [shape: f32[64,32], index: 13, kind: input, shape index: {}]
  %s14 = inlined_call_operand.vmem [shape: f32[1,32], index: 14, kind: input, shape index: {}]
  %s15 = inlined_call_operand.vmem [shape: f32[32,64], index: 15, kind: input, shape index: {}]
  %s16 = inlined_call_operand.vmem [shape: f32[64,64], index: 16, kind: input, shape index: {}]
  %s17 = inlined_call_operand.vmem [shape: f32[1,64], index: 17, kind: input, shape index: {}]
  %s18 = inlined_call_operand.vmem [shape: f32[64,32], index: 18, kind: input, shape index: {}]
  %s19 = inlined_call_operand.vmem [shape: f32[1,32], index: 19, kind: input, shape index: {}]
  %s20 = inlined_call_operand.vmem [shape: f32[32,2], index: 20, kind: input, shape index: {}]
  %s21 = inlined_call_operand.vmem [shape: f32[1,2], index: 21, kind: input, shape index: {}]
  %s22 = inlined_call_operand.vmem [shape: f32[2,10,2], index: 22, kind: output, shape index: {}]
  %s23 = sld [smem:[#allocation0]]
  $region121: #{gatv2_forward.1} parent=0
    _
  %s25 = ssub.s32 1, %s23
  %s26 = scalar_select 0, %s25, %s23
  loop: start=0, step=1, limit=4
  $region2: #{gatv2_forward.1} parent=0 // loop_pre_header
    _
  $region3: #{gatv2_forward.1} parent=0 // loop_header
    %s28 = sphi 0, %s32
    %p29 = scmp.ge.s32.totalorder %s28, 4
    %s38 = sphi 0, %s40
    %s41 = sphi 0, %s38
    %s42 = sphi 0, %s41
    %s58 = sphi 0, %s42
    %s64 = sphi 0, %s66
    %s67 = sphi 0, %s64
    %s68 = sphi 0, %s67
    %s84 = sphi 0, %s68
    %s88 = sphi 0, %s88
    %s90 = sphi 0, %s88
    %s91 = sphi 0, %s90
    %s105 = sphi 0, %s91
    %s109 = sphi 0, %s109
    %s111 = sphi 0, %s109
    %s112 = sphi 0, %s111
    %s126 = sphi 0, %s112
    %s130 = sphi 0, %s130
    %s132 = sphi 0, %s130
    %s133 = sphi 0, %s132
    %s147 = sphi 0, %s133
    %s151 = sphi 0, %s151
    %s153 = sphi 0, %s151
    %s154 = sphi 0, %s153
    %s168 = sphi 0, %s154
    %s172 = sphi 0, %s172
    %s174 = sphi 0, %s172
    %s175 = sphi 0, %s174
    %s189 = sphi 0, %s175
    %s193 = sphi 0, %s193
    %s195 = sphi 0, %s193
    %s196 = sphi 0, %s195
    %s210 = sphi 0, %s196
    %s214 = sphi 0, %s214
    %s216 = sphi 0, %s214
    %s217 = sphi 0, %s216
    %s231 = sphi 0, %s217
    %s235 = sphi 0, %s235
    %s237 = sphi 0, %s235
    %s238 = sphi 0, %s237
    %s252 = sphi 0, %s238
    %s256 = sphi 0, %s256
    %s258 = sphi 0, %s256
    %s259 = sphi 0, %s258
    %s273 = sphi 0, %s259
    %s277 = sphi 0, %s277
    %s279 = sphi 0, %s277
    %s280 = sphi 0, %s279
    %s294 = sphi 0, %s280
    %s298 = sphi 0, %s298
    %s300 = sphi 0, %s298
    %s301 = sphi 0, %s300
    %s315 = sphi 0, %s301
    %s319 = sphi 0, %s319
    %s321 = sphi 0, %s319
    %s322 = sphi 0, %s321
    %s336 = sphi 0, %s322
    %s340 = sphi 0, %s340
    %s342 = sphi 0, %s340
    %s343 = sphi 0, %s342
    %s357 = sphi 0, %s343
    %s361 = sphi 0, %s361
    %s363 = sphi 0, %s361
    %s364 = sphi 0, %s363
    %s378 = sphi 0, %s364
    %s382 = sphi 0, %s382
    %s384 = sphi 0, %s382
    %s385 = sphi 0, %s384
    %s399 = sphi 0, %s385
    %s403 = sphi 0, %s403
    %s405 = sphi 0, %s403
    %s406 = sphi 0, %s405
    %s420 = sphi 0, %s406
    %s424 = sphi 0, %s424
    %s426 = sphi 0, %s424
    %s427 = sphi 0, %s426
    %s441 = sphi 0, %s427
    %s445 = sphi 0, %s445
    %s447 = sphi 0, %s445
    %s448 = sphi 0, %s447
    %s462 = sphi 0, %s448
    %s466 = sphi 0, %s466
    %s468 = sphi 0, %s466
    %s469 = sphi 0, %s468
    %s483 = sphi 0, %s469
    %s487 = sphi 0, %s487
    %s489 = sphi 0, %s487
    %s490 = sphi 0, %s489
    %s504 = sphi 0, %s490
    %s510 = sphi 0, %s512
    %s513 = sphi 0, %s510
    %s514 = sphi 0, %s513
    %s530 = sphi 0, %s514
  $region4: #{gatv2_forward.1} parent=0 // loop_header_branch
    %31 = sbr.rel (%p29) target = $region8
  $region5: #{gatv2_forward.1} parent=0 // loop_body
    %s33 = ssub.s32 %s28, 1
    %s34 = ssub.s32 %s28, 2
    %s35 = sadd.s32 %s28, 1
    %s36 = ssub.s32 %s28, %s35
    %p37 = scmp.eq.s32.totalorder %s36, 0
    %s39 = sadd.s32 %s38, 1
    %s40 = scalar_select %p37, %s38, %s39
    %p43 = pneg %p37
    %p44 = scmp.eq.s32.totalorder %s28, 1
    %p45 = por %p43, %p44
    %p46 = scmp.ne.s32.totalorder %s38, %s41
    %p47 = scmp.eq.s32.totalorder %s28, 0
    %p48 = por %p46, %p47
    %p49 = scmp.ne.s32.totalorder %s38, %s41
    %p50 = scmp.eq.s32.totalorder %s33, 1
    %p51 = por %p49, %p50
    %p52 = scmp.ne.s32.totalorder %s41, %s42
    %p53 = scmp.eq.s32.totalorder %s33, 0
    %p54 = por %p52, %p53
    %p55 = scmp.ne.s32.totalorder %s41, %s42
    %p56 = scmp.eq.s32.totalorder %s34, 1
    %p57 = por %p55, %p56
    %p59 = scmp.ne.s32.totalorder %s42, %s58
    %p60 = scmp.eq.s32.totalorder %s34, 0
    %p61 = por %p59, %p60
    %s62 = ssub.s32 %s28, %s35
    %p63 = scmp.eq.s32.totalorder %s62, 0
    %s65 = sadd.s32 %s64, 1
    %s66 = scalar_select %p63, %s64, %s65
    %p69 = pneg %p63
    %p70 = scmp.eq.s32.totalorder %s28, 1
    %p71 = por %p69, %p70
    %p72 = scmp.ne.s32.totalorder %s64, %s67
    %p73 = scmp.eq.s32.totalorder %s28, 0
    %p74 = por %p72, %p73
    %p75 = scmp.ne.s32.totalorder %s64, %s67
    %p76 = scmp.eq.s32.totalorder %s33, 1
    %p77 = por %p75, %p76
    %p78 = scmp.ne.s32.totalorder %s67, %s68
    %p79 = scmp.eq.s32.totalorder %s33, 0
    %p80 = por %p78, %p79
    %p81 = scmp.ne.s32.totalorder %s67, %s68
    %p82 = scmp.eq.s32.totalorder %s34, 1
    %p83 = por %p81, %p82
    %p85 = scmp.ne.s32.totalorder %s68, %s84
    %p86 = scmp.eq.s32.totalorder %s34, 0
    %p87 = por %p85, %p86
    %s89 = sadd.s32 %s88, 1
    %p92 = scmp.eq.s32.totalorder %s28, 1
    %p93 = scmp.ne.s32.totalorder %s88, %s90
    %p94 = scmp.eq.s32.totalorder %s28, 0
    %p95 = por %p93, %p94
    %p96 = scmp.ne.s32.totalorder %s88, %s90
    %p97 = scmp.eq.s32.totalorder %s33, 1
    %p98 = por %p96, %p97
    %p99 = scmp.ne.s32.totalorder %s90, %s91
    %p100 = scmp.eq.s32.totalorder %s33, 0
    %p101 = por %p99, %p100
    %p102 = scmp.ne.s32.totalorder %s90, %s91
    %p103 = scmp.eq.s32.totalorder %s34, 1
    %p104 = por %p102, %p103
    %p106 = scmp.ne.s32.totalorder %s91, %s105
    %p107 = scmp.eq.s32.totalorder %s34, 0
    %p108 = por %p106, %p107
    %s110 = sadd.s32 %s109, 1
    %p113 = scmp.eq.s32.totalorder %s28, 1
    %p114 = scmp.ne.s32.totalorder %s109, %s111
    %p115 = scmp.eq.s32.totalorder %s28, 0
    %p116 = por %p114, %p115
    %p117 = scmp.ne.s32.totalorder %s109, %s111
    %p118 = scmp.eq.s32.totalorder %s33, 1
    %p119 = por %p117, %p118
    %p120 = scmp.ne.s32.totalorder %s111, %s112
    %p121 = scmp.eq.s32.totalorder %s33, 0
    %p122 = por %p120, %p121
    %p123 = scmp.ne.s32.totalorder %s111, %s112
    %p124 = scmp.eq.s32.totalorder %s34, 1
    %p125 = por %p123, %p124
    %p127 = scmp.ne.s32.totalorder %s112, %s126
    %p128 = scmp.eq.s32.totalorder %s34, 0
    %p129 = por %p127, %p128
    %s131 = sadd.s32 %s130, 1
    %p134 = scmp.eq.s32.totalorder %s28, 1
    %p135 = scmp.ne.s32.totalorder %s130, %s132
    %p136 = scmp.eq.s32.totalorder %s28, 0
    %p137 = por %p135, %p136
    %p138 = scmp.ne.s32.totalorder %s130, %s132
    %p139 = scmp.eq.s32.totalorder %s33, 1
    %p140 = por %p138, %p139
    %p141 = scmp.ne.s32.totalorder %s132, %s133
    %p142 = scmp.eq.s32.totalorder %s33, 0
    %p143 = por %p141, %p142
    %p144 = scmp.ne.s32.totalorder %s132, %s133
    %p145 = scmp.eq.s32.totalorder %s34, 1
    %p146 = por %p144, %p145
    %p148 = scmp.ne.s32.totalorder %s133, %s147
    %p149 = scmp.eq.s32.totalorder %s34, 0
    %p150 = por %p148, %p149
    %s152 = sadd.s32 %s151, 1
    %p155 = scmp.eq.s32.totalorder %s28, 1
    %p156 = scmp.ne.s32.totalorder %s151, %s153
    %p157 = scmp.eq.s32.totalorder %s28, 0
    %p158 = por %p156, %p157
    %p159 = scmp.ne.s32.totalorder %s151, %s153
    %p160 = scmp.eq.s32.totalorder %s33, 1
    %p161 = por %p159, %p160
    %p162 = scmp.ne.s32.totalorder %s153, %s154
    %p163 = scmp.eq.s32.totalorder %s33, 0
    %p164 = por %p162, %p163
    %p165 = scmp.ne.s32.totalorder %s153, %s154
    %p166 = scmp.eq.s32.totalorder %s34, 1
    %p167 = por %p165, %p166
    %p169 = scmp.ne.s32.totalorder %s154, %s168
    %p170 = scmp.eq.s32.totalorder %s34, 0
    %p171 = por %p169, %p170
    %s173 = sadd.s32 %s172, 1
    %p176 = scmp.eq.s32.totalorder %s28, 1
    %p177 = scmp.ne.s32.totalorder %s172, %s174
    %p178 = scmp.eq.s32.totalorder %s28, 0
    %p179 = por %p177, %p178
    %p180 = scmp.ne.s32.totalorder %s172, %s174
    %p181 = scmp.eq.s32.totalorder %s33, 1
    %p182 = por %p180, %p181
    %p183 = scmp.ne.s32.totalorder %s174, %s175
    %p184 = scmp.eq.s32.totalorder %s33, 0
    %p185 = por %p183, %p184
    %p186 = scmp.ne.s32.totalorder %s174, %s175
    %p187 = scmp.eq.s32.totalorder %s34, 1
    %p188 = por %p186, %p187
    %p190 = scmp.ne.s32.totalorder %s175, %s189
    %p191 = scmp.eq.s32.totalorder %s34, 0
    %p192 = por %p190, %p191
    %s194 = sadd.s32 %s193, 1
    %p197 = scmp.eq.s32.totalorder %s28, 1
    %p198 = scmp.ne.s32.totalorder %s193, %s195
    %p199 = scmp.eq.s32.totalorder %s28, 0
    %p200 = por %p198, %p199
    %p201 = scmp.ne.s32.totalorder %s193, %s195
    %p202 = scmp.eq.s32.totalorder %s33, 1
    %p203 = por %p201, %p202
    %p204 = scmp.ne.s32.totalorder %s195, %s196
    %p205 = scmp.eq.s32.totalorder %s33, 0
    %p206 = por %p204, %p205
    %p207 = scmp.ne.s32.totalorder %s195, %s196
    %p208 = scmp.eq.s32.totalorder %s34, 1
    %p209 = por %p207, %p208
    %p211 = scmp.ne.s32.totalorder %s196, %s210
    %p212 = scmp.eq.s32.totalorder %s34, 0
    %p213 = por %p211, %p212
    %s215 = sadd.s32 %s214, 1
    %p218 = scmp.eq.s32.totalorder %s28, 1
    %p219 = scmp.ne.s32.totalorder %s214, %s216
    %p220 = scmp.eq.s32.totalorder %s28, 0
    %p221 = por %p219, %p220
    %p222 = scmp.ne.s32.totalorder %s214, %s216
    %p223 = scmp.eq.s32.totalorder %s33, 1
    %p224 = por %p222, %p223
    %p225 = scmp.ne.s32.totalorder %s216, %s217
    %p226 = scmp.eq.s32.totalorder %s33, 0
    %p227 = por %p225, %p226
    %p228 = scmp.ne.s32.totalorder %s216, %s217
    %p229 = scmp.eq.s32.totalorder %s34, 1
    %p230 = por %p228, %p229
    %p232 = scmp.ne.s32.totalorder %s217, %s231
    %p233 = scmp.eq.s32.totalorder %s34, 0
    %p234 = por %p232, %p233
    %s236 = sadd.s32 %s235, 1
    %p239 = scmp.eq.s32.totalorder %s28, 1
    %p240 = scmp.ne.s32.totalorder %s235, %s237
    %p241 = scmp.eq.s32.totalorder %s28, 0
    %p242 = por %p240, %p241
    %p243 = scmp.ne.s32.totalorder %s235, %s237
    %p244 = scmp.eq.s32.totalorder %s33, 1
    %p245 = por %p243, %p244
    %p246 = scmp.ne.s32.totalorder %s237, %s238
    %p247 = scmp.eq.s32.totalorder %s33, 0
    %p248 = por %p246, %p247
    %p249 = scmp.ne.s32.totalorder %s237, %s238
    %p250 = scmp.eq.s32.totalorder %s34, 1
    %p251 = por %p249, %p250
    %p253 = scmp.ne.s32.totalorder %s238, %s252
    %p254 = scmp.eq.s32.totalorder %s34, 0
    %p255 = por %p253, %p254
    %s257 = sadd.s32 %s256, 1
    %p260 = scmp.eq.s32.totalorder %s28, 1
    %p261 = scmp.ne.s32.totalorder %s256, %s258
    %p262 = scmp.eq.s32.totalorder %s28, 0
    %p263 = por %p261, %p262
    %p264 = scmp.ne.s32.totalorder %s256, %s258
    %p265 = scmp.eq.s32.totalorder %s33, 1
    %p266 = por %p264, %p265
    %p267 = scmp.ne.s32.totalorder %s258, %s259
    %p268 = scmp.eq.s32.totalorder %s33, 0
    %p269 = por %p267, %p268
    %p270 = scmp.ne.s32.totalorder %s258, %s259
    %p271 = scmp.eq.s32.totalorder %s34, 1
    %p272 = por %p270, %p271
    %p274 = scmp.ne.s32.totalorder %s259, %s273
    %p275 = scmp.eq.s32.totalorder %s34, 0
    %p276 = por %p274, %p275
    %s278 = sadd.s32 %s277, 1
    %p281 = scmp.eq.s32.totalorder %s28, 1
    %p282 = scmp.ne.s32.totalorder %s277, %s279
    %p283 = scmp.eq.s32.totalorder %s28, 0
    %p284 = por %p282, %p283
    %p285 = scmp.ne.s32.totalorder %s277, %s279
    %p286 = scmp.eq.s32.totalorder %s33, 1
    %p287 = por %p285, %p286
    %p288 = scmp.ne.s32.totalorder %s279, %s280
    %p289 = scmp.eq.s32.totalorder %s33, 0
    %p290 = por %p288, %p289
    %p291 = scmp.ne.s32.totalorder %s279, %s280
    %p292 = scmp.eq.s32.totalorder %s34, 1
    %p293 = por %p291, %p292
    %p295 = scmp.ne.s32.totalorder %s280, %s294
    %p296 = scmp.eq.s32.totalorder %s34, 0
    %p297 = por %p295, %p296
    %s299 = sadd.s32 %s298, 1
    %p302 = scmp.eq.s32.totalorder %s28, 1
    %p303 = scmp.ne.s32.totalorder %s298, %s300
    %p304 = scmp.eq.s32.totalorder %s28, 0
    %p305 = por %p303, %p304
    %p306 = scmp.ne.s32.totalorder %s298, %s300
    %p307 = scmp.eq.s32.totalorder %s33, 1
    %p308 = por %p306, %p307
    %p309 = scmp.ne.s32.totalorder %s300, %s301
    %p310 = scmp.eq.s32.totalorder %s33, 0
    %p311 = por %p309, %p310
    %p312 = scmp.ne.s32.totalorder %s300, %s301
    %p313 = scmp.eq.s32.totalorder %s34, 1
    %p314 = por %p312, %p313
    %p316 = scmp.ne.s32.totalorder %s301, %s315
    %p317 = scmp.eq.s32.totalorder %s34, 0
    %p318 = por %p316, %p317
    %s320 = sadd.s32 %s319, 1
    %p323 = scmp.eq.s32.totalorder %s28, 1
    %p324 = scmp.ne.s32.totalorder %s319, %s321
    %p325 = scmp.eq.s32.totalorder %s28, 0
    %p326 = por %p324, %p325
    %p327 = scmp.ne.s32.totalorder %s319, %s321
    %p328 = scmp.eq.s32.totalorder %s33, 1
    %p329 = por %p327, %p328
    %p330 = scmp.ne.s32.totalorder %s321, %s322
    %p331 = scmp.eq.s32.totalorder %s33, 0
    %p332 = por %p330, %p331
    %p333 = scmp.ne.s32.totalorder %s321, %s322
    %p334 = scmp.eq.s32.totalorder %s34, 1
    %p335 = por %p333, %p334
    %p337 = scmp.ne.s32.totalorder %s322, %s336
    %p338 = scmp.eq.s32.totalorder %s34, 0
    %p339 = por %p337, %p338
    %s341 = sadd.s32 %s340, 1
    %p344 = scmp.eq.s32.totalorder %s28, 1
    %p345 = scmp.ne.s32.totalorder %s340, %s342
    %p346 = scmp.eq.s32.totalorder %s28, 0
    %p347 = por %p345, %p346
    %p348 = scmp.ne.s32.totalorder %s340, %s342
    %p349 = scmp.eq.s32.totalorder %s33, 1
    %p350 = por %p348, %p349
    %p351 = scmp.ne.s32.totalorder %s342, %s343
    %p352 = scmp.eq.s32.totalorder %s33, 0
    %p353 = por %p351, %p352
    %p354 = scmp.ne.s32.totalorder %s342, %s343
    %p355 = scmp.eq.s32.totalorder %s34, 1
    %p356 = por %p354, %p355
    %p358 = scmp.ne.s32.totalorder %s343, %s357
    %p359 = scmp.eq.s32.totalorder %s34, 0
    %p360 = por %p358, %p359
    %s362 = sadd.s32 %s361, 1
    %p365 = scmp.eq.s32.totalorder %s28, 1
    %p366 = scmp.ne.s32.totalorder %s361, %s363
    %p367 = scmp.eq.s32.totalorder %s28, 0
    %p368 = por %p366, %p367
    %p369 = scmp.ne.s32.totalorder %s361, %s363
    %p370 = scmp.eq.s32.totalorder %s33, 1
    %p371 = por %p369, %p370
    %p372 = scmp.ne.s32.totalorder %s363, %s364
    %p373 = scmp.eq.s32.totalorder %s33, 0
    %p374 = por %p372, %p373
    %p375 = scmp.ne.s32.totalorder %s363, %s364
    %p376 = scmp.eq.s32.totalorder %s34, 1
    %p377 = por %p375, %p376
    %p379 = scmp.ne.s32.totalorder %s364, %s378
    %p380 = scmp.eq.s32.totalorder %s34, 0
    %p381 = por %p379, %p380
    %s383 = sadd.s32 %s382, 1
    %p386 = scmp.eq.s32.totalorder %s28, 1
    %p387 = scmp.ne.s32.totalorder %s382, %s384
    %p388 = scmp.eq.s32.totalorder %s28, 0
    %p389 = por %p387, %p388
    %p390 = scmp.ne.s32.totalorder %s382, %s384
    %p391 = scmp.eq.s32.totalorder %s33, 1
    %p392 = por %p390, %p391
    %p393 = scmp.ne.s32.totalorder %s384, %s385
    %p394 = scmp.eq.s32.totalorder %s33, 0
    %p395 = por %p393, %p394
    %p396 = scmp.ne.s32.totalorder %s384, %s385
    %p397 = scmp.eq.s32.totalorder %s34, 1
    %p398 = por %p396, %p397
    %p400 = scmp.ne.s32.totalorder %s385, %s399
    %p401 = scmp.eq.s32.totalorder %s34, 0
    %p402 = por %p400, %p401
    %s404 = sadd.s32 %s403, 1
    %p407 = scmp.eq.s32.totalorder %s28, 1
    %p408 = scmp.ne.s32.totalorder %s403, %s405
    %p409 = scmp.eq.s32.totalorder %s28, 0
    %p410 = por %p408, %p409
    %p411 = scmp.ne.s32.totalorder %s403, %s405
    %p412 = scmp.eq.s32.totalorder %s33, 1
    %p413 = por %p411, %p412
    %p414 = scmp.ne.s32.totalorder %s405, %s406
    %p415 = scmp.eq.s32.totalorder %s33, 0
    %p416 = por %p414, %p415
    %p417 = scmp.ne.s32.totalorder %s405, %s406
    %p418 = scmp.eq.s32.totalorder %s34, 1
    %p419 = por %p417, %p418
    %p421 = scmp.ne.s32.totalorder %s406, %s420
    %p422 = scmp.eq.s32.totalorder %s34, 0
    %p423 = por %p421, %p422
    %s425 = sadd.s32 %s424, 1
    %p428 = scmp.eq.s32.totalorder %s28, 1
    %p429 = scmp.ne.s32.totalorder %s424, %s426
    %p430 = scmp.eq.s32.totalorder %s28, 0
    %p431 = por %p429, %p430
    %p432 = scmp.ne.s32.totalorder %s424, %s426
    %p433 = scmp.eq.s32.totalorder %s33, 1
    %p434 = por %p432, %p433
    %p435 = scmp.ne.s32.totalorder %s426, %s427
    %p436 = scmp.eq.s32.totalorder %s33, 0
    %p437 = por %p435, %p436
    %p438 = scmp.ne.s32.totalorder %s426, %s427
    %p439 = scmp.eq.s32.totalorder %s34, 1
    %p440 = por %p438, %p439
    %p442 = scmp.ne.s32.totalorder %s427, %s441
    %p443 = scmp.eq.s32.totalorder %s34, 0
    %p444 = por %p442, %p443
    %s446 = sadd.s32 %s445, 1
    %p449 = scmp.eq.s32.totalorder %s28, 1
    %p450 = scmp.ne.s32.totalorder %s445, %s447
    %p451 = scmp.eq.s32.totalorder %s28, 0
    %p452 = por %p450, %p451
    %p453 = scmp.ne.s32.totalorder %s445, %s447
    %p454 = scmp.eq.s32.totalorder %s33, 1
    %p455 = por %p453, %p454
    %p456 = scmp.ne.s32.totalorder %s447, %s448
    %p457 = scmp.eq.s32.totalorder %s33, 0
    %p458 = por %p456, %p457
    %p459 = scmp.ne.s32.totalorder %s447, %s448
    %p460 = scmp.eq.s32.totalorder %s34, 1
    %p461 = por %p459, %p460
    %p463 = scmp.ne.s32.totalorder %s448, %s462
    %p464 = scmp.eq.s32.totalorder %s34, 0
    %p465 = por %p463, %p464
    %s467 = sadd.s32 %s466, 1
    %p470 = scmp.eq.s32.totalorder %s28, 1
    %p471 = scmp.ne.s32.totalorder %s466, %s468
    %p472 = scmp.eq.s32.totalorder %s28, 0
    %p473 = por %p471, %p472
    %p474 = scmp.ne.s32.totalorder %s466, %s468
    %p475 = scmp.eq.s32.totalorder %s33, 1
    %p476 = por %p474, %p475
    %p477 = scmp.ne.s32.totalorder %s468, %s469
    %p478 = scmp.eq.s32.totalorder %s33, 0
    %p479 = por %p477, %p478
    %p480 = scmp.ne.s32.totalorder %s468, %s469
    %p481 = scmp.eq.s32.totalorder %s34, 1
    %p482 = por %p480, %p481
    %p484 = scmp.ne.s32.totalorder %s469, %s483
    %p485 = scmp.eq.s32.totalorder %s34, 0
    %p486 = por %p484, %p485
    %s488 = sadd.s32 %s487, 1
    %p491 = scmp.eq.s32.totalorder %s28, 1
    %p492 = scmp.ne.s32.totalorder %s487, %s489
    %p493 = scmp.eq.s32.totalorder %s28, 0
    %p494 = por %p492, %p493
    %p495 = scmp.ne.s32.totalorder %s487, %s489
    %p496 = scmp.eq.s32.totalorder %s33, 1
    %p497 = por %p495, %p496
    %p498 = scmp.ne.s32.totalorder %s489, %s490
    %p499 = scmp.eq.s32.totalorder %s33, 0
    %p500 = por %p498, %p499
    %p501 = scmp.ne.s32.totalorder %s489, %s490
    %p502 = scmp.eq.s32.totalorder %s34, 1
    %p503 = por %p501, %p502
    %p505 = scmp.ne.s32.totalorder %s490, %s504
    %p506 = scmp.eq.s32.totalorder %s34, 0
    %p507 = por %p505, %p506
    %s508 = ssub.s32 %s28, %s35
    %p509 = scmp.eq.s32.totalorder %s508, 0
    %s511 = sadd.s32 %s510, 1
    %s512 = scalar_select %p509, %s510, %s511
    %p515 = pneg %p509
    %p516 = scmp.eq.s32.totalorder %s28, 1
    %p517 = por %p515, %p516
    %p518 = scmp.ne.s32.totalorder %s510, %s513
    %p519 = scmp.eq.s32.totalorder %s28, 0
    %p520 = por %p518, %p519
    %p521 = scmp.ne.s32.totalorder %s510, %s513
    %p522 = scmp.eq.s32.totalorder %s33, 1
    %p523 = por %p521, %p522
    %p524 = scmp.ne.s32.totalorder %s513, %s514
    %p525 = scmp.eq.s32.totalorder %s33, 0
    %p526 = por %p524, %p525
    %p527 = scmp.ne.s32.totalorder %s513, %s514
    %p528 = scmp.eq.s32.totalorder %s34, 1
    %p529 = por %p527, %p528
    %p531 = scmp.ne.s32.totalorder %s514, %s530
    %p532 = scmp.eq.s32.totalorder %s34, 0
    %p533 = por %p531, %p532
    %p534 = scmp.le.s32.totalorder 1, %s28
    %p535 = scmp.lt.s32.totalorder %s28, 3
    %p536 = pnand %p534, %p535
    %p537 = pneg %p536
    // Predicated region
    $region9: #{gatv2_forward.1} parent=5 // pred_check
      _
    $region10: #{gatv2_forward.1} parent=5 // pred_check_branch
      %539 = sbr.rel (%p536) target = $region12
    $region11: #{gatv2_forward.1} parent=5 // pred_region
      %s540 = ssub.s32 %s28, 1
      // Predicated region
      $region13: #{gatv2_forward.1} parent=11 // pred_check
        %p541 = pneg %p101
      $region14: #{gatv2_forward.1} parent=11 // pred_check_branch
        %543 = sbr.rel (%p541) target = $region16
      $region15: #{gatv2_forward.1} parent=11 // pred_region
        _
      $region16: #{gatv2_forward.1} parent=11 // pred_fallthru
        _
      // Predicated region
      $region17: #{gatv2_forward.1} parent=11 // pred_check
        %p544 = pneg %p122
      $region18: #{gatv2_forward.1} parent=11 // pred_check_branch
        %546 = sbr.rel (%p544) target = $region20
      $region19: #{gatv2_forward.1} parent=11 // pred_region
        _
      $region20: #{gatv2_forward.1} parent=11 // pred_fallthru
        _
      // Predicated region
      $region21: #{gatv2_forward.1} parent=11 // pred_check
        %p547 = pneg %p143
      $region22: #{gatv2_forward.1} parent=11 // pred_check_branch
        %549 = sbr.rel (%p547) target = $region24
      $region23: #{gatv2_forward.1} parent=11 // pred_region
        _
      $region24: #{gatv2_forward.1} parent=11 // pred_fallthru
        _
      // Predicated region
      $region25: #{gatv2_forward.1} parent=11 // pred_check
        %p550 = pneg %p164
      $region26: #{gatv2_forward.1} parent=11 // pred_check_branch
        %552 = sbr.rel (%p550) target = $region28
      $region27: #{gatv2_forward.1} parent=11 // pred_region
        _
      $region28: #{gatv2_forward.1} parent=11 // pred_fallthru
        _
      // Predicated region
      $region29: #{gatv2_forward.1} parent=11 // pred_check
        %p553 = pneg %p185
      $region30: #{gatv2_forward.1} parent=11 // pred_check_branch
        %555 = sbr.rel (%p553) target = $region32
      $region31: #{gatv2_forward.1} parent=11 // pred_region
        _
      $region32: #{gatv2_forward.1} parent=11 // pred_fallthru
        _
      // Predicated region
      $region33: #{gatv2_forward.1} parent=11 // pred_check
        %p556 = pneg %p206
      $region34: #{gatv2_forward.1} parent=11 // pred_check_branch
        %558 = sbr.rel (%p556) target = $region36
      $region35: #{gatv2_forward.1} parent=11 // pred_region
        _
      $region36: #{gatv2_forward.1} parent=11 // pred_fallthru
        _
      // Predicated region
      $region37: #{gatv2_forward.1} parent=11 // pred_check
        %p559 = pneg %p227
      $region38: #{gatv2_forward.1} parent=11 // pred_check_branch
        %561 = sbr.rel (%p559) target = $region40
      $region39: #{gatv2_forward.1} parent=11 // pred_region
        _
      $region40: #{gatv2_forward.1} parent=11 // pred_fallthru
        _
      // Predicated region
      $region41: #{gatv2_forward.1} parent=11 // pred_check
        %p562 = pneg %p248
      $region42: #{gatv2_forward.1} parent=11 // pred_check_branch
        %564 = sbr.rel (%p562) target = $region44
      $region43: #{gatv2_forward.1} parent=11 // pred_region
        _
      $region44: #{gatv2_forward.1} parent=11 // pred_fallthru
        _
      // Predicated region
      $region45: #{gatv2_forward.1} parent=11 // pred_check
        %p565 = pneg %p269
      $region46: #{gatv2_forward.1} parent=11 // pred_check_branch
        %567 = sbr.rel (%p565) target = $region48
      $region47: #{gatv2_forward.1} parent=11 // pred_region
        _
      $region48: #{gatv2_forward.1} parent=11 // pred_fallthru
        _
      // Predicated region
      $region49: #{gatv2_forward.1} parent=11 // pred_check
        %p568 = pneg %p290
      $region50: #{gatv2_forward.1} parent=11 // pred_check_branch
        %570 = sbr.rel (%p568) target = $region52
      $region51: #{gatv2_forward.1} parent=11 // pred_region
        _
      $region52: #{gatv2_forward.1} parent=11 // pred_fallthru
        _
      // Predicated region
      $region53: #{gatv2_forward.1} parent=11 // pred_check
        %p571 = pneg %p311
      $region54: #{gatv2_forward.1} parent=11 // pred_check_branch
        %573 = sbr.rel (%p571) target = $region56
      $region55: #{gatv2_forward.1} parent=11 // pred_region
        _
      $region56: #{gatv2_forward.1} parent=11 // pred_fallthru
        _
      // Predicated region
      $region57: #{gatv2_forward.1} parent=11 // pred_check
        %p574 = pneg %p332
      $region58: #{gatv2_forward.1} parent=11 // pred_check_branch
        %576 = sbr.rel (%p574) target = $region60
      $region59: #{gatv2_forward.1} parent=11 // pred_region
        _
      $region60: #{gatv2_forward.1} parent=11 // pred_fallthru
        _
      // Predicated region
      $region61: #{gatv2_forward.1} parent=11 // pred_check
        %p577 = pneg %p353
      $region62: #{gatv2_forward.1} parent=11 // pred_check_branch
        %579 = sbr.rel (%p577) target = $region64
      $region63: #{gatv2_forward.1} parent=11 // pred_region
        _
      $region64: #{gatv2_forward.1} parent=11 // pred_fallthru
        _
      // Predicated region
      $region65: #{gatv2_forward.1} parent=11 // pred_check
        %p580 = pneg %p374
      $region66: #{gatv2_forward.1} parent=11 // pred_check_branch
        %582 = sbr.rel (%p580) target = $region68
      $region67: #{gatv2_forward.1} parent=11 // pred_region
        _
      $region68: #{gatv2_forward.1} parent=11 // pred_fallthru
        _
      // Predicated region
      $region69: #{gatv2_forward.1} parent=11 // pred_check
        %p583 = pneg %p395
      $region70: #{gatv2_forward.1} parent=11 // pred_check_branch
        %585 = sbr.rel (%p583) target = $region72
      $region71: #{gatv2_forward.1} parent=11 // pred_region
        _
      $region72: #{gatv2_forward.1} parent=11 // pred_fallthru
        _
      // Predicated region
      $region73: #{gatv2_forward.1} parent=11 // pred_check
        %p586 = pneg %p416
      $region74: #{gatv2_forward.1} parent=11 // pred_check_branch
        %588 = sbr.rel (%p586) target = $region76
      $region75: #{gatv2_forward.1} parent=11 // pred_region
        _
      $region76: #{gatv2_forward.1} parent=11 // pred_fallthru
        _
      // Predicated region
      $region77: #{gatv2_forward.1} parent=11 // pred_check
        %p589 = pneg %p437
      $region78: #{gatv2_forward.1} parent=11 // pred_check_branch
        %591 = sbr.rel (%p589) target = $region80
      $region79: #{gatv2_forward.1} parent=11 // pred_region
        _
      $region80: #{gatv2_forward.1} parent=11 // pred_fallthru
        _
      // Predicated region
      $region81: #{gatv2_forward.1} parent=11 // pred_check
        %p592 = pneg %p458
      $region82: #{gatv2_forward.1} parent=11 // pred_check_branch
        %594 = sbr.rel (%p592) target = $region84
      $region83: #{gatv2_forward.1} parent=11 // pred_region
        _
      $region84: #{gatv2_forward.1} parent=11 // pred_fallthru
        _
      // Predicated region
      $region85: #{gatv2_forward.1} parent=11 // pred_check
        %p595 = pneg %p479
      $region86: #{gatv2_forward.1} parent=11 // pred_check_branch
        %597 = sbr.rel (%p595) target = $region88
      $region87: #{gatv2_forward.1} parent=11 // pred_region
        _
      $region88: #{gatv2_forward.1} parent=11 // pred_fallthru
        _
      // Predicated region
      $region89: #{gatv2_forward.1} parent=11 // pred_check
        %p598 = pneg %p500
      $region90: #{gatv2_forward.1} parent=11 // pred_check_branch
        %600 = sbr.rel (%p598) target = $region92
      $region91: #{gatv2_forward.1} parent=11 // pred_region
        _
      $region92: #{gatv2_forward.1} parent=11 // pred_fallthru
        _
    $region12: #{gatv2_forward.1} parent=5 // pred_fallthru
      _
    %p601 = scmp.lt.s32.totalorder %s28, 2
    // Predicated region
    $region93: #{gatv2_forward.1} parent=5 // pred_check
      %p602 = pneg %p601
    $region94: #{gatv2_forward.1} parent=5 // pred_check_branch
      %604 = sbr.rel (%p602) target = $region96
    $region95: #{gatv2_forward.1} parent=5 // pred_region
      // Predicated region
      $region97: #{gatv2_forward.1} parent=95 // pred_check
        %p605 = pneg %p48
      $region98: #{gatv2_forward.1} parent=95 // pred_check_branch
        %607 = sbr.rel (%p605) target = $region100
      $region99: #{gatv2_forward.1} parent=95 // pred_region
        %p608 = scmp.lt.s32.totalorder %s28, 1
        %s609 = scalar_select %p608, %s28, 1
        %s610 = smul.addr %s609, 2
        %s611 = smul.addr %s610, 8
        %s612 = scalar_lea.vmem %s0, %s611
      $region100: #{gatv2_forward.1} parent=95 // pred_fallthru
        _
      // Predicated region
      $region101: #{gatv2_forward.1} parent=95 // pred_check
        %p613 = pneg %p74
      $region102: #{gatv2_forward.1} parent=95 // pred_check_branch
        %615 = sbr.rel (%p613) target = $region104
      $region103: #{gatv2_forward.1} parent=95 // pred_region
        %p616 = scmp.lt.s32.totalorder %s28, 1
        %s617 = scalar_select %p616, %s28, 1
        %s618 = smul.addr %s617, 2
        %s619 = smul.addr %s618, 8
        %s620 = scalar_lea.vmem %s1, %s619
      $region104: #{gatv2_forward.1} parent=95 // pred_fallthru
        _
    $region96: #{gatv2_forward.1} parent=5 // pred_fallthru
      _
    %p621 = scmp.le.s32.totalorder 1, %s28
    %p622 = scmp.lt.s32.totalorder %s28, 3
    %p623 = pnand %p621, %p622
    %p624 = pneg %p623
    // Predicated region
    $region105: #{gatv2_forward.1} parent=5 // pred_check
      _
    $region106: #{gatv2_forward.1} parent=5 // pred_check_branch
      %626 = sbr.rel (%p623) target = $region108
    $region107: #{gatv2_forward.1} parent=5 // pred_region
      %s627 = ssub.s32 %s28, 1
      %p628 = scmp.lt.s32.totalorder %s33, 1
      %s629 = scalar_select %p628, %s33, 1
      %s630 = smul.addr %s629, 2
      %s631 = smul.addr %s630, 8
      %s632 = scalar_lea.vmem %s0, %s631
      %p633 = pneg %p54
      %p634 = pneg %p51
      %p635 = scmp.lt.s32.totalorder %s33, 1
      %s636 = scalar_select %p635, %s33, 1
      %s637 = smul.addr %s636, 2
      %s638 = smul.addr %s637, 8
      %s639 = scalar_lea.vmem %s1, %s638
      %p640 = pneg %p80
      %p641 = pneg %p77
      %p642 = pneg %p101
      %p643 = pneg %p98
      %p644 = pneg %p122
      %p645 = pneg %p119
      %p646 = pneg %p143
      %p647 = pneg %p140
      %p648 = pneg %p164
      %p649 = pneg %p161
      %p650 = pneg %p185
      %p651 = pneg %p182
      %p652 = pneg %p206
      %p653 = pneg %p203
      %p654 = pneg %p227
      %p655 = pneg %p224
      %p656 = pneg %p248
      %p657 = pneg %p245
      %p658 = pneg %p269
      %p659 = pneg %p266
      %p660 = pneg %p290
      %p661 = pneg %p287
      %p662 = pneg %p311
      %p663 = pneg %p308
      %p664 = pneg %p332
      %p665 = pneg %p329
      %p666 = pneg %p353
      %p667 = pneg %p350
      %p668 = pneg %p374
      %p669 = pneg %p371
      %p670 = pneg %p395
      %p671 = pneg %p392
      %p672 = pneg %p416
      %p673 = pneg %p413
      %p674 = pneg %p437
      %p675 = pneg %p434
      %p676 = pneg %p458
      %p677 = pneg %p455
      %p678 = pneg %p479
      %p679 = pneg %p476
      %p680 = pneg %p500
      %p681 = pneg %p497
      %p682 = pneg %p526
      %p683 = pneg %p523
      %p684 = scmp.lt.s32.totalorder %s33, 1
      %s685 = scalar_select %p684, %s33, 1
      %s686 = smul.addr %s685, 2
      %s687 = smul.addr %s686, 8
      %s688 = scalar_lea.vmem %s22, %s687
      %p689 = scmp.lt.s32.totalorder %s33, 1
      %s690 = scalar_select %p689, %s33, 1
      %s691 = smul.addr %s690, 2
      %s692 = smul.addr %s691, 8
      %s693 = scalar_lea.vmem %s0, %s692
      %p694 = scmp.lt.s32.totalorder %s33, 1
      %s695 = scalar_select %p694, %s33, 1
      %s696 = smul.addr %s695, 2
      %s697 = smul.addr %s696, 8
      %s698 = scalar_lea.vmem %s1, %s697
      %p699 = scmp.lt.s32.totalorder %s33, 1
      %s700 = scalar_select %p699, %s33, 1
      %s701 = smul.addr %s700, 2
      %s702 = smul.addr %s701, 8
      %s703 = scalar_lea.vmem %s22, %s702
      %v704 = vld [vmem:[%s2] sm:$0xff]
      %v705 = vld [vmem:[%s2 + $0x8] sm:$0xff]
      %v706 = vld [vmem:[%s2 + $0x10] sm:$0xff]
      %v707 = vld [vmem:[%s2 + $0x18] sm:$0xff]
      %v708 = vld [vmem:[%s2 + $0x20] sm:$0xff]
      %v709 = vld [vmem:[%s2 + $0x28] sm:$0xff]
      %v710 = vld [vmem:[%s2 + $0x30] sm:$0xff]
      %v711 = vld [vmem:[%s2 + $0x38] sm:$0xff]
      %v712 = vld [vmem:[%s2 + $0x40] sm:$0xff]
      %v713 = vld [vmem:[%s2 + $0x48] sm:$0xff]
      %v714 = vld [vmem:[%s2 + $0x50] sm:$0xff]
      %v715 = vld [vmem:[%s2 + $0x58] sm:$0xff]
      %v716 = vld [vmem:[%s2 + $0x60] sm:$0xf]
      %v717 = vld [vmem:[%s3] sm:$0xff]
      %v718 = vld [vmem:[%s3 + $0x8] sm:$0xff]
      %v719 = vld [vmem:[%s3 + $0x10] sm:$0xff]
      %v720 = vld [vmem:[%s3 + $0x18] sm:$0xff]
      %v721 = vld [vmem:[%s3 + $0x20] sm:$0xff]
      %v722 = vld [vmem:[%s3 + $0x28] sm:$0xff]
      %v723 = vld [vmem:[%s3 + $0x30] sm:$0xff]
      %v724 = vld [vmem:[%s3 + $0x38] sm:$0xff]
      %v725 = vld [vmem:[%s3 + $0x40] sm:$0xff]
      %v726 = vld [vmem:[%s3 + $0x48] sm:$0xff]
      %v727 = vld [vmem:[%s3 + $0x50] sm:$0xff]
      %v728 = vld [vmem:[%s3 + $0x58] sm:$0xff]
      %v729 = vld [vmem:[%s3 + $0x60] sm:$0xf]
      %v730 = vld [vmem:[%s4] sm:$0xff]
      %v731 = vld [vmem:[%s4 + $0x8] sm:$0x3]
      %v732 = vadd.f32 %v704, %v717
      %v733 = vadd.f32 %v705, %v718
      %v734 = vadd.f32 %v706, %v719
      %v735 = vadd.f32 %v707, %v720
      %v736 = vadd.f32 %v708, %v721
      %v737 = vadd.f32 %v709, %v722
      %v738 = vadd.f32 %v710, %v723
      %v739 = vadd.f32 %v711, %v724
      %v740 = vadd.f32 %v712, %v725
      %v741 = vadd.f32 %v713, %v726
      %v742 = vadd.f32 %v714, %v727
      %v743 = vadd.f32 %v715, %v728
      %v744 = vadd.f32 %v716, %v729
      %v745 = vld [vmem:[%s698] sm:$0xff]
      %v746 = vld [vmem:[%s698 + $0x8] sm:$0x3]
      %vm747 = vcmp.eq.f32.partialorder %v745, 0.0
      %vm748 = vcmp.eq.f32.partialorder %v746, 0.0
      %v749 = vsel %vm747, inf, %v745
      %v750 = vsel %vm748, inf, %v746
      %vm751 = vcmask 80896
      %v752 = vsel %vm751, %v749, inf
      %753 = vmin.xlane.f32.xlu0 %v752
      %v754 = vpop.xlane.xlu0 %753
      %vm755 = vcmask 74752
      %v756 = vsel %vm755, %v750, inf
      %757 = vmin.xlane.f32.xlu0 %v756
      %v758 = vpop.xlane.xlu0 %757
      %v759 = vmul.f32 %v754, 0.5
      %v760 = vmul.f32 %v758, 0.5
      %v761 = vlaneseq
      %v762 = vshrl.u32 %v761, 7
      %v763 = vadd.s32 %v762, 8
      %v764 = vlaneseq
      %v765 = vand.u32 %v764, 127
      %vm766 = vcmp.eq.s32.totalorder %v762, %v765
      %vm767 = vcmp.eq.s32.totalorder %v763, %v765
      %v768 = vsel %vm766, %v759, 0.0
      %v769 = vsel %vm767, %v760, 0.0
      %v770 = vadd.f32 %v745, %v768
      %v771 = vadd.f32 %v746, %v769
      %v772 = vmul.f32 %v770, %v770
      %v773 = vmul.f32 %v771, %v771
      %v774 = vsel %vm751, %v772, 0.0
      %775 = vadd.xlane.f32.xlu0 %v774
      %v776 = vpop.xlane.xlu0 %775
      %v777 = vsel %vm755, %v773, 0.0
      %778 = vadd.xlane.f32.xlu0 %v777
      %v779 = vpop.xlane.xlu0 %778
      %v780 = vrsqrt.pop %v776
      %v781 = vmul.f32 %v776, %v780
      %vm782 = vcmp.eq.f32.partialorder %v776, inf
      %v783 = vsel %vm782, %v776, %v781
      %vm784 = vcmp.eq.f32.partialorder %v776, 0.0
      %v785 = vand.u32 %v776, 2147483648
      %v786 = vsel %vm784, %v785, %v783
      %v787 = vrsqrt.pop %v779
      %v788 = vmul.f32 %v779, %v787
      %vm789 = vcmp.eq.f32.partialorder %v779, inf
      %v790 = vsel %vm789, %v779, %v788
      %vm791 = vcmp.eq.f32.partialorder %v779, 0.0
      %v792 = vand.u32 %v779, 2147483648
      %v793 = vsel %vm791, %v792, %v790
      %v794 = vmax.f32 %v786, 1e-12
      %v795 = vmax.f32 %v793, 1e-12
      %vm796 = vcmp.ne.f32.partialorder %v770, 0.0
      %vm797 = vcmp.ne.f32.partialorder %v771, 0.0
      %v798 = vsel %vm796, 1, 0
      %v799 = vsel %vm797, 1, 0
      %v800 = vcvt.s32.f32 %v798
      %v801 = vcvt.s32.f32 %v799
      %v802 = vsel %vm796, %v770, 1.0
      %v803 = vsel %vm797, %v771, 1.0
      %v804 = vrcp.pop %v802
      %v805 = vmul.f32 %v794, %v804
      %v806 = vrcp.pop %v803
      %v807 = vmul.f32 %v795, %v806
      %v808 = vsel %vm796, %v805, 0.0
      %v809 = vsel %vm797, %v807, 0.0
      %v811 = vsel %vm751, %v704, 0
      %v814 = vsel %vm751, %v705, 0
      %v817 = vsel %vm751, %v706, 0
      %v820 = vsel %vm751, %v707, 0
      %v823 = vsel %vm751, %v708, 0
      %v826 = vsel %vm751, %v709, 0
      %v829 = vsel %vm751, %v710, 0
      %v832 = vsel %vm751, %v711, 0
      %v835 = vsel %vm751, %v712, 0
      %v838 = vsel %vm751, %v713, 0
      %v841 = vsel %vm751, %v714, 0
      %v844 = vsel %vm751, %v715, 0
      %v847 = vsel %vm751, %v716, 0
      %vm849 = vcmask 1041408
      %v851 = vsel %vm849, %v809, 0
      %853 = vmatprep.subr.mxu0 0.0
      %854 = vmatpush1.msra.mxu0 0.0
      %855 = vmatprep.subr.mxu0 0.0
      %856 = vmatpush1.msra.mxu0 0.0
      %857 = vmatprep.subr.mxu0 0.0
      %858 = vmatpush1.msra.mxu0 0.0
      %859 = vmatprep.subr.mxu0 0.0
      %860 = vmatpush1.msra.mxu0 0.0
      %861 = vmatprep.subr.mxu0 0.0
      %862 = vmatpush1.msra.mxu0 0.0
      %863 = vmatprep.subr.mxu0 0.0
      %864 = vmatpush1.msra.mxu0 0.0
      %865 = vmatprep.subr.mxu0 0.0
      %866 = vmatpush1.msra.mxu0 0.0
      %867 = vmatprep.subr.mxu0 0.0
      %868 = vmatpush1.msra.mxu0 0.0
      %869 = vmatprep.subr.mxu0 0.0
      %870 = vmatpush1.msra.mxu0 0.0
      %871 = vmatprep.subr.mxu0 0.0
      %872 = vmatpush1.msra.mxu0 0.0
      %873 = vmatprep.subr.mxu0 0.0
      %874 = vmatpush1.msra.mxu0 0.0
      %875 = vmatprep.subr.mxu0 0.0
      %876 = vmatpush1.msra.mxu0 0.0
      %877 = vmatprep.subr.mxu0 0.0
      %878 = vmatpush1.msra.mxu0 0.0
      %879 = vmatprep.subr.mxu0 0.0
      %880 = vmatpush1.msra.mxu0 0.0
      %881 = vmatprep.subr.mxu0 0.0
      %882 = vmatpush1.msra.mxu0 %v851
      %883 = vmatprep.subr.mxu0 0.0
      %884 = vmatpush1.msra.mxu0 %v808
      %885 = vmatprep.subr.mxu0 0.0
      %886 = vmatpush2.msra.mxu0 0.0
      %887 = vmatprep.subr.mxu0 0.0
      %888 = vmatpush2.msra.mxu0 0.0
      %889 = vmatprep.subr.mxu0 0.0
      %890 = vmatpush2.msra.mxu0 0.0
      %891 = vmatprep.subr.mxu0 0.0
      %892 = vmatpush2.msra.mxu0 0.0
      %893 = vmatprep.subr.mxu0 0.0
      %894 = vmatpush2.msra.mxu0 0.0
      %895 = vmatprep.subr.mxu0 0.0
      %896 = vmatpush2.msra.mxu0 0.0
      %897 = vmatprep.subr.mxu0 0.0
      %898 = vmatpush2.msra.mxu0 0.0
      %899 = vmatprep.subr.mxu0 0.0
      %900 = vmatpush2.msra.mxu0 0.0
      %901 = vmatprep.subr.mxu0 0.0
      %902 = vmatpush2.msra.mxu0 0.0
      %903 = vmatprep.subr.mxu0 0.0
      %904 = vmatpush2.msra.mxu0 0.0
      %905 = vmatprep.subr.mxu0 0.0
      %906 = vmatpush2.msra.mxu0 0.0
      %907 = vmatprep.subr.mxu0 0.0
      %908 = vmatpush2.msra.mxu0 0.0
      %909 = vmatprep.subr.mxu0 0.0
      %910 = vmatpush2.msra.mxu0 0.0
      %911 = vmatprep.subr.mxu0 0.0
      %912 = vmatpush2.msra.mxu0 0.0
      %913 = vmatprep.subr.mxu0 0.0
      %914 = vmatpush2.msra.mxu0 0.0
      %915 = vmatprep.subr.mxu0 0.0
      %916 = vmatpush2.msra.mxu0 0.0
      %917 = vmatprep.mubr.f32.mxu0 0.0
      %918 = vmatmul.mubr.f32.gmra.mxu0 %v811
      %v919 = vpop.f32.mrf.mxu0
      %v920 = vadd.f32 0.0, %v919
      %v921 = vpop.f32.mrf.mxu0
      %922 = vmatprep.mubr.f32.mxu0 0.0
      %923 = vmatmul.mubr.f32.gmra.mxu0 %v814
      %v924 = vpop.f32.mrf.mxu0
      %v925 = vadd.f32 0.0, %v924
      %v926 = vpop.f32.mrf.mxu0
      %927 = vmatprep.mubr.f32.mxu0 0.0
      %928 = vmatmul.mubr.f32.gmra.mxu0 %v817
      %v929 = vpop.f32.mrf.mxu0
      %v930 = vadd.f32 0.0, %v929
      %v931 = vpop.f32.mrf.mxu0
      %932 = vmatprep.mubr.f32.mxu0 0.0
      %933 = vmatmul.mubr.f32.gmra.mxu0 %v820
      %v934 = vpop.f32.mrf.mxu0
      %v935 = vadd.f32 0.0, %v934
      %v936 = vpop.f32.mrf.mxu0
      %937 = vmatprep.mubr.f32.mxu0 0.0
      %938 = vmatmul.mubr.f32.gmra.mxu0 %v823
      %v939 = vpop.f32.mrf.mxu0
      %v940 = vadd.f32 0.0, %v939
      %v941 = vpop.f32.mrf.mxu0
      %942 = vmatprep.mubr.f32.mxu0 0.0
      %943 = vmatmul.mubr.f32.gmra.mxu0 %v826
      %v944 = vpop.f32.mrf.mxu0
      %v945 = vadd.f32 0.0, %v944
      %v946 = vpop.f32.mrf.mxu0
      %947 = vmatprep.mubr.f32.mxu0 0.0
      %948 = vmatmul.mubr.f32.gmra.mxu0 %v829
      %v949 = vpop.f32.mrf.mxu0
      %v950 = vadd.f32 0.0, %v949
      %v951 = vpop.f32.mrf.mxu0
      %952 = vmatprep.mubr.f32.mxu0 0.0
      %953 = vmatmul.mubr.f32.gmra.mxu0 %v832
      %v954 = vpop.f32.mrf.mxu0
      %v955 = vadd.f32 0.0, %v954
      %v956 = vpop.f32.mrf.mxu0
      %957 = vmatprep.mubr.f32.mxu0 0.0
      %958 = vmatmul.mubr.f32.gmra.mxu0 %v835
      %v959 = vpop.f32.mrf.mxu0
      %v960 = vadd.f32 0.0, %v959
      %v961 = vpop.f32.mrf.mxu0
      %962 = vmatprep.mubr.f32.mxu0 0.0
      %963 = vmatmul.mubr.f32.gmra.mxu0 %v838
      %v964 = vpop.f32.mrf.mxu0
      %v965 = vadd.f32 0.0, %v964
      %v966 = vpop.f32.mrf.mxu0
      %967 = vmatprep.mubr.f32.mxu0 0.0
      %968 = vmatmul.mubr.f32.gmra.mxu0 %v841
      %v969 = vpop.f32.mrf.mxu0
      %v970 = vadd.f32 0.0, %v969
      %v971 = vpop.f32.mrf.mxu0
      %972 = vmatprep.mubr.f32.mxu0 0.0
      %973 = vmatmul.mubr.f32.gmra.mxu0 %v844
      %v974 = vpop.f32.mrf.mxu0
      %v975 = vadd.f32 0.0, %v974
      %v976 = vpop.f32.mrf.mxu0
      %977 = vmatprep.mubr.f32.mxu0 0.0
      %978 = vmatmul.mubr.f32.gmra.mxu0 %v847
      %v979 = vpop.f32.mrf.mxu0
      %v980 = vadd.f32 0.0, %v979
      %v981 = vpop.f32.mrf.mxu0
      %982 = vdwg.mxu0
      %v983 = vmul.f32 %v920, %v717
      %v984 = vmul.f32 %v925, %v718
      %v985 = vmul.f32 %v930, %v719
      %v986 = vmul.f32 %v935, %v720
      %v987 = vmul.f32 %v940, %v721
      %v988 = vmul.f32 %v945, %v722
      %v989 = vmul.f32 %v950, %v723
      %v990 = vmul.f32 %v955, %v724
      %v991 = vmul.f32 %v960, %v725
      %v992 = vmul.f32 %v965, %v726
      %v993 = vmul.f32 %v970, %v727
      %v994 = vmul.f32 %v975, %v728
      %v995 = vmul.f32 %v980, %v729
      %v996 = vsel %vm751, %v983, 0.0
      %997 = vadd.xlane.f32.xlu0 %v996
      %v998 = vpop.xlane.xlu0 %997
      %v999 = vsel %vm751, %v984, 0.0
      %1000 = vadd.xlane.f32.xlu0 %v999
      %v1001 = vpop.xlane.xlu0 %1000
      %v1002 = vsel %vm751, %v985, 0.0
      %1003 = vadd.xlane.f32.xlu0 %v1002
      %v1004 = vpop.xlane.xlu0 %1003
      %v1005 = vsel %vm751, %v986, 0.0
      %1006 = vadd.xlane.f32.xlu0 %v1005
      %v1007 = vpop.xlane.xlu0 %1006
      %v1008 = vsel %vm751, %v987, 0.0
      %1009 = vadd.xlane.f32.xlu0 %v1008
      %v1010 = vpop.xlane.xlu0 %1009
      %v1011 = vsel %vm751, %v988, 0.0
      %1012 = vadd.xlane.f32.xlu0 %v1011
      %v1013 = vpop.xlane.xlu0 %1012
      %v1014 = vsel %vm751, %v989, 0.0
      %1015 = vadd.xlane.f32.xlu0 %v1014
      %v1016 = vpop.xlane.xlu0 %1015
      %v1017 = vsel %vm751, %v990, 0.0
      %1018 = vadd.xlane.f32.xlu0 %v1017
      %v1019 = vpop.xlane.xlu0 %1018
      %v1020 = vsel %vm751, %v991, 0.0
      %1021 = vadd.xlane.f32.xlu0 %v1020
      %v1022 = vpop.xlane.xlu0 %1021
      %v1023 = vsel %vm751, %v992, 0.0
      %1024 = vadd.xlane.f32.xlu0 %v1023
      %v1025 = vpop.xlane.xlu0 %1024
      %v1026 = vsel %vm751, %v993, 0.0
      %1027 = vadd.xlane.f32.xlu0 %v1026
      %v1028 = vpop.xlane.xlu0 %1027
      %v1029 = vsel %vm751, %v994, 0.0
      %1030 = vadd.xlane.f32.xlu0 %v1029
      %v1031 = vpop.xlane.xlu0 %1030
      %vm1032 = vcmask 76800
      %v1033 = vsel %vm1032, %v995, 0.0
      %1034 = vadd.xlane.f32.xlu0 %v1033
      %v1035 = vpop.xlane.xlu0 %1034
      %v1036 = vld [vmem:[%s9] sm:$0xff]
      %v1037 = vld [vmem:[%s9 + $0x8] sm:$0xff]
      %v1038 = vld [vmem:[%s9 + $0x10] sm:$0xff]
      %v1039 = vld [vmem:[%s9 + $0x18] sm:$0xff]
      %v1040 = vld [vmem:[%s9 + $0x20] sm:$0xff]
      %v1041 = vld [vmem:[%s9 + $0x28] sm:$0xff]
      %v1042 = vld [vmem:[%s9 + $0x30] sm:$0xff]
      %v1043 = vld [vmem:[%s9 + $0x38] sm:$0xff]
      %v1044 = vld [vmem:[%s9 + $0x40] sm:$0xff]
      %v1045 = vld [vmem:[%s9 + $0x48] sm:$0xff]
      %v1046 = vld [vmem:[%s9 + $0x50] sm:$0xff]
      %v1047 = vld [vmem:[%s9 + $0x58] sm:$0xff]
      %v1048 = vld [vmem:[%s9 + $0x60] sm:$0xff]
      %v1049 = vld [vmem:[%s9 + $0x68] sm:$0xff]
      %v1050 = vld [vmem:[%s9 + $0x70] sm:$0xff]
      %v1051 = vld [vmem:[%s9 + $0x78] sm:$0xff]
      %v1052 = vld [vmem:[%s9 + $0x80] sm:$0xff]
      %v1053 = vld [vmem:[%s9 + $0x88] sm:$0xff]
      %v1054 = vld [vmem:[%s9 + $0x90] sm:$0xff]
      %v1055 = vld [vmem:[%s9 + $0x98] sm:$0xff]
      %v1056 = vld [vmem:[%s9 + $0xa0] sm:$0xff]
      %v1057 = vld [vmem:[%s9 + $0xa8] sm:$0xff]
      %v1058 = vld [vmem:[%s9 + $0xb0] sm:$0xff]
      %v1059 = vld [vmem:[%s9 + $0xb8] sm:$0xff]
      %v1060 = vld [vmem:[%s9 + $0xc0] sm:$0xff]
      %vm1061 = vcmask 818176
      %v1063 = vsel %vm1061, %v1036, 0
      %v1066 = vsel %vm1061, %v1037, 0
      %v1069 = vsel %vm1061, %v1038, 0
      %v1072 = vsel %vm1061, %v1039, 0
      %v1075 = vsel %vm1061, %v1040, 0
      %v1078 = vsel %vm1061, %v1041, 0
      %v1081 = vsel %vm1061, %v1042, 0
      %v1084 = vsel %vm1061, %v1043, 0
      %v1087 = vsel %vm1061, %v1044, 0
      %v1090 = vsel %vm1061, %v1045, 0
      %v1093 = vsel %vm1061, %v1046, 0
      %v1096 = vsel %vm1061, %v1047, 0
      %v1099 = vsel %vm1061, %v1048, 0
      %v1102 = vsel %vm1061, %v1049, 0
      %v1105 = vsel %vm1061, %v1050, 0
      %v1108 = vsel %vm1061, %v1051, 0
      %v1111 = vsel %vm1061, %v1052, 0
      %v1114 = vsel %vm1061, %v1053, 0
      %v1117 = vsel %vm1061, %v1054, 0
      %v1120 = vsel %vm1061, %v1055, 0
      %v1123 = vsel %vm1061, %v1056, 0
      %v1126 = vsel %vm1061, %v1057, 0
      %v1129 = vsel %vm1061, %v1058, 0
      %v1132 = vsel %vm1061, %v1059, 0
      %v1135 = vsel %vm1061, %v1060, 0
      %vm1137 = vcmask 1043456
      %v1139 = vsel %vm1137, %v1035, 0
      %1141 = vmatprep.subr.mxu0 0.0
      %1142 = vmatpush1.msra.mxu0 0.0
      %1143 = vmatprep.subr.mxu0 0.0
      %1144 = vmatpush1.msra.mxu0 0.0
      %1145 = vmatprep.subr.mxu0 0.0
      %1146 = vmatpush1.msra.mxu0 0.0
      %1147 = vmatprep.subr.mxu0 0.0
      %1148 = vmatpush1.msra.mxu0 %v1139
      %1149 = vmatprep.subr.mxu0 0.0
      %1150 = vmatpush1.msra.mxu0 %v1031
      %1151 = vmatprep.subr.mxu0 0.0
      %1152 = vmatpush1.msra.mxu0 %v1028
      %1153 = vmatprep.subr.mxu0 0.0
      %1154 = vmatpush1.msra.mxu0 %v1025
      %1155 = vmatprep.subr.mxu0 0.0
      %1156 = vmatpush1.msra.mxu0 %v1022
      %1157 = vmatprep.subr.mxu0 0.0
      %1158 = vmatpush1.msra.mxu0 %v1019
      %1159 = vmatprep.subr.mxu0 0.0
      %1160 = vmatpush1.msra.mxu0 %v1016
      %1161 = vmatprep.subr.mxu0 0.0
      %1162 = vmatpush1.msra.mxu0 %v1013
      %1163 = vmatprep.subr.mxu0 0.0
      %1164 = vmatpush1.msra.mxu0 %v1010
      %1165 = vmatprep.subr.mxu0 0.0
      %1166 = vmatpush1.msra.mxu0 %v1007
      %1167 = vmatprep.subr.mxu0 0.0
      %1168 = vmatpush1.msra.mxu0 %v1004
      %1169 = vmatprep.subr.mxu0 0.0
      %1170 = vmatpush1.msra.mxu0 %v1001
      %1171 = vmatprep.subr.mxu0 0.0
      %1172 = vmatpush1.msra.mxu0 %v998
      %1173 = vmatprep.subr.mxu0 0.0
      %1174 = vmatpush2.msra.mxu0 0.0
      %1175 = vmatprep.subr.mxu0 0.0
      %1176 = vmatpush2.msra.mxu0 0.0
      %1177 = vmatprep.subr.mxu0 0.0
      %1178 = vmatpush2.msra.mxu0 0.0
      %1179 = vmatprep.subr.mxu0 0.0
      %1180 = vmatpush2.msra.mxu0 0.0
      %1181 = vmatprep.subr.mxu0 0.0
      %1182 = vmatpush2.msra.mxu0 0.0
      %1183 = vmatprep.subr.mxu0 0.0
      %1184 = vmatpush2.msra.mxu0 0.0
      %1185 = vmatprep.subr.mxu0 0.0
      %1186 = vmatpush2.msra.mxu0 0.0
      %1187 = vmatprep.subr.mxu0 0.0
      %1188 = vmatpush2.msra.mxu0 0.0
      %1189 = vmatprep.subr.mxu0 0.0
      %1190 = vmatpush2.msra.mxu0 0.0
      %1191 = vmatprep.subr.mxu0 0.0
      %1192 = vmatpush2.msra.mxu0 0.0
      %1193 = vmatprep.subr.mxu0 0.0
      %1194 = vmatpush2.msra.mxu0 0.0
      %1195 = vmatprep.subr.mxu0 0.0
      %1196 = vmatpush2.msra.mxu0 0.0
      %1197 = vmatprep.subr.mxu0 0.0
      %1198 = vmatpush2.msra.mxu0 0.0
      %1199 = vmatprep.subr.mxu0 0.0
      %1200 = vmatpush2.msra.mxu0 0.0
      %1201 = vmatprep.subr.mxu0 0.0
      %1202 = vmatpush2.msra.mxu0 0.0
      %1203 = vmatprep.subr.mxu0 0.0
      %1204 = vmatpush2.msra.mxu0 0.0
      %1205 = vmatprep.mubr.f32.mxu0 0.0
      %1206 = vmatmul.mubr.f32.gmra.mxu0 %v1063
      %v1207 = vpop.f32.mrf.mxu0
      %v1208 = vadd.f32 0.0, %v1207
      %v1209 = vpop.f32.mrf.mxu0
      %1210 = vmatprep.mubr.f32.mxu0 0.0
      %1211 = vmatmul.mubr.f32.gmra.mxu0 %v1066
      %v1212 = vpop.f32.mrf.mxu0
      %v1213 = vadd.f32 0.0, %v1212
      %v1214 = vpop.f32.mrf.mxu0
      %1215 = vmatprep.mubr.f32.mxu0 0.0
      %1216 = vmatmul.mubr.f32.gmra.mxu0 %v1069
      %v1217 = vpop.f32.mrf.mxu0
      %v1218 = vadd.f32 0.0, %v1217
      %v1219 = vpop.f32.mrf.mxu0
      %1220 = vmatprep.mubr.f32.mxu0 0.0
      %1221 = vmatmul.mubr.f32.gmra.mxu0 %v1072
      %v1222 = vpop.f32.mrf.mxu0
      %v1223 = vadd.f32 0.0, %v1222
      %v1224 = vpop.f32.mrf.mxu0
      %1225 = vmatprep.mubr.f32.mxu0 0.0
      %1226 = vmatmul.mubr.f32.gmra.mxu0 %v1075
      %v1227 = vpop.f32.mrf.mxu0
      %v1228 = vadd.f32 0.0, %v1227
      %v1229 = vpop.f32.mrf.mxu0
      %1230 = vmatprep.mubr.f32.mxu0 0.0
      %1231 = vmatmul.mubr.f32.gmra.mxu0 %v1078
      %v1232 = vpop.f32.mrf.mxu0
      %v1233 = vadd.f32 0.0, %v1232
      %v1234 = vpop.f32.mrf.mxu0
      %1235 = vmatprep.mubr.f32.mxu0 0.0
      %1236 = vmatmul.mubr.f32.gmra.mxu0 %v1081
      %v1237 = vpop.f32.mrf.mxu0
      %v1238 = vadd.f32 0.0, %v1237
      %v1239 = vpop.f32.mrf.mxu0
      %1240 = vmatprep.mubr.f32.mxu0 0.0
      %1241 = vmatmul.mubr.f32.gmra.mxu0 %v1084
      %v1242 = vpop.f32.mrf.mxu0
      %v1243 = vadd.f32 0.0, %v1242
      %v1244 = vpop.f32.mrf.mxu0
      %1245 = vmatprep.mubr.f32.mxu0 0.0
      %1246 = vmatmul.mubr.f32.gmra.mxu0 %v1087
      %v1247 = vpop.f32.mrf.mxu0
      %v1248 = vadd.f32 0.0, %v1247
      %v1249 = vpop.f32.mrf.mxu0
      %1250 = vmatprep.mubr.f32.mxu0 0.0
      %1251 = vmatmul.mubr.f32.gmra.mxu0 %v1090
      %v1252 = vpop.f32.mrf.mxu0
      %v1253 = vadd.f32 0.0, %v1252
      %v1254 = vpop.f32.mrf.mxu0
      %1255 = vmatprep.mubr.f32.mxu0 0.0
      %1256 = vmatmul.mubr.f32.gmra.mxu0 %v1093
      %v1257 = vpop.f32.mrf.mxu0
      %v1258 = vadd.f32 0.0, %v1257
      %v1259 = vpop.f32.mrf.mxu0
      %1260 = vmatprep.mubr.f32.mxu0 0.0
      %1261 = vmatmul.mubr.f32.gmra.mxu0 %v1096
      %v1262 = vpop.f32.mrf.mxu0
      %v1263 = vadd.f32 0.0, %v1262
      %v1264 = vpop.f32.mrf.mxu0
      %1265 = vmatprep.mubr.f32.mxu0 0.0
      %1266 = vmatmul.mubr.f32.gmra.mxu0 %v1099
      %v1267 = vpop.f32.mrf.mxu0
      %v1268 = vadd.f32 0.0, %v1267
      %v1269 = vpop.f32.mrf.mxu0
      %1270 = vmatprep.mubr.f32.mxu0 0.0
      %1271 = vmatmul.mubr.f32.gmra.mxu0 %v1102
      %v1272 = vpop.f32.mrf.mxu0
      %v1273 = vadd.f32 0.0, %v1272
      %v1274 = vpop.f32.mrf.mxu0
      %1275 = vmatprep.mubr.f32.mxu0 0.0
      %1276 = vmatmul.mubr.f32.gmra.mxu0 %v1105
      %v1277 = vpop.f32.mrf.mxu0
      %v1278 = vadd.f32 0.0, %v1277
      %v1279 = vpop.f32.mrf.mxu0
      %1280 = vmatprep.mubr.f32.mxu0 0.0
      %1281 = vmatmul.mubr.f32.gmra.mxu0 %v1108
      %v1282 = vpop.f32.mrf.mxu0
      %v1283 = vadd.f32 0.0, %v1282
      %v1284 = vpop.f32.mrf.mxu0
      %1285 = vmatprep.mubr.f32.mxu0 0.0
      %1286 = vmatmul.mubr.f32.gmra.mxu0 %v1111
      %v1287 = vpop.f32.mrf.mxu0
      %v1288 = vadd.f32 0.0, %v1287
      %v1289 = vpop.f32.mrf.mxu0
      %1290 = vmatprep.mubr.f32.mxu0 0.0
      %1291 = vmatmul.mubr.f32.gmra.mxu0 %v1114
      %v1292 = vpop.f32.mrf.mxu0
      %v1293 = vadd.f32 0.0, %v1292
      %v1294 = vpop.f32.mrf.mxu0
      %1295 = vmatprep.mubr.f32.mxu0 0.0
      %1296 = vmatmul.mubr.f32.gmra.mxu0 %v1117
      %v1297 = vpop.f32.mrf.mxu0
      %v1298 = vadd.f32 0.0, %v1297
      %v1299 = vpop.f32.mrf.mxu0
      %1300 = vmatprep.mubr.f32.mxu0 0.0
      %1301 = vmatmul.mubr.f32.gmra.mxu0 %v1120
      %v1302 = vpop.f32.mrf.mxu0
      %v1303 = vadd.f32 0.0, %v1302
      %v1304 = vpop.f32.mrf.mxu0
      %1305 = vmatprep.mubr.f32.mxu0 0.0
      %1306 = vmatmul.mubr.f32.gmra.mxu0 %v1123
      %v1307 = vpop.f32.mrf.mxu0
      %v1308 = vadd.f32 0.0, %v1307
      %v1309 = vpop.f32.mrf.mxu0
      %1310 = vmatprep.mubr.f32.mxu0 0.0
      %1311 = vmatmul.mubr.f32.gmra.mxu0 %v1126
      %v1312 = vpop.f32.mrf.mxu0
      %v1313 = vadd.f32 0.0, %v1312
      %v1314 = vpop.f32.mrf.mxu0
      %1315 = vmatprep.mubr.f32.mxu0 0.0
      %1316 = vmatmul.mubr.f32.gmra.mxu0 %v1129
      %v1317 = vpop.f32.mrf.mxu0
      %v1318 = vadd.f32 0.0, %v1317
      %v1319 = vpop.f32.mrf.mxu0
      %1320 = vmatprep.mubr.f32.mxu0 0.0
      %1321 = vmatmul.mubr.f32.gmra.mxu0 %v1132
      %v1322 = vpop.f32.mrf.mxu0
      %v1323 = vadd.f32 0.0, %v1322
      %v1324 = vpop.f32.mrf.mxu0
      %1325 = vmatprep.mubr.f32.mxu0 0.0
      %1326 = vmatmul.mubr.f32.gmra.mxu0 %v1135
      %v1327 = vpop.f32.mrf.mxu0
      %v1328 = vadd.f32 0.0, %v1327
      %v1329 = vpop.f32.mrf.mxu0
      %1330 = vdwg.mxu0
      %v1331 = vtanh.pop %v1208
      %v1332 = vtanh.pop %v1213
      %v1333 = vtanh.pop %v1218
      %v1334 = vtanh.pop %v1223
      %v1335 = vtanh.pop %v1228
      %v1336 = vtanh.pop %v1233
      %v1337 = vtanh.pop %v1238
      %v1338 = vtanh.pop %v1243
      %v1339 = vtanh.pop %v1248
      %v1340 = vtanh.pop %v1253
      %v1341 = vtanh.pop %v1258
      %v1342 = vtanh.pop %v1263
      %v1343 = vtanh.pop %v1268
      %v1344 = vtanh.pop %v1273
      %v1345 = vtanh.pop %v1278
      %v1346 = vtanh.pop %v1283
      %v1347 = vtanh.pop %v1288
      %v1348 = vtanh.pop %v1293
      %v1349 = vtanh.pop %v1298
      %v1350 = vtanh.pop %v1303
      %v1351 = vtanh.pop %v1308
      %v1352 = vtanh.pop %v1313
      %v1353 = vtanh.pop %v1318
      %v1354 = vtanh.pop %v1323
      %v1355 = vtanh.pop %v1328
      %v1356 = vld [vmem:[%s693] sm:$0xff]
      %v1357 = vld [vmem:[%s693 + $0x8] sm:$0x3]
      %v1358 = vld [vmem:[%s5] sm:$0xff]
      %v1359 = vld [vmem:[%s6] sm:$0x1]
      %v1361 = vlaneseq
      %v1362 = vshrl.u32 %v1361, 7
      %v1363 = vsub.s32 0, %v1362
      %v1364 = vrot.slane %v1359, %v1363
      %vm1366 = vcmask 64512
      %v1368 = vsel %vm1366, %v1356, 0
      %v1371 = vsel %vm1366, %v1357, 0
      %1373 = vmatprep.subr.mxu0 0.0
      %1374 = vmatpush1.msra.mxu0 0.0
      %1375 = vmatprep.subr.mxu0 0.0
      %1376 = vmatpush1.msra.mxu0 0.0
      %1377 = vmatprep.subr.mxu0 0.0
      %1378 = vmatpush1.msra.mxu0 0.0
      %1379 = vmatprep.subr.mxu0 0.0
      %1380 = vmatpush1.msra.mxu0 0.0
      %1381 = vmatprep.subr.mxu0 0.0
      %1382 = vmatpush1.msra.mxu0 0.0
      %1383 = vmatprep.subr.mxu0 0.0
      %1384 = vmatpush1.msra.mxu0 0.0
      %1385 = vmatprep.subr.mxu0 0.0
      %1386 = vmatpush1.msra.mxu0 0.0
      %1387 = vmatprep.subr.mxu0 0.0
      %1388 = vmatpush1.msra.mxu0 0.0
      %1389 = vmatprep.subr.mxu0 0.0
      %1390 = vmatpush1.msra.mxu0 0.0
      %1391 = vmatprep.subr.mxu0 0.0
      %1392 = vmatpush1.msra.mxu0 0.0
      %1393 = vmatprep.subr.mxu0 0.0
      %1394 = vmatpush1.msra.mxu0 0.0
      %1395 = vmatprep.subr.mxu0 0.0
      %1396 = vmatpush1.msra.mxu0 0.0
      %1397 = vmatprep.subr.mxu0 0.0
      %1398 = vmatpush1.msra.mxu0 0.0
      %1399 = vmatprep.subr.mxu0 0.0
      %1400 = vmatpush1.msra.mxu0 0.0
      %1401 = vmatprep.subr.mxu0 0.0
      %1402 = vmatpush1.msra.mxu0 0.0
      %1403 = vmatprep.subr.mxu0 0.0
      %1404 = vmatpush1.msra.mxu0 %v1358
      %1405 = vmatprep.subr.mxu0 0.0
      %1406 = vmatpush2.msra.mxu0 0.0
      %1407 = vmatprep.subr.mxu0 0.0
      %1408 = vmatpush2.msra.mxu0 0.0
      %1409 = vmatprep.subr.mxu0 0.0
      %1410 = vmatpush2.msra.mxu0 0.0
      %1411 = vmatprep.subr.mxu0 0.0
      %1412 = vmatpush2.msra.mxu0 0.0
      %1413 = vmatprep.subr.mxu0 0.0
      %1414 = vmatpush2.msra.mxu0 0.0
      %1415 = vmatprep.subr.mxu0 0.0
      %1416 = vmatpush2.msra.mxu0 0.0
      %1417 = vmatprep.subr.mxu0 0.0
      %1418 = vmatpush2.msra.mxu0 0.0
      %1419 = vmatprep.subr.mxu0 0.0
      %1420 = vmatpush2.msra.mxu0 0.0
      %1421 = vmatprep.subr.mxu0 0.0
      %1422 = vmatpush2.msra.mxu0 0.0
      %1423 = vmatprep.subr.mxu0 0.0
      %1424 = vmatpush2.msra.mxu0 0.0
      %1425 = vmatprep.subr.mxu0 0.0
      %1426 = vmatpush2.msra.mxu0 0.0
      %1427 = vmatprep.subr.mxu0 0.0
      %1428 = vmatpush2.msra.mxu0 0.0
      %1429 = vmatprep.subr.mxu0 0.0
      %1430 = vmatpush2.msra.mxu0 0.0
      %1431 = vmatprep.subr.mxu0 0.0
      %1432 = vmatpush2.msra.mxu0 0.0
      %1433 = vmatprep.subr.mxu0 0.0
      %1434 = vmatpush2.msra.mxu0 0.0
      %1435 = vmatprep.subr.mxu0 0.0
      %1436 = vmatpush2.msra.mxu0 0.0
      %1437 = vmatprep.mubr.f32.mxu0 0.0
      %1438 = vmatmul.mubr.f32.gmra.mxu0 %v1368
      %v1439 = vpop.f32.mrf.mxu0
      %v1440 = vadd.f32 %v1364, %v1439
      %v1441 = vpop.f32.mrf.mxu0
      %1442 = vmatprep.mubr.f32.mxu0 0.0
      %1443 = vmatmul.mubr.f32.gmra.mxu0 %v1371
      %v1444 = vpop.f32.mrf.mxu0
      %v1445 = vadd.f32 %v1364, %v1444
      %v1446 = vpop.f32.mrf.mxu0
      %1447 = vdwg.mxu0
      %v1448 = vld [vmem:[%s7] sm:$0xff]
      %v1449 = vld [vmem:[%s7 + $0x8] sm:$0xff]
      %v1450 = vld [vmem:[%s7 + $0x10] sm:$0xff]
      %v1451 = vld [vmem:[%s7 + $0x18] sm:$0xff]
      %vm1452 = vcmask 261120
      %v1454 = vsel %vm1452, %v1440, 0
      %v1457 = vsel %vm1452, %v1445, 0
      %1459 = vmatprep.subr.mxu0 0.0
      %1460 = vmatpush1.msra.mxu0 0.0
      %1461 = vmatprep.subr.mxu0 0.0
      %1462 = vmatpush1.msra.mxu0 0.0
      %1463 = vmatprep.subr.mxu0 0.0
      %1464 = vmatpush1.msra.mxu0 0.0
      %1465 = vmatprep.subr.mxu0 0.0
      %1466 = vmatpush1.msra.mxu0 0.0
      %1467 = vmatprep.subr.mxu0 0.0
      %1468 = vmatpush1.msra.mxu0 0.0
      %1469 = vmatprep.subr.mxu0 0.0
      %1470 = vmatpush1.msra.mxu0 0.0
      %1471 = vmatprep.subr.mxu0 0.0
      %1472 = vmatpush1.msra.mxu0 0.0
      %1473 = vmatprep.subr.mxu0 0.0
      %1474 = vmatpush1.msra.mxu0 0.0
      %1475 = vmatprep.subr.mxu0 0.0
      %1476 = vmatpush1.msra.mxu0 0.0
      %1477 = vmatprep.subr.mxu0 0.0
      %1478 = vmatpush1.msra.mxu0 0.0
      %1479 = vmatprep.subr.mxu0 0.0
      %1480 = vmatpush1.msra.mxu0 0.0
      %1481 = vmatprep.subr.mxu0 0.0
      %1482 = vmatpush1.msra.mxu0 0.0
      %1483 = vmatprep.subr.mxu0 0.0
      %1484 = vmatpush1.msra.mxu0 %v1451
      %1485 = vmatprep.subr.mxu0 0.0
      %1486 = vmatpush1.msra.mxu0 %v1450
      %1487 = vmatprep.subr.mxu0 0.0
      %1488 = vmatpush1.msra.mxu0 %v1449
      %1489 = vmatprep.subr.mxu0 0.0
      %1490 = vmatpush1.msra.mxu0 %v1448
      %1491 = vmatprep.subr.mxu0 0.0
      %1492 = vmatpush2.msra.mxu0 0.0
      %1493 = vmatprep.subr.mxu0 0.0
      %1494 = vmatpush2.msra.mxu0 0.0
      %1495 = vmatprep.subr.mxu0 0.0
      %1496 = vmatpush2.msra.mxu0 0.0
      %1497 = vmatprep.subr.mxu0 0.0
      %1498 = vmatpush2.msra.mxu0 0.0
      %1499 = vmatprep.subr.mxu0 0.0
      %1500 = vmatpush2.msra.mxu0 0.0
      %1501 = vmatprep.subr.mxu0 0.0
      %1502 = vmatpush2.msra.mxu0 0.0
      %1503 = vmatprep.subr.mxu0 0.0
      %1504 = vmatpush2.msra.mxu0 0.0
      %1505 = vmatprep.subr.mxu0 0.0
      %1506 = vmatpush2.msra.mxu0 0.0
      %1507 = vmatprep.subr.mxu0 0.0
      %1508 = vmatpush2.msra.mxu0 0.0
      %1509 = vmatprep.subr.mxu0 0.0
      %1510 = vmatpush2.msra.mxu0 0.0
      %1511 = vmatprep.subr.mxu0 0.0
      %1512 = vmatpush2.msra.mxu0 0.0
      %1513 = vmatprep.subr.mxu0 0.0
      %1514 = vmatpush2.msra.mxu0 0.0
      %1515 = vmatprep.subr.mxu0 0.0
      %1516 = vmatpush2.msra.mxu0 0.0
      %1517 = vmatprep.subr.mxu0 0.0
      %1518 = vmatpush2.msra.mxu0 0.0
      %1519 = vmatprep.subr.mxu0 0.0
      %1520 = vmatpush2.msra.mxu0 0.0
      %1521 = vmatprep.subr.mxu0 0.0
      %1522 = vmatpush2.msra.mxu0 0.0
      %1523 = vmatprep.mubr.f32.mxu0 0.0
      %1524 = vmatmul.mubr.f32.gmra.mxu0 %v1454
      %v1525 = vpop.f32.mrf.mxu0
      %v1526 = vadd.f32 0.0, %v1525
      %v1527 = vpop.f32.mrf.mxu0
      %1528 = vmatprep.mubr.f32.mxu0 0.0
      %1529 = vmatmul.mubr.f32.gmra.mxu0 %v1457
      %v1530 = vpop.f32.mrf.mxu0
      %v1531 = vadd.f32 0.0, %v1530
      %v1532 = vpop.f32.mrf.mxu0
      %1533 = vdwg.mxu0
      %v1534 = vld [vmem:[%s8] sm:$0x1]
      %v1536 = vsel %vm751, %v732, 0
      %v1539 = vsel %vm751, %v733, 0
      %v1542 = vsel %vm751, %v734, 0
      %v1545 = vsel %vm751, %v735, 0
      %v1548 = vsel %vm751, %v736, 0
      %v1551 = vsel %vm751, %v737, 0
      %v1554 = vsel %vm751, %v738, 0
      %v1557 = vsel %vm751, %v739, 0
      %v1560 = vsel %vm751, %v740, 0
      %v1563 = vsel %vm751, %v741, 0
      %v1566 = vsel %vm751, %v742, 0
      %v1569 = vsel %vm751, %v743, 0
      %v1572 = vsel %vm751, %v744, 0
      %v1575 = vsel %vm849, %v1531, 0
      %1577 = vmatprep.subr.mxu0 0.0
      %1578 = vmatpush1.msra.mxu0 0.0
      %1579 = vmatprep.subr.mxu0 0.0
      %1580 = vmatpush1.msra.mxu0 0.0
      %1581 = vmatprep.subr.mxu0 0.0
      %1582 = vmatpush1.msra.mxu0 0.0
      %1583 = vmatprep.subr.mxu0 0.0
      %1584 = vmatpush1.msra.mxu0 0.0
      %1585 = vmatprep.subr.mxu0 0.0
      %1586 = vmatpush1.msra.mxu0 0.0
      %1587 = vmatprep.subr.mxu0 0.0
      %1588 = vmatpush1.msra.mxu0 0.0
      %1589 = vmatprep.subr.mxu0 0.0
      %1590 = vmatpush1.msra.mxu0 0.0
      %1591 = vmatprep.subr.mxu0 0.0
      %1592 = vmatpush1.msra.mxu0 0.0
      %1593 = vmatprep.subr.mxu0 0.0
      %1594 = vmatpush1.msra.mxu0 0.0
      %1595 = vmatprep.subr.mxu0 0.0
      %1596 = vmatpush1.msra.mxu0 0.0
      %1597 = vmatprep.subr.mxu0 0.0
      %1598 = vmatpush1.msra.mxu0 0.0
      %1599 = vmatprep.subr.mxu0 0.0
      %1600 = vmatpush1.msra.mxu0 0.0
      %1601 = vmatprep.subr.mxu0 0.0
      %1602 = vmatpush1.msra.mxu0 0.0
      %1603 = vmatprep.subr.mxu0 0.0
      %1604 = vmatpush1.msra.mxu0 0.0
      %1605 = vmatprep.subr.mxu0 0.0
      %1606 = vmatpush1.msra.mxu0 %v1575
      %1607 = vmatprep.subr.mxu0 0.0
      %1608 = vmatpush1.msra.mxu0 %v1526
      %1609 = vmatprep.subr.mxu0 0.0
      %1610 = vmatpush2.msra.mxu0 0.0
      %1611 = vmatprep.subr.mxu0 0.0
      %1612 = vmatpush2.msra.mxu0 0.0
      %1613 = vmatprep.subr.mxu0 0.0
      %1614 = vmatpush2.msra.mxu0 0.0
      %1615 = vmatprep.subr.mxu0 0.0
      %1616 = vmatpush2.msra.mxu0 0.0
      %1617 = vmatprep.subr.mxu0 0.0
      %1618 = vmatpush2.msra.mxu0 0.0
      %1619 = vmatprep.subr.mxu0 0.0
      %1620 = vmatpush2.msra.mxu0 0.0
      %1621 = vmatprep.subr.mxu0 0.0
      %1622 = vmatpush2.msra.mxu0 0.0
      %1623 = vmatprep.subr.mxu0 0.0
      %1624 = vmatpush2.msra.mxu0 0.0
      %1625 = vmatprep.subr.mxu0 0.0
      %1626 = vmatpush2.msra.mxu0 0.0
      %1627 = vmatprep.subr.mxu0 0.0
      %1628 = vmatpush2.msra.mxu0 0.0
      %1629 = vmatprep.subr.mxu0 0.0
      %1630 = vmatpush2.msra.mxu0 0.0
      %1631 = vmatprep.subr.mxu0 0.0
      %1632 = vmatpush2.msra.mxu0 0.0
      %1633 = vmatprep.subr.mxu0 0.0
      %1634 = vmatpush2.msra.mxu0 0.0
      %1635 = vmatprep.subr.mxu0 0.0
      %1636 = vmatpush2.msra.mxu0 0.0
      %1637 = vmatprep.subr.mxu0 0.0
      %1638 = vmatpush2.msra.mxu0 0.0
      %1639 = vmatprep.subr.mxu0 0.0
      %1640 = vmatpush2.msra.mxu0 0.0
      %1641 = vmatprep.mubr.f32.mxu0 0.0
      %1642 = vmatmul.mubr.f32.gmra.mxu0 %v1536
      %v1643 = vpop.f32.mrf.mxu0
      %v1644 = vadd.f32 0.0, %v1643
      %v1645 = vpop.f32.mrf.mxu0
      %1646 = vmatprep.mubr.f32.mxu0 0.0
      %1647 = vmatmul.mubr.f32.gmra.mxu0 %v1539
      %v1648 = vpop.f32.mrf.mxu0
      %v1649 = vadd.f32 0.0, %v1648
      %v1650 = vpop.f32.mrf.mxu0
      %1651 = vmatprep.mubr.f32.mxu0 0.0
      %1652 = vmatmul.mubr.f32.gmra.mxu0 %v1542
      %v1653 = vpop.f32.mrf.mxu0
      %v1654 = vadd.f32 0.0, %v1653
      %v1655 = vpop.f32.mrf.mxu0
      %1656 = vmatprep.mubr.f32.mxu0 0.0
      %1657 = vmatmul.mubr.f32.gmra.mxu0 %v1545
      %v1658 = vpop.f32.mrf.mxu0
      %v1659 = vadd.f32 0.0, %v1658
      %v1660 = vpop.f32.mrf.mxu0
      %1661 = vmatprep.mubr.f32.mxu0 0.0
      %1662 = vmatmul.mubr.f32.gmra.mxu0 %v1548
      %v1663 = vpop.f32.mrf.mxu0
      %v1664 = vadd.f32 0.0, %v1663
      %v1665 = vpop.f32.mrf.mxu0
      %1666 = vmatprep.mubr.f32.mxu0 0.0
      %1667 = vmatmul.mubr.f32.gmra.mxu0 %v1551
      %v1668 = vpop.f32.mrf.mxu0
      %v1669 = vadd.f32 0.0, %v1668
      %v1670 = vpop.f32.mrf.mxu0
      %1671 = vmatprep.mubr.f32.mxu0 0.0
      %1672 = vmatmul.mubr.f32.gmra.mxu0 %v1554
      %v1673 = vpop.f32.mrf.mxu0
      %v1674 = vadd.f32 0.0, %v1673
      %v1675 = vpop.f32.mrf.mxu0
      %1676 = vmatprep.mubr.f32.mxu0 0.0
      %1677 = vmatmul.mubr.f32.gmra.mxu0 %v1557
      %v1678 = vpop.f32.mrf.mxu0
      %v1679 = vadd.f32 0.0, %v1678
      %v1680 = vpop.f32.mrf.mxu0
      %1681 = vmatprep.mubr.f32.mxu0 0.0
      %1682 = vmatmul.mubr.f32.gmra.mxu0 %v1560
      %v1683 = vpop.f32.mrf.mxu0
      %v1684 = vadd.f32 0.0, %v1683
      %v1685 = vpop.f32.mrf.mxu0
      %1686 = vmatprep.mubr.f32.mxu0 0.0
      %1687 = vmatmul.mubr.f32.gmra.mxu0 %v1563
      %v1688 = vpop.f32.mrf.mxu0
      %v1689 = vadd.f32 0.0, %v1688
      %v1690 = vpop.f32.mrf.mxu0
      %1691 = vmatprep.mubr.f32.mxu0 0.0
      %1692 = vmatmul.mubr.f32.gmra.mxu0 %v1566
      %v1693 = vpop.f32.mrf.mxu0
      %v1694 = vadd.f32 0.0, %v1693
      %v1695 = vpop.f32.mrf.mxu0
      %1696 = vmatprep.mubr.f32.mxu0 0.0
      %1697 = vmatmul.mubr.f32.gmra.mxu0 %v1569
      %v1698 = vpop.f32.mrf.mxu0
      %v1699 = vadd.f32 0.0, %v1698
      %v1700 = vpop.f32.mrf.mxu0
      %1701 = vmatprep.mubr.f32.mxu0 0.0
      %1702 = vmatmul.mubr.f32.gmra.mxu0 %v1572
      %v1703 = vpop.f32.mrf.mxu0
      %v1704 = vadd.f32 0.0, %v1703
      %v1705 = vpop.f32.mrf.mxu0
      %1706 = vdwg.mxu0
      %v1707 = vtanh.pop %v1644
      %v1708 = vtanh.pop %v1649
      %v1709 = vtanh.pop %v1654
      %v1710 = vtanh.pop %v1659
      %v1711 = vtanh.pop %v1664
      %v1712 = vtanh.pop %v1669
      %v1713 = vtanh.pop %v1674
      %v1714 = vtanh.pop %v1679
      %v1715 = vtanh.pop %v1684
      %v1716 = vtanh.pop %v1689
      %v1717 = vtanh.pop %v1694
      %v1718 = vtanh.pop %v1699
      %v1719 = vtanh.pop %v1704
      %v1721 = vlaneseq
      %v1722 = vshrl.u32 %v1721, 7
      %v1723 = vsub.s32 0, %v1722
      %v1724 = vrot.slane %v1534, %v1723
      %v1726 = vmul.f32 %v1707, %v1724
      %v1727 = vmul.f32 %v1708, %v1724
      %v1728 = vmul.f32 %v1709, %v1724
      %v1729 = vmul.f32 %v1710, %v1724
      %v1730 = vmul.f32 %v1711, %v1724
      %v1731 = vmul.f32 %v1712, %v1724
      %v1732 = vmul.f32 %v1713, %v1724
      %v1733 = vmul.f32 %v1714, %v1724
      %v1734 = vmul.f32 %v1715, %v1724
      %v1735 = vmul.f32 %v1716, %v1724
      %v1736 = vmul.f32 %v1717, %v1724
      %v1737 = vmul.f32 %v1718, %v1724
      %v1738 = vmul.f32 %v1719, %v1724
      %v1739 = vsel %vm1452, %v1726, 0.0
      %1740 = vadd.xlane.f32.xlu0 %v1739
      %v1741 = vpop.xlane.xlu0 %1740
      %v1742 = vsel %vm1452, %v1727, 0.0
      %1743 = vadd.xlane.f32.xlu0 %v1742
      %v1744 = vpop.xlane.xlu0 %1743
      %v1745 = vsel %vm1452, %v1728, 0.0
      %1746 = vadd.xlane.f32.xlu0 %v1745
      %v1747 = vpop.xlane.xlu0 %1746
      %v1748 = vsel %vm1452, %v1729, 0.0
      %1749 = vadd.xlane.f32.xlu0 %v1748
      %v1750 = vpop.xlane.xlu0 %1749
      %v1751 = vsel %vm1452, %v1730, 0.0
      %1752 = vadd.xlane.f32.xlu0 %v1751
      %v1753 = vpop.xlane.xlu0 %1752
      %v1754 = vsel %vm1452, %v1731, 0.0
      %1755 = vadd.xlane.f32.xlu0 %v1754
      %v1756 = vpop.xlane.xlu0 %1755
      %v1757 = vsel %vm1452, %v1732, 0.0
      %1758 = vadd.xlane.f32.xlu0 %v1757
      %v1759 = vpop.xlane.xlu0 %1758
      %v1760 = vsel %vm1452, %v1733, 0.0
      %1761 = vadd.xlane.f32.xlu0 %v1760
      %v1762 = vpop.xlane.xlu0 %1761
      %v1763 = vsel %vm1452, %v1734, 0.0
      %1764 = vadd.xlane.f32.xlu0 %v1763
      %v1765 = vpop.xlane.xlu0 %1764
      %v1766 = vsel %vm1452, %v1735, 0.0
      %1767 = vadd.xlane.f32.xlu0 %v1766
      %v1768 = vpop.xlane.xlu0 %1767
      %v1769 = vsel %vm1452, %v1736, 0.0
      %1770 = vadd.xlane.f32.xlu0 %v1769
      %v1771 = vpop.xlane.xlu0 %1770
      %v1772 = vsel %vm1452, %v1737, 0.0
      %1773 = vadd.xlane.f32.xlu0 %v1772
      %v1774 = vpop.xlane.xlu0 %1773
      %vm1775 = vcmask 257024
      %v1776 = vsel %vm1775, %v1738, 0.0
      %1777 = vadd.xlane.f32.xlu0 %v1776
      %v1778 = vpop.xlane.xlu0 %1777
      %v1779 = vmul.f32 %v1741, %v1331
      %v1780 = vmul.f32 %v1744, %v1332
      %v1781 = vmul.f32 %v1747, %v1333
      %v1782 = vmul.f32 %v1750, %v1334
      %v1783 = vmul.f32 %v1753, %v1335
      %v1784 = vmul.f32 %v1756, %v1336
      %v1785 = vmul.f32 %v1759, %v1337
      %v1786 = vmul.f32 %v1762, %v1338
      %v1787 = vmul.f32 %v1765, %v1339
      %v1788 = vmul.f32 %v1768, %v1340
      %v1789 = vmul.f32 %v1771, %v1341
      %v1790 = vmul.f32 %v1774, %v1342
      %v1791 = vmul.f32 %v1778, %v1343
      %1793 = vset.pattern.permute.xlu0 0
      %1794 = vperm.xlu0 %1793, %v1779
      %v1795 = vpop.permute.xlu0 %1794
      %1798 = vset.pattern.permute.xlu0 0
      %1799 = vperm.xlu0 %1798, %v1780
      %v1800 = vpop.permute.xlu0 %1799
      %1803 = vset.pattern.permute.xlu0 0
      %1804 = vperm.xlu0 %1803, %v1781
      %v1805 = vpop.permute.xlu0 %1804
      %1808 = vset.pattern.permute.xlu0 0
      %1809 = vperm.xlu0 %1808, %v1782
      %v1810 = vpop.permute.xlu0 %1809
      %1813 = vset.pattern.permute.xlu0 0
      %1814 = vperm.xlu0 %1813, %v1783
      %v1815 = vpop.permute.xlu0 %1814
      %1818 = vset.pattern.permute.xlu0 0
      %1819 = vperm.xlu0 %1818, %v1784
      %v1820 = vpop.permute.xlu0 %1819
      %1823 = vset.pattern.permute.xlu0 0
      %1824 = vperm.xlu0 %1823, %v1785
      %v1825 = vpop.permute.xlu0 %1824
      %1828 = vset.pattern.permute.xlu0 0
      %1829 = vperm.xlu0 %1828, %v1786
      %v1830 = vpop.permute.xlu0 %1829
      %1833 = vset.pattern.permute.xlu0 0
      %1834 = vperm.xlu0 %1833, %v1787
      %v1835 = vpop.permute.xlu0 %1834
      %1838 = vset.pattern.permute.xlu0 0
      %1839 = vperm.xlu0 %1838, %v1788
      %v1840 = vpop.permute.xlu0 %1839
      %1843 = vset.pattern.permute.xlu0 0
      %1844 = vperm.xlu0 %1843, %v1789
      %v1845 = vpop.permute.xlu0 %1844
      %1848 = vset.pattern.permute.xlu0 0
      %1849 = vperm.xlu0 %1848, %v1790
      %v1850 = vpop.permute.xlu0 %1849
      %1853 = vset.pattern.permute.xlu0 0
      %1854 = vperm.xlu0 %1853, %v1791
      %v1855 = vpop.permute.xlu0 %1854
      %v1857 = vmul.f32 %v1795, %v717
      %v1858 = vmul.f32 %v1800, %v718
      %v1859 = vmul.f32 %v1805, %v719
      %v1860 = vmul.f32 %v1810, %v720
      %v1861 = vmul.f32 %v1815, %v721
      %v1862 = vmul.f32 %v1820, %v722
      %v1863 = vmul.f32 %v1825, %v723
      %v1864 = vmul.f32 %v1830, %v724
      %v1865 = vmul.f32 %v1835, %v725
      %v1866 = vmul.f32 %v1840, %v726
      %v1867 = vmul.f32 %v1845, %v727
      %v1868 = vmul.f32 %v1850, %v728
      %v1869 = vmul.f32 %v1855, %v729
      %v1871 = vsel %vm1061, %v730, 0
      %v1874 = vsel %vm1061, %v731, 0
      %v1877 = vsel %vm1137, %v1869, 0
      %1879 = vmatprep.subr.mxu0 0.0
      %1880 = vmatpush1.msra.mxu0 0.0
      %1881 = vmatprep.subr.mxu0 0.0
      %1882 = vmatpush1.msra.mxu0 0.0
      %1883 = vmatprep.subr.mxu0 0.0
      %1884 = vmatpush1.msra.mxu0 0.0
      %1885 = vmatprep.subr.mxu0 0.0
      %1886 = vmatpush1.msra.mxu0 %v1877
      %1887 = vmatprep.subr.mxu0 0.0
      %1888 = vmatpush1.msra.mxu0 %v1868
      %1889 = vmatprep.subr.mxu0 0.0
      %1890 = vmatpush1.msra.mxu0 %v1867
      %1891 = vmatprep.subr.mxu0 0.0
      %1892 = vmatpush1.msra.mxu0 %v1866
      %1893 = vmatprep.subr.mxu0 0.0
      %1894 = vmatpush1.msra.mxu0 %v1865
      %1895 = vmatprep.subr.mxu0 0.0
      %1896 = vmatpush1.msra.mxu0 %v1864
      %1897 = vmatprep.subr.mxu0 0.0
      %1898 = vmatpush1.msra.mxu0 %v1863
      %1899 = vmatprep.subr.mxu0 0.0
      %1900 = vmatpush1.msra.mxu0 %v1862
      %1901 = vmatprep.subr.mxu0 0.0
      %1902 = vmatpush1.msra.mxu0 %v1861
      %1903 = vmatprep.subr.mxu0 0.0
      %1904 = vmatpush1.msra.mxu0 %v1860
      %1905 = vmatprep.subr.mxu0 0.0
      %1906 = vmatpush1.msra.mxu0 %v1859
      %1907 = vmatprep.subr.mxu0 0.0
      %1908 = vmatpush1.msra.mxu0 %v1858
      %1909 = vmatprep.subr.mxu0 0.0
      %1910 = vmatpush1.msra.mxu0 %v1857
      %1911 = vmatprep.subr.mxu0 0.0
      %1912 = vmatpush2.msra.mxu0 0.0
      %1913 = vmatprep.subr.mxu0 0.0
      %1914 = vmatpush2.msra.mxu0 0.0
      %1915 = vmatprep.subr.mxu0 0.0
      %1916 = vmatpush2.msra.mxu0 0.0
      %1917 = vmatprep.subr.mxu0 0.0
      %1918 = vmatpush2.msra.mxu0 0.0
      %1919 = vmatprep.subr.mxu0 0.0
      %1920 = vmatpush2.msra.mxu0 0.0
      %1921 = vmatprep.subr.mxu0 0.0
      %1922 = vmatpush2.msra.mxu0 0.0
      %1923 = vmatprep.subr.mxu0 0.0
      %1924 = vmatpush2.msra.mxu0 0.0
      %1925 = vmatprep.subr.mxu0 0.0
      %1926 = vmatpush2.msra.mxu0 0.0
      %1927 = vmatprep.subr.mxu0 0.0
      %1928 = vmatpush2.msra.mxu0 0.0
      %1929 = vmatprep.subr.mxu0 0.0
      %1930 = vmatpush2.msra.mxu0 0.0
      %1931 = vmatprep.subr.mxu0 0.0
      %1932 = vmatpush2.msra.mxu0 0.0
      %1933 = vmatprep.subr.mxu0 0.0
      %1934 = vmatpush2.msra.mxu0 0.0
      %1935 = vmatprep.subr.mxu0 0.0
      %1936 = vmatpush2.msra.mxu0 0.0
      %1937 = vmatprep.subr.mxu0 0.0
      %1938 = vmatpush2.msra.mxu0 0.0
      %1939 = vmatprep.subr.mxu0 0.0
      %1940 = vmatpush2.msra.mxu0 0.0
      %1941 = vmatprep.subr.mxu0 0.0
      %1942 = vmatpush2.msra.mxu0 0.0
      %1943 = vmatprep.mubr.f32.mxu0 0.0
      %1944 = vmatmul.mubr.f32.gmra.mxu0 %v1871
      %v1945 = vpop.f32.mrf.mxu0
      %v1946 = vadd.f32 0.0, %v1945
      %v1947 = vpop.f32.mrf.mxu0
      %1948 = vmatprep.mubr.f32.mxu0 0.0
      %1949 = vmatmul.mubr.f32.gmra.mxu0 %v1874
      %v1950 = vpop.f32.mrf.mxu0
      %v1951 = vadd.f32 0.0, %v1950
      %v1952 = vpop.f32.mrf.mxu0
      %1953 = vdwg.mxu0
      %v1954 = vmul.f32 %v1946, %v800
      %v1955 = vmul.f32 %v1951, %v801
      %vm1956 = vcmp.eq.f32.partialorder %v1954, 0.0
      %vm1957 = vcmp.eq.f32.partialorder %v1955, 0.0
      %v1958 = vsel %vm1956, -10000.0, %v1954
      %v1959 = vsel %vm1957, -10000.0, %v1955
      %v1960 = vsel %vm751, %v1958, -inf
      %1961 = vmax.xlane.f32.xlu0 %v1960
      %v1962 = vpop.xlane.xlu0 %1961
      %v1963 = vsel %vm755, %v1959, -inf
      %1964 = vmax.xlane.f32.xlu0 %v1963
      %v1965 = vpop.xlane.xlu0 %1964
      %v1966 = vsub.f32 %v1958, %v1962
      %v1967 = vsub.f32 %v1959, %v1965
      %v1968 = vmul.f32 %v1966, 1.442695
      %v1969 = vpow.pop %v1968
      %v1970 = vmul.f32 %v1967, 1.442695
      %v1971 = vpow.pop %v1970
      %v1972 = vsel %vm751, %v1969, 0.0
      %1973 = vadd.xlane.f32.xlu0 %v1972
      %v1974 = vpop.xlane.xlu0 %1973
      %v1975 = vsel %vm755, %v1971, 0.0
      %1976 = vadd.xlane.f32.xlu0 %v1975
      %v1977 = vpop.xlane.xlu0 %1976
      %v1978 = vrcp.pop %v1974
      %v1979 = vmul.f32 %v1969, %v1978
      %v1980 = vrcp.pop %v1977
      %v1981 = vmul.f32 %v1971, %v1980
      %v1983 = vsel %vm751, %v1979, 0
      %v1986 = vsel %vm751, %v1981, 0
      %1988 = vmatprep.subr.mxu0 0.0
      %1989 = vmatpush1.msra.mxu0 0.0
      %1990 = vmatprep.subr.mxu0 0.0
      %1991 = vmatpush1.msra.mxu0 0.0
      %1992 = vmatprep.subr.mxu0 0.0
      %1993 = vmatpush1.msra.mxu0 0.0
      %1994 = vmatprep.subr.mxu0 0.0
      %1995 = vmatpush1.msra.mxu0 0.0
      %1996 = vmatprep.subr.mxu0 0.0
      %1997 = vmatpush1.msra.mxu0 0.0
      %1998 = vmatprep.subr.mxu0 0.0
      %1999 = vmatpush1.msra.mxu0 0.0
      %2000 = vmatprep.subr.mxu0 0.0
      %2001 = vmatpush1.msra.mxu0 0.0
      %2002 = vmatprep.subr.mxu0 0.0
      %2003 = vmatpush1.msra.mxu0 0.0
      %2004 = vmatprep.subr.mxu0 0.0
      %2005 = vmatpush1.msra.mxu0 0.0
      %2006 = vmatprep.subr.mxu0 0.0
      %2007 = vmatpush1.msra.mxu0 0.0
      %2008 = vmatprep.subr.mxu0 0.0
      %2009 = vmatpush1.msra.mxu0 0.0
      %2010 = vmatprep.subr.mxu0 0.0
      %2011 = vmatpush1.msra.mxu0 0.0
      %2012 = vmatprep.subr.mxu0 0.0
      %2013 = vmatpush1.msra.mxu0 0.0
      %2014 = vmatprep.subr.mxu0 0.0
      %2015 = vmatpush1.msra.mxu0 0.0
      %2016 = vmatprep.subr.mxu0 0.0
      %2017 = vmatpush1.msra.mxu0 %v1575
      %2018 = vmatprep.subr.mxu0 0.0
      %2019 = vmatpush1.msra.mxu0 %v1526
      %2020 = vmatprep.subr.mxu0 0.0
      %2021 = vmatpush2.msra.mxu0 0.0
      %2022 = vmatprep.subr.mxu0 0.0
      %2023 = vmatpush2.msra.mxu0 0.0
      %2024 = vmatprep.subr.mxu0 0.0
      %2025 = vmatpush2.msra.mxu0 0.0
      %2026 = vmatprep.subr.mxu0 0.0
      %2027 = vmatpush2.msra.mxu0 0.0
      %2028 = vmatprep.subr.mxu0 0.0
      %2029 = vmatpush2.msra.mxu0 0.0
      %2030 = vmatprep.subr.mxu0 0.0
      %2031 = vmatpush2.msra.mxu0 0.0
      %2032 = vmatprep.subr.mxu0 0.0
      %2033 = vmatpush2.msra.mxu0 0.0
      %2034 = vmatprep.subr.mxu0 0.0
      %2035 = vmatpush2.msra.mxu0 0.0
      %2036 = vmatprep.subr.mxu0 0.0
      %2037 = vmatpush2.msra.mxu0 0.0
      %2038 = vmatprep.subr.mxu0 0.0
      %2039 = vmatpush2.msra.mxu0 0.0
      %2040 = vmatprep.subr.mxu0 0.0
      %2041 = vmatpush2.msra.mxu0 0.0
      %2042 = vmatprep.subr.mxu0 0.0
      %2043 = vmatpush2.msra.mxu0 0.0
      %2044 = vmatprep.subr.mxu0 0.0
      %2045 = vmatpush2.msra.mxu0 0.0
      %2046 = vmatprep.subr.mxu0 0.0
      %2047 = vmatpush2.msra.mxu0 0.0
      %2048 = vmatprep.subr.mxu0 0.0
      %2049 = vmatpush2.msra.mxu0 0.0
      %2050 = vmatprep.subr.mxu0 0.0
      %2051 = vmatpush2.msra.mxu0 0.0
      %2052 = vmatprep.mubr.f32.mxu0 0.0
      %2053 = vmatmul.mubr.f32.gmra.mxu0 %v1983
      %v2054 = vpop.f32.mrf.mxu0
      %v2055 = vadd.f32 0.0, %v2054
      %v2056 = vpop.f32.mrf.mxu0
      %2057 = vmatprep.mubr.f32.mxu0 0.0
      %2058 = vmatmul.mubr.f32.gmra.mxu0 %v1986
      %v2059 = vpop.f32.mrf.mxu0
      %v2060 = vadd.f32 0.0, %v2059
      %v2061 = vpop.f32.mrf.mxu0
      %2062 = vdwg.mxu0
      %v2063 = vtanh.pop %v2055
      %v2064 = vtanh.pop %v2060
      %v2065 = vld [vmem:[%s10] sm:$0xff]
      %v2066 = vld [vmem:[%s10 + $0x8] sm:$0xff]
      %v2067 = vld [vmem:[%s10 + $0x10] sm:$0xff]
      %v2068 = vld [vmem:[%s10 + $0x18] sm:$0xff]
      %v2069 = vld [vmem:[%s11] sm:$0xff]
      %v2070 = vld [vmem:[%s11 + $0x8] sm:$0xff]
      %v2071 = vld [vmem:[%s11 + $0x10] sm:$0xff]
      %v2072 = vld [vmem:[%s11 + $0x18] sm:$0xff]
      %2073 = vmatprep.subr.mxu0 0.0
      %2074 = vmatpush1.msra.mxu0 0.0
      %2075 = vmatprep.subr.mxu0 0.0
      %2076 = vmatpush1.msra.mxu0 0.0
      %2077 = vmatprep.subr.mxu0 0.0
      %2078 = vmatpush1.msra.mxu0 0.0
      %2079 = vmatprep.subr.mxu0 0.0
      %2080 = vmatpush1.msra.mxu0 0.0
      %2081 = vmatprep.subr.mxu0 0.0
      %2082 = vmatpush1.msra.mxu0 0.0
      %2083 = vmatprep.subr.mxu0 0.0
      %2084 = vmatpush1.msra.mxu0 0.0
      %2085 = vmatprep.subr.mxu0 0.0
      %2086 = vmatpush1.msra.mxu0 0.0
      %2087 = vmatprep.subr.mxu0 0.0
      %2088 = vmatpush1.msra.mxu0 0.0
      %2089 = vmatprep.subr.mxu0 0.0
      %2090 = vmatpush1.msra.mxu0 0.0
      %2091 = vmatprep.subr.mxu0 0.0
      %2092 = vmatpush1.msra.mxu0 0.0
      %2093 = vmatprep.subr.mxu0 0.0
      %2094 = vmatpush1.msra.mxu0 0.0
      %2095 = vmatprep.subr.mxu0 0.0
      %2096 = vmatpush1.msra.mxu0 0.0
      %2097 = vmatprep.subr.mxu0 0.0
      %2098 = vmatpush1.msra.mxu0 %v2072
      %2099 = vmatprep.subr.mxu0 0.0
      %2100 = vmatpush1.msra.mxu0 %v2071
      %2101 = vmatprep.subr.mxu0 0.0
      %2102 = vmatpush1.msra.mxu0 %v2070
      %2103 = vmatprep.subr.mxu0 0.0
      %2104 = vmatpush1.msra.mxu0 %v2069
      %2105 = vmatprep.subr.mxu0 0.0
      %2106 = vmatpush2.msra.mxu0 0.0
      %2107 = vmatprep.subr.mxu0 0.0
      %2108 = vmatpush2.msra.mxu0 0.0
      %2109 = vmatprep.subr.mxu0 0.0
      %2110 = vmatpush2.msra.mxu0 0.0
      %2111 = vmatprep.subr.mxu0 0.0
      %2112 = vmatpush2.msra.mxu0 0.0
      %2113 = vmatprep.subr.mxu0 0.0
      %2114 = vmatpush2.msra.mxu0 0.0
      %2115 = vmatprep.subr.mxu0 0.0
      %2116 = vmatpush2.msra.mxu0 0.0
      %2117 = vmatprep.subr.mxu0 0.0
      %2118 = vmatpush2.msra.mxu0 0.0
      %2119 = vmatprep.subr.mxu0 0.0
      %2120 = vmatpush2.msra.mxu0 0.0
      %2121 = vmatprep.subr.mxu0 0.0
      %2122 = vmatpush2.msra.mxu0 0.0
      %2123 = vmatprep.subr.mxu0 0.0
      %2124 = vmatpush2.msra.mxu0 0.0
      %2125 = vmatprep.subr.mxu0 0.0
      %2126 = vmatpush2.msra.mxu0 0.0
      %2127 = vmatprep.subr.mxu0 0.0
      %2128 = vmatpush2.msra.mxu0 0.0
      %2129 = vmatprep.subr.mxu0 0.0
      %2130 = vmatpush2.msra.mxu0 0.0
      %2131 = vmatprep.subr.mxu0 0.0
      %2132 = vmatpush2.msra.mxu0 0.0
      %2133 = vmatprep.subr.mxu0 0.0
      %2134 = vmatpush2.msra.mxu0 0.0
      %2135 = vmatprep.subr.mxu0 0.0
      %2136 = vmatpush2.msra.mxu0 0.0
      %2137 = vmatprep.mubr.f32.mxu0 0.0
      %2138 = vmatmul.mubr.f32.gmra.mxu0 %v1454
      %v2139 = vpop.f32.mrf.mxu0
      %v2140 = vadd.f32 0.0, %v2139
      %v2141 = vpop.f32.mrf.mxu0
      %2142 = vmatprep.mubr.f32.mxu0 0.0
      %2143 = vmatmul.mubr.f32.gmra.mxu0 %v1457
      %v2144 = vpop.f32.mrf.mxu0
      %v2145 = vadd.f32 0.0, %v2144
      %v2146 = vpop.f32.mrf.mxu0
      %2147 = vdwg.mxu0
      %v2149 = vsel %vm1452, %v2063, 0
      %v2152 = vsel %vm1452, %v2064, 0
      %2154 = vmatprep.subr.mxu0 0.0
      %2155 = vmatpush1.msra.mxu0 0.0
      %2156 = vmatprep.subr.mxu0 0.0
      %2157 = vmatpush1.msra.mxu0 0.0
      %2158 = vmatprep.subr.mxu0 0.0
      %2159 = vmatpush1.msra.mxu0 0.0
      %2160 = vmatprep.subr.mxu0 0.0
      %2161 = vmatpush1.msra.mxu0 0.0
      %2162 = vmatprep.subr.mxu0 0.0
      %2163 = vmatpush1.msra.mxu0 0.0
      %2164 = vmatprep.subr.mxu0 0.0
      %2165 = vmatpush1.msra.mxu0 0.0
      %2166 = vmatprep.subr.mxu0 0.0
      %2167 = vmatpush1.msra.mxu0 0.0
      %2168 = vmatprep.subr.mxu0 0.0
      %2169 = vmatpush1.msra.mxu0 0.0
      %2170 = vmatprep.subr.mxu0 0.0
      %2171 = vmatpush1.msra.mxu0 0.0
      %2172 = vmatprep.subr.mxu0 0.0
      %2173 = vmatpush1.msra.mxu0 0.0
      %2174 = vmatprep.subr.mxu0 0.0
      %2175 = vmatpush1.msra.mxu0 0.0
      %2176 = vmatprep.subr.mxu0 0.0
      %2177 = vmatpush1.msra.mxu0 0.0
      %2178 = vmatprep.subr.mxu0 0.0
      %2179 = vmatpush1.msra.mxu0 %v2068
      %2180 = vmatprep.subr.mxu0 0.0
      %2181 = vmatpush1.msra.mxu0 %v2067
      %2182 = vmatprep.subr.mxu0 0.0
      %2183 = vmatpush1.msra.mxu0 %v2066
      %2184 = vmatprep.subr.mxu0 0.0
      %2185 = vmatpush1.msra.mxu0 %v2065
      %2186 = vmatprep.subr.mxu0 0.0
      %2187 = vmatpush2.msra.mxu0 0.0
      %2188 = vmatprep.subr.mxu0 0.0
      %2189 = vmatpush2.msra.mxu0 0.0
      %2190 = vmatprep.subr.mxu0 0.0
      %2191 = vmatpush2.msra.mxu0 0.0
      %2192 = vmatprep.subr.mxu0 0.0
      %2193 = vmatpush2.msra.mxu0 0.0
      %2194 = vmatprep.subr.mxu0 0.0
      %2195 = vmatpush2.msra.mxu0 0.0
      %2196 = vmatprep.subr.mxu0 0.0
      %2197 = vmatpush2.msra.mxu0 0.0
      %2198 = vmatprep.subr.mxu0 0.0
      %2199 = vmatpush2.msra.mxu0 0.0
      %2200 = vmatprep.subr.mxu0 0.0
      %2201 = vmatpush2.msra.mxu0 0.0
      %2202 = vmatprep.subr.mxu0 0.0
      %2203 = vmatpush2.msra.mxu0 0.0
      %2204 = vmatprep.subr.mxu0 0.0
      %2205 = vmatpush2.msra.mxu0 0.0
      %2206 = vmatprep.subr.mxu0 0.0
      %2207 = vmatpush2.msra.mxu0 0.0
      %2208 = vmatprep.subr.mxu0 0.0
      %2209 = vmatpush2.msra.mxu0 0.0
      %2210 = vmatprep.subr.mxu0 0.0
      %2211 = vmatpush2.msra.mxu0 0.0
      %2212 = vmatprep.subr.mxu0 0.0
      %2213 = vmatpush2.msra.mxu0 0.0
      %2214 = vmatprep.subr.mxu0 0.0
      %2215 = vmatpush2.msra.mxu0 0.0
      %2216 = vmatprep.subr.mxu0 0.0
      %2217 = vmatpush2.msra.mxu0 0.0
      %2218 = vmatprep.mubr.f32.mxu0 0.0
      %2219 = vmatmul.mubr.f32.gmra.mxu0 %v2149
      %v2220 = vpop.f32.mrf.mxu0
      %v2221 = vadd.f32 %v2140, %v2220
      %v2222 = vpop.f32.mrf.mxu0
      %2223 = vmatprep.mubr.f32.mxu0 0.0
      %2224 = vmatmul.mubr.f32.gmra.mxu0 %v2152
      %v2225 = vpop.f32.mrf.mxu0
      %v2226 = vadd.f32 %v2145, %v2225
      %v2227 = vpop.f32.mrf.mxu0
      %2228 = vdwg.mxu0
      %v2229 = vld [vmem:[%s12] sm:$0x1]
      %v2231 = vlaneseq
      %v2232 = vshrl.u32 %v2231, 7
      %v2233 = vsub.s32 0, %v2232
      %v2234 = vrot.slane %v2229, %v2233
      %v2236 = vadd.f32 %v2221, %v2234
      %v2237 = vadd.f32 %v2226, %v2234
      %v2238 = vtanh.pop %v2236
      %v2239 = vtanh.pop %v2237
      %v2240 = vld [vmem:[%s13] sm:$0xff]
      %v2241 = vld [vmem:[%s13 + $0x8] sm:$0xff]
      %v2242 = vld [vmem:[%s13 + $0x10] sm:$0xff]
      %v2243 = vld [vmem:[%s13 + $0x18] sm:$0xff]
      %v2244 = vld [vmem:[%s13 + $0x20] sm:$0xff]
      %v2245 = vld [vmem:[%s13 + $0x28] sm:$0xff]
      %v2246 = vld [vmem:[%s13 + $0x30] sm:$0xff]
      %v2247 = vld [vmem:[%s13 + $0x38] sm:$0xff]
      %vm2248 = vcmask 523264
      %v2250 = vsel %vm2248, %v2238, 0
      %v2253 = vsel %vm2248, %v2239, 0
      %2255 = vmatprep.subr.mxu0 0.0
      %2256 = vmatpush1.msra.mxu0 0.0
      %2257 = vmatprep.subr.mxu0 0.0
      %2258 = vmatpush1.msra.mxu0 0.0
      %2259 = vmatprep.subr.mxu0 0.0
      %2260 = vmatpush1.msra.mxu0 0.0
      %2261 = vmatprep.subr.mxu0 0.0
      %2262 = vmatpush1.msra.mxu0 0.0
      %2263 = vmatprep.subr.mxu0 0.0
      %2264 = vmatpush1.msra.mxu0 0.0
      %2265 = vmatprep.subr.mxu0 0.0
      %2266 = vmatpush1.msra.mxu0 0.0
      %2267 = vmatprep.subr.mxu0 0.0
      %2268 = vmatpush1.msra.mxu0 0.0
      %2269 = vmatprep.subr.mxu0 0.0
      %2270 = vmatpush1.msra.mxu0 0.0
      %2271 = vmatprep.subr.mxu0 0.0
      %2272 = vmatpush1.msra.mxu0 %v2247
      %2273 = vmatprep.subr.mxu0 0.0
      %2274 = vmatpush1.msra.mxu0 %v2246
      %2275 = vmatprep.subr.mxu0 0.0
      %2276 = vmatpush1.msra.mxu0 %v2245
      %2277 = vmatprep.subr.mxu0 0.0
      %2278 = vmatpush1.msra.mxu0 %v2244
      %2279 = vmatprep.subr.mxu0 0.0
      %2280 = vmatpush1.msra.mxu0 %v2243
      %2281 = vmatprep.subr.mxu0 0.0
      %2282 = vmatpush1.msra.mxu0 %v2242
      %2283 = vmatprep.subr.mxu0 0.0
      %2284 = vmatpush1.msra.mxu0 %v2241
      %2285 = vmatprep.subr.mxu0 0.0
      %2286 = vmatpush1.msra.mxu0 %v2240
      %2287 = vmatprep.subr.mxu0 0.0
      %2288 = vmatpush2.msra.mxu0 0.0
      %2289 = vmatprep.subr.mxu0 0.0
      %2290 = vmatpush2.msra.mxu0 0.0
      %2291 = vmatprep.subr.mxu0 0.0
      %2292 = vmatpush2.msra.mxu0 0.0
      %2293 = vmatprep.subr.mxu0 0.0
      %2294 = vmatpush2.msra.mxu0 0.0
      %2295 = vmatprep.subr.mxu0 0.0
      %2296 = vmatpush2.msra.mxu0 0.0
      %2297 = vmatprep.subr.mxu0 0.0
      %2298 = vmatpush2.msra.mxu0 0.0
      %2299 = vmatprep.subr.mxu0 0.0
      %2300 = vmatpush2.msra.mxu0 0.0
      %2301 = vmatprep.subr.mxu0 0.0
      %2302 = vmatpush2.msra.mxu0 0.0
      %2303 = vmatprep.subr.mxu0 0.0
      %2304 = vmatpush2.msra.mxu0 0.0
      %2305 = vmatprep.subr.mxu0 0.0
      %2306 = vmatpush2.msra.mxu0 0.0
      %2307 = vmatprep.subr.mxu0 0.0
      %2308 = vmatpush2.msra.mxu0 0.0
      %2309 = vmatprep.subr.mxu0 0.0
      %2310 = vmatpush2.msra.mxu0 0.0
      %2311 = vmatprep.subr.mxu0 0.0
      %2312 = vmatpush2.msra.mxu0 0.0
      %2313 = vmatprep.subr.mxu0 0.0
      %2314 = vmatpush2.msra.mxu0 0.0
      %2315 = vmatprep.subr.mxu0 0.0
      %2316 = vmatpush2.msra.mxu0 0.0
      %2317 = vmatprep.subr.mxu0 0.0
      %2318 = vmatpush2.msra.mxu0 0.0
      %2319 = vmatprep.mubr.f32.mxu0 0.0
      %2320 = vmatmul.mubr.f32.gmra.mxu0 %v2250
      %v2321 = vpop.f32.mrf.mxu0
      %v2322 = vadd.f32 0.0, %v2321
      %v2323 = vpop.f32.mrf.mxu0
      %2324 = vmatprep.mubr.f32.mxu0 0.0
      %2325 = vmatmul.mubr.f32.gmra.mxu0 %v2253
      %v2326 = vpop.f32.mrf.mxu0
      %v2327 = vadd.f32 0.0, %v2326
      %v2328 = vpop.f32.mrf.mxu0
      %2329 = vdwg.mxu0
      %v2330 = vld [vmem:[%s14] sm:$0x1]
      %v2332 = vsel %vm849, %v2327, 0
      %2334 = vmatprep.subr.mxu0 0.0
      %2335 = vmatpush1.msra.mxu0 0.0
      %2336 = vmatprep.subr.mxu0 0.0
      %2337 = vmatpush1.msra.mxu0 0.0
      %2338 = vmatprep.subr.mxu0 0.0
      %2339 = vmatpush1.msra.mxu0 0.0
      %2340 = vmatprep.subr.mxu0 0.0
      %2341 = vmatpush1.msra.mxu0 0.0
      %2342 = vmatprep.subr.mxu0 0.0
      %2343 = vmatpush1.msra.mxu0 0.0
      %2344 = vmatprep.subr.mxu0 0.0
      %2345 = vmatpush1.msra.mxu0 0.0
      %2346 = vmatprep.subr.mxu0 0.0
      %2347 = vmatpush1.msra.mxu0 0.0
      %2348 = vmatprep.subr.mxu0 0.0
      %2349 = vmatpush1.msra.mxu0 0.0
      %2350 = vmatprep.subr.mxu0 0.0
      %2351 = vmatpush1.msra.mxu0 0.0
      %2352 = vmatprep.subr.mxu0 0.0
      %2353 = vmatpush1.msra.mxu0 0.0
      %2354 = vmatprep.subr.mxu0 0.0
      %2355 = vmatpush1.msra.mxu0 0.0
      %2356 = vmatprep.subr.mxu0 0.0
      %2357 = vmatpush1.msra.mxu0 0.0
      %2358 = vmatprep.subr.mxu0 0.0
      %2359 = vmatpush1.msra.mxu0 0.0
      %2360 = vmatprep.subr.mxu0 0.0
      %2361 = vmatpush1.msra.mxu0 0.0
      %2362 = vmatprep.subr.mxu0 0.0
      %2363 = vmatpush1.msra.mxu0 %v2332
      %2364 = vmatprep.subr.mxu0 0.0
      %2365 = vmatpush1.msra.mxu0 %v2322
      %2366 = vmatprep.subr.mxu0 0.0
      %2367 = vmatpush2.msra.mxu0 0.0
      %2368 = vmatprep.subr.mxu0 0.0
      %2369 = vmatpush2.msra.mxu0 0.0
      %2370 = vmatprep.subr.mxu0 0.0
      %2371 = vmatpush2.msra.mxu0 0.0
      %2372 = vmatprep.subr.mxu0 0.0
      %2373 = vmatpush2.msra.mxu0 0.0
      %2374 = vmatprep.subr.mxu0 0.0
      %2375 = vmatpush2.msra.mxu0 0.0
      %2376 = vmatprep.subr.mxu0 0.0
      %2377 = vmatpush2.msra.mxu0 0.0
      %2378 = vmatprep.subr.mxu0 0.0
      %2379 = vmatpush2.msra.mxu0 0.0
      %2380 = vmatprep.subr.mxu0 0.0
      %2381 = vmatpush2.msra.mxu0 0.0
      %2382 = vmatprep.subr.mxu0 0.0
      %2383 = vmatpush2.msra.mxu0 0.0
      %2384 = vmatprep.subr.mxu0 0.0
      %2385 = vmatpush2.msra.mxu0 0.0
      %2386 = vmatprep.subr.mxu0 0.0
      %2387 = vmatpush2.msra.mxu0 0.0
      %2388 = vmatprep.subr.mxu0 0.0
      %2389 = vmatpush2.msra.mxu0 0.0
      %2390 = vmatprep.subr.mxu0 0.0
      %2391 = vmatpush2.msra.mxu0 0.0
      %2392 = vmatprep.subr.mxu0 0.0
      %2393 = vmatpush2.msra.mxu0 0.0
      %2394 = vmatprep.subr.mxu0 0.0
      %2395 = vmatpush2.msra.mxu0 0.0
      %2396 = vmatprep.subr.mxu0 0.0
      %2397 = vmatpush2.msra.mxu0 0.0
      %2398 = vmatprep.mubr.f32.mxu0 0.0
      %2399 = vmatmul.mubr.f32.gmra.mxu0 %v1536
      %v2400 = vpop.f32.mrf.mxu0
      %v2401 = vadd.f32 0.0, %v2400
      %v2402 = vpop.f32.mrf.mxu0
      %2403 = vmatprep.mubr.f32.mxu0 0.0
      %2404 = vmatmul.mubr.f32.gmra.mxu0 %v1539
      %v2405 = vpop.f32.mrf.mxu0
      %v2406 = vadd.f32 0.0, %v2405
      %v2407 = vpop.f32.mrf.mxu0
      %2408 = vmatprep.mubr.f32.mxu0 0.0
      %2409 = vmatmul.mubr.f32.gmra.mxu0 %v1542
      %v2410 = vpop.f32.mrf.mxu0
      %v2411 = vadd.f32 0.0, %v2410
      %v2412 = vpop.f32.mrf.mxu0
      %2413 = vmatprep.mubr.f32.mxu0 0.0
      %2414 = vmatmul.mubr.f32.gmra.mxu0 %v1545
      %v2415 = vpop.f32.mrf.mxu0
      %v2416 = vadd.f32 0.0, %v2415
      %v2417 = vpop.f32.mrf.mxu0
      %2418 = vmatprep.mubr.f32.mxu0 0.0
      %2419 = vmatmul.mubr.f32.gmra.mxu0 %v1548
      %v2420 = vpop.f32.mrf.mxu0
      %v2421 = vadd.f32 0.0, %v2420
      %v2422 = vpop.f32.mrf.mxu0
      %2423 = vmatprep.mubr.f32.mxu0 0.0
      %2424 = vmatmul.mubr.f32.gmra.mxu0 %v1551
      %v2425 = vpop.f32.mrf.mxu0
      %v2426 = vadd.f32 0.0, %v2425
      %v2427 = vpop.f32.mrf.mxu0
      %2428 = vmatprep.mubr.f32.mxu0 0.0
      %2429 = vmatmul.mubr.f32.gmra.mxu0 %v1554
      %v2430 = vpop.f32.mrf.mxu0
      %v2431 = vadd.f32 0.0, %v2430
      %v2432 = vpop.f32.mrf.mxu0
      %2433 = vmatprep.mubr.f32.mxu0 0.0
      %2434 = vmatmul.mubr.f32.gmra.mxu0 %v1557
      %v2435 = vpop.f32.mrf.mxu0
      %v2436 = vadd.f32 0.0, %v2435
      %v2437 = vpop.f32.mrf.mxu0
      %2438 = vmatprep.mubr.f32.mxu0 0.0
      %2439 = vmatmul.mubr.f32.gmra.mxu0 %v1560
      %v2440 = vpop.f32.mrf.mxu0
      %v2441 = vadd.f32 0.0, %v2440
      %v2442 = vpop.f32.mrf.mxu0
      %2443 = vmatprep.mubr.f32.mxu0 0.0
      %2444 = vmatmul.mubr.f32.gmra.mxu0 %v1563
      %v2445 = vpop.f32.mrf.mxu0
      %v2446 = vadd.f32 0.0, %v2445
      %v2447 = vpop.f32.mrf.mxu0
      %2448 = vmatprep.mubr.f32.mxu0 0.0
      %2449 = vmatmul.mubr.f32.gmra.mxu0 %v1566
      %v2450 = vpop.f32.mrf.mxu0
      %v2451 = vadd.f32 0.0, %v2450
      %v2452 = vpop.f32.mrf.mxu0
      %2453 = vmatprep.mubr.f32.mxu0 0.0
      %2454 = vmatmul.mubr.f32.gmra.mxu0 %v1569
      %v2455 = vpop.f32.mrf.mxu0
      %v2456 = vadd.f32 0.0, %v2455
      %v2457 = vpop.f32.mrf.mxu0
      %2458 = vmatprep.mubr.f32.mxu0 0.0
      %2459 = vmatmul.mubr.f32.gmra.mxu0 %v1572
      %v2460 = vpop.f32.mrf.mxu0
      %v2461 = vadd.f32 0.0, %v2460
      %v2462 = vpop.f32.mrf.mxu0
      %2463 = vdwg.mxu0
      %v2464 = vtanh.pop %v2401
      %v2465 = vtanh.pop %v2406
      %v2466 = vtanh.pop %v2411
      %v2467 = vtanh.pop %v2416
      %v2468 = vtanh.pop %v2421
      %v2469 = vtanh.pop %v2426
      %v2470 = vtanh.pop %v2431
      %v2471 = vtanh.pop %v2436
      %v2472 = vtanh.pop %v2441
      %v2473 = vtanh.pop %v2446
      %v2474 = vtanh.pop %v2451
      %v2475 = vtanh.pop %v2456
      %v2476 = vtanh.pop %v2461
      %v2478 = vlaneseq
      %v2479 = vshrl.u32 %v2478, 7
      %v2480 = vsub.s32 0, %v2479
      %v2481 = vrot.slane %v2330, %v2480
      %v2483 = vmul.f32 %v2464, %v2481
      %v2484 = vmul.f32 %v2465, %v2481
      %v2485 = vmul.f32 %v2466, %v2481
      %v2486 = vmul.f32 %v2467, %v2481
      %v2487 = vmul.f32 %v2468, %v2481
      %v2488 = vmul.f32 %v2469, %v2481
      %v2489 = vmul.f32 %v2470, %v2481
      %v2490 = vmul.f32 %v2471, %v2481
      %v2491 = vmul.f32 %v2472, %v2481
      %v2492 = vmul.f32 %v2473, %v2481
      %v2493 = vmul.f32 %v2474, %v2481
      %v2494 = vmul.f32 %v2475, %v2481
      %v2495 = vmul.f32 %v2476, %v2481
      %v2496 = vsel %vm1452, %v2483, 0.0
      %2497 = vadd.xlane.f32.xlu0 %v2496
      %v2498 = vpop.xlane.xlu0 %2497
      %v2499 = vsel %vm1452, %v2484, 0.0
      %2500 = vadd.xlane.f32.xlu0 %v2499
      %v2501 = vpop.xlane.xlu0 %2500
      %v2502 = vsel %vm1452, %v2485, 0.0
      %2503 = vadd.xlane.f32.xlu0 %v2502
      %v2504 = vpop.xlane.xlu0 %2503
      %v2505 = vsel %vm1452, %v2486, 0.0
      %2506 = vadd.xlane.f32.xlu0 %v2505
      %v2507 = vpop.xlane.xlu0 %2506
      %v2508 = vsel %vm1452, %v2487, 0.0
      %2509 = vadd.xlane.f32.xlu0 %v2508
      %v2510 = vpop.xlane.xlu0 %2509
      %v2511 = vsel %vm1452, %v2488, 0.0
      %2512 = vadd.xlane.f32.xlu0 %v2511
      %v2513 = vpop.xlane.xlu0 %2512
      %v2514 = vsel %vm1452, %v2489, 0.0
      %2515 = vadd.xlane.f32.xlu0 %v2514
      %v2516 = vpop.xlane.xlu0 %2515
      %v2517 = vsel %vm1452, %v2490, 0.0
      %2518 = vadd.xlane.f32.xlu0 %v2517
      %v2519 = vpop.xlane.xlu0 %2518
      %v2520 = vsel %vm1452, %v2491, 0.0
      %2521 = vadd.xlane.f32.xlu0 %v2520
      %v2522 = vpop.xlane.xlu0 %2521
      %v2523 = vsel %vm1452, %v2492, 0.0
      %2524 = vadd.xlane.f32.xlu0 %v2523
      %v2525 = vpop.xlane.xlu0 %2524
      %v2526 = vsel %vm1452, %v2493, 0.0
      %2527 = vadd.xlane.f32.xlu0 %v2526
      %v2528 = vpop.xlane.xlu0 %2527
      %v2529 = vsel %vm1452, %v2494, 0.0
      %2530 = vadd.xlane.f32.xlu0 %v2529
      %v2531 = vpop.xlane.xlu0 %2530
      %v2532 = vsel %vm1775, %v2495, 0.0
      %2533 = vadd.xlane.f32.xlu0 %v2532
      %v2534 = vpop.xlane.xlu0 %2533
      %v2548 = vrot.slane %v1343, 4
      %v2549 = vrot.slane %v1344, 4
      %v2550 = vsel %vm1137, %v2548, %v2549
      %v2551 = vrot.slane %v1345, 4
      %v2552 = vsel %vm1137, %v2549, %v2551
      %v2553 = vrot.slane %v1346, 4
      %v2554 = vsel %vm1137, %v2551, %v2553
      %v2555 = vrot.slane %v1347, 4
      %v2556 = vsel %vm1137, %v2553, %v2555
      %v2557 = vrot.slane %v1348, 4
      %v2558 = vsel %vm1137, %v2555, %v2557
      %v2559 = vrot.slane %v1349, 4
      %v2560 = vsel %vm1137, %v2557, %v2559
      %v2561 = vrot.slane %v1350, 4
      %v2562 = vsel %vm1137, %v2559, %v2561
      %v2563 = vrot.slane %v1351, 4
      %v2564 = vsel %vm1137, %v2561, %v2563
      %v2565 = vrot.slane %v1352, 4
      %v2566 = vsel %vm1137, %v2563, %v2565
      %v2567 = vrot.slane %v1353, 4
      %v2568 = vsel %vm1137, %v2565, %v2567
      %v2569 = vrot.slane %v1354, 4
      %v2570 = vsel %vm1137, %v2567, %v2569
      %v2571 = vrot.slane %v1355, 4
      %v2572 = vsel %vm1137, %v2569, %v2571
      %v2586 = vmul.f32 %v2498, %v2550
      %v2587 = vmul.f32 %v2501, %v2552
      %v2588 = vmul.f32 %v2504, %v2554
      %v2589 = vmul.f32 %v2507, %v2556
      %v2590 = vmul.f32 %v2510, %v2558
      %v2591 = vmul.f32 %v2513, %v2560
      %v2592 = vmul.f32 %v2516, %v2562
      %v2593 = vmul.f32 %v2519, %v2564
      %v2594 = vmul.f32 %v2522, %v2566
      %v2595 = vmul.f32 %v2525, %v2568
      %v2596 = vmul.f32 %v2528, %v2570
      %v2597 = vmul.f32 %v2531, %v2572
      %v2598 = vmul.f32 %v2534, %v2571
      %2600 = vset.pattern.permute.xlu0 0
      %2601 = vperm.xlu0 %2600, %v2586
      %v2602 = vpop.permute.xlu0 %2601
      %2605 = vset.pattern.permute.xlu0 0
      %2606 = vperm.xlu0 %2605, %v2587
      %v2607 = vpop.permute.xlu0 %2606
      %2610 = vset.pattern.permute.xlu0 0
      %2611 = vperm.xlu0 %2610, %v2588
      %v2612 = vpop.permute.xlu0 %2611
      %2615 = vset.pattern.permute.xlu0 0
      %2616 = vperm.xlu0 %2615, %v2589
      %v2617 = vpop.permute.xlu0 %2616
      %2620 = vset.pattern.permute.xlu0 0
      %2621 = vperm.xlu0 %2620, %v2590
      %v2622 = vpop.permute.xlu0 %2621
      %2625 = vset.pattern.permute.xlu0 0
      %2626 = vperm.xlu0 %2625, %v2591
      %v2627 = vpop.permute.xlu0 %2626
      %2630 = vset.pattern.permute.xlu0 0
      %2631 = vperm.xlu0 %2630, %v2592
      %v2632 = vpop.permute.xlu0 %2631
      %2635 = vset.pattern.permute.xlu0 0
      %2636 = vperm.xlu0 %2635, %v2593
      %v2637 = vpop.permute.xlu0 %2636
      %2640 = vset.pattern.permute.xlu0 0
      %2641 = vperm.xlu0 %2640, %v2594
      %v2642 = vpop.permute.xlu0 %2641
      %2645 = vset.pattern.permute.xlu0 0
      %2646 = vperm.xlu0 %2645, %v2595
      %v2647 = vpop.permute.xlu0 %2646
      %2650 = vset.pattern.permute.xlu0 0
      %2651 = vperm.xlu0 %2650, %v2596
      %v2652 = vpop.permute.xlu0 %2651
      %2655 = vset.pattern.permute.xlu0 0
      %2656 = vperm.xlu0 %2655, %v2597
      %v2657 = vpop.permute.xlu0 %2656
      %2660 = vset.pattern.permute.xlu0 0
      %2661 = vperm.xlu0 %2660, %v2598
      %v2662 = vpop.permute.xlu0 %2661
      %v2664 = vmul.f32 %v2602, %v717
      %v2665 = vmul.f32 %v2607, %v718
      %v2666 = vmul.f32 %v2612, %v719
      %v2667 = vmul.f32 %v2617, %v720
      %v2668 = vmul.f32 %v2622, %v721
      %v2669 = vmul.f32 %v2627, %v722
      %v2670 = vmul.f32 %v2632, %v723
      %v2671 = vmul.f32 %v2637, %v724
      %v2672 = vmul.f32 %v2642, %v725
      %v2673 = vmul.f32 %v2647, %v726
      %v2674 = vmul.f32 %v2652, %v727
      %v2675 = vmul.f32 %v2657, %v728
      %v2676 = vmul.f32 %v2662, %v729
      %v2678 = vsel %vm1137, %v2676, 0
      %2680 = vmatprep.subr.mxu0 0.0
      %2681 = vmatpush1.msra.mxu0 0.0
      %2682 = vmatprep.subr.mxu0 0.0
      %2683 = vmatpush1.msra.mxu0 0.0
      %2684 = vmatprep.subr.mxu0 0.0
      %2685 = vmatpush1.msra.mxu0 0.0
      %2686 = vmatprep.subr.mxu0 0.0
      %2687 = vmatpush1.msra.mxu0 %v2678
      %2688 = vmatprep.subr.mxu0 0.0
      %2689 = vmatpush1.msra.mxu0 %v2675
      %2690 = vmatprep.subr.mxu0 0.0
      %2691 = vmatpush1.msra.mxu0 %v2674
      %2692 = vmatprep.subr.mxu0 0.0
      %2693 = vmatpush1.msra.mxu0 %v2673
      %2694 = vmatprep.subr.mxu0 0.0
      %2695 = vmatpush1.msra.mxu0 %v2672
      %2696 = vmatprep.subr.mxu0 0.0
      %2697 = vmatpush1.msra.mxu0 %v2671
      %2698 = vmatprep.subr.mxu0 0.0
      %2699 = vmatpush1.msra.mxu0 %v2670
      %2700 = vmatprep.subr.mxu0 0.0
      %2701 = vmatpush1.msra.mxu0 %v2669
      %2702 = vmatprep.subr.mxu0 0.0
      %2703 = vmatpush1.msra.mxu0 %v2668
      %2704 = vmatprep.subr.mxu0 0.0
      %2705 = vmatpush1.msra.mxu0 %v2667
      %2706 = vmatprep.subr.mxu0 0.0
      %2707 = vmatpush1.msra.mxu0 %v2666
      %2708 = vmatprep.subr.mxu0 0.0
      %2709 = vmatpush1.msra.mxu0 %v2665
      %2710 = vmatprep.subr.mxu0 0.0
      %2711 = vmatpush1.msra.mxu0 %v2664
      %2712 = vmatprep.subr.mxu0 0.0
      %2713 = vmatpush2.msra.mxu0 0.0
      %2714 = vmatprep.subr.mxu0 0.0
      %2715 = vmatpush2.msra.mxu0 0.0
      %2716 = vmatprep.subr.mxu0 0.0
      %2717 = vmatpush2.msra.mxu0 0.0
      %2718 = vmatprep.subr.mxu0 0.0
      %2719 = vmatpush2.msra.mxu0 0.0
      %2720 = vmatprep.subr.mxu0 0.0
      %2721 = vmatpush2.msra.mxu0 0.0
      %2722 = vmatprep.subr.mxu0 0.0
      %2723 = vmatpush2.msra.mxu0 0.0
      %2724 = vmatprep.subr.mxu0 0.0
      %2725 = vmatpush2.msra.mxu0 0.0
      %2726 = vmatprep.subr.mxu0 0.0
      %2727 = vmatpush2.msra.mxu0 0.0
      %2728 = vmatprep.subr.mxu0 0.0
      %2729 = vmatpush2.msra.mxu0 0.0
      %2730 = vmatprep.subr.mxu0 0.0
      %2731 = vmatpush2.msra.mxu0 0.0
      %2732 = vmatprep.subr.mxu0 0.0
      %2733 = vmatpush2.msra.mxu0 0.0
      %2734 = vmatprep.subr.mxu0 0.0
      %2735 = vmatpush2.msra.mxu0 0.0
      %2736 = vmatprep.subr.mxu0 0.0
      %2737 = vmatpush2.msra.mxu0 0.0
      %2738 = vmatprep.subr.mxu0 0.0
      %2739 = vmatpush2.msra.mxu0 0.0
      %2740 = vmatprep.subr.mxu0 0.0
      %2741 = vmatpush2.msra.mxu0 0.0
      %2742 = vmatprep.subr.mxu0 0.0
      %2743 = vmatpush2.msra.mxu0 0.0
      %2744 = vmatprep.mubr.f32.mxu0 0.0
      %2745 = vmatmul.mubr.f32.gmra.mxu0 %v1871
      %v2746 = vpop.f32.mrf.mxu0
      %v2747 = vadd.f32 0.0, %v2746
      %v2748 = vpop.f32.mrf.mxu0
      %2749 = vmatprep.mubr.f32.mxu0 0.0
      %2750 = vmatmul.mubr.f32.gmra.mxu0 %v1874
      %v2751 = vpop.f32.mrf.mxu0
      %v2752 = vadd.f32 0.0, %v2751
      %v2753 = vpop.f32.mrf.mxu0
      %2754 = vdwg.mxu0
      %v2755 = vmul.f32 %v2747, %v800
      %v2756 = vmul.f32 %v2752, %v801
      %vm2757 = vcmp.eq.f32.partialorder %v2755, 0.0
      %vm2758 = vcmp.eq.f32.partialorder %v2756, 0.0
      %v2759 = vsel %vm2757, -10000.0, %v2755
      %v2760 = vsel %vm2758, -10000.0, %v2756
      %v2761 = vsel %vm751, %v2759, -inf
      %2762 = vmax.xlane.f32.xlu0 %v2761
      %v2763 = vpop.xlane.xlu0 %2762
      %v2764 = vsel %vm755, %v2760, -inf
      %2765 = vmax.xlane.f32.xlu0 %v2764
      %v2766 = vpop.xlane.xlu0 %2765
      %v2767 = vsub.f32 %v2759, %v2763
      %v2768 = vsub.f32 %v2760, %v2766
      %v2769 = vmul.f32 %v2767, 1.442695
      %v2770 = vpow.pop %v2769
      %v2771 = vmul.f32 %v2768, 1.442695
      %v2772 = vpow.pop %v2771
      %v2773 = vsel %vm751, %v2770, 0.0
      %2774 = vadd.xlane.f32.xlu0 %v2773
      %v2775 = vpop.xlane.xlu0 %2774
      %v2776 = vsel %vm755, %v2772, 0.0
      %2777 = vadd.xlane.f32.xlu0 %v2776
      %v2778 = vpop.xlane.xlu0 %2777
      %v2779 = vrcp.pop %v2775
      %v2780 = vmul.f32 %v2770, %v2779
      %v2781 = vrcp.pop %v2778
      %v2782 = vmul.f32 %v2772, %v2781
      %v2784 = vsel %vm751, %v2780, 0
      %v2787 = vsel %vm751, %v2782, 0
      %2789 = vmatprep.subr.mxu0 0.0
      %2790 = vmatpush1.msra.mxu0 0.0
      %2791 = vmatprep.subr.mxu0 0.0
      %2792 = vmatpush1.msra.mxu0 0.0
      %2793 = vmatprep.subr.mxu0 0.0
      %2794 = vmatpush1.msra.mxu0 0.0
      %2795 = vmatprep.subr.mxu0 0.0
      %2796 = vmatpush1.msra.mxu0 0.0
      %2797 = vmatprep.subr.mxu0 0.0
      %2798 = vmatpush1.msra.mxu0 0.0
      %2799 = vmatprep.subr.mxu0 0.0
      %2800 = vmatpush1.msra.mxu0 0.0
      %2801 = vmatprep.subr.mxu0 0.0
      %2802 = vmatpush1.msra.mxu0 0.0
      %2803 = vmatprep.subr.mxu0 0.0
      %2804 = vmatpush1.msra.mxu0 0.0
      %2805 = vmatprep.subr.mxu0 0.0
      %2806 = vmatpush1.msra.mxu0 0.0
      %2807 = vmatprep.subr.mxu0 0.0
      %2808 = vmatpush1.msra.mxu0 0.0
      %2809 = vmatprep.subr.mxu0 0.0
      %2810 = vmatpush1.msra.mxu0 0.0
      %2811 = vmatprep.subr.mxu0 0.0
      %2812 = vmatpush1.msra.mxu0 0.0
      %2813 = vmatprep.subr.mxu0 0.0
      %2814 = vmatpush1.msra.mxu0 0.0
      %2815 = vmatprep.subr.mxu0 0.0
      %2816 = vmatpush1.msra.mxu0 0.0
      %2817 = vmatprep.subr.mxu0 0.0
      %2818 = vmatpush1.msra.mxu0 %v2332
      %2819 = vmatprep.subr.mxu0 0.0
      %2820 = vmatpush1.msra.mxu0 %v2322
      %2821 = vmatprep.subr.mxu0 0.0
      %2822 = vmatpush2.msra.mxu0 0.0
      %2823 = vmatprep.subr.mxu0 0.0
      %2824 = vmatpush2.msra.mxu0 0.0
      %2825 = vmatprep.subr.mxu0 0.0
      %2826 = vmatpush2.msra.mxu0 0.0
      %2827 = vmatprep.subr.mxu0 0.0
      %2828 = vmatpush2.msra.mxu0 0.0
      %2829 = vmatprep.subr.mxu0 0.0
      %2830 = vmatpush2.msra.mxu0 0.0
      %2831 = vmatprep.subr.mxu0 0.0
      %2832 = vmatpush2.msra.mxu0 0.0
      %2833 = vmatprep.subr.mxu0 0.0
      %2834 = vmatpush2.msra.mxu0 0.0
      %2835 = vmatprep.subr.mxu0 0.0
      %2836 = vmatpush2.msra.mxu0 0.0
      %2837 = vmatprep.subr.mxu0 0.0
      %2838 = vmatpush2.msra.mxu0 0.0
      %2839 = vmatprep.subr.mxu0 0.0
      %2840 = vmatpush2.msra.mxu0 0.0
      %2841 = vmatprep.subr.mxu0 0.0
      %2842 = vmatpush2.msra.mxu0 0.0
      %2843 = vmatprep.subr.mxu0 0.0
      %2844 = vmatpush2.msra.mxu0 0.0
      %2845 = vmatprep.subr.mxu0 0.0
      %2846 = vmatpush2.msra.mxu0 0.0
      %2847 = vmatprep.subr.mxu0 0.0
      %2848 = vmatpush2.msra.mxu0 0.0
      %2849 = vmatprep.subr.mxu0 0.0
      %2850 = vmatpush2.msra.mxu0 0.0
      %2851 = vmatprep.subr.mxu0 0.0
      %2852 = vmatpush2.msra.mxu0 0.0
      %2853 = vmatprep.mubr.f32.mxu0 0.0
      %2854 = vmatmul.mubr.f32.gmra.mxu0 %v2784
      %v2855 = vpop.f32.mrf.mxu0
      %v2856 = vadd.f32 0.0, %v2855
      %v2857 = vpop.f32.mrf.mxu0
      %2858 = vmatprep.mubr.f32.mxu0 0.0
      %2859 = vmatmul.mubr.f32.gmra.mxu0 %v2787
      %v2860 = vpop.f32.mrf.mxu0
      %v2861 = vadd.f32 0.0, %v2860
      %v2862 = vpop.f32.mrf.mxu0
      %2863 = vdwg.mxu0
      %v2864 = vtanh.pop %v2856
      %v2865 = vtanh.pop %v2861
      %v2866 = vld [vmem:[%s15] sm:$0xff]
      %v2867 = vld [vmem:[%s15 + $0x8] sm:$0xff]
      %v2868 = vld [vmem:[%s15 + $0x10] sm:$0xff]
      %v2869 = vld [vmem:[%s15 + $0x18] sm:$0xff]
      %v2870 = vld [vmem:[%s16] sm:$0xff]
      %v2871 = vld [vmem:[%s16 + $0x8] sm:$0xff]
      %v2872 = vld [vmem:[%s16 + $0x10] sm:$0xff]
      %v2873 = vld [vmem:[%s16 + $0x18] sm:$0xff]
      %v2874 = vld [vmem:[%s16 + $0x20] sm:$0xff]
      %v2875 = vld [vmem:[%s16 + $0x28] sm:$0xff]
      %v2876 = vld [vmem:[%s16 + $0x30] sm:$0xff]
      %v2877 = vld [vmem:[%s16 + $0x38] sm:$0xff]
      %2878 = vmatprep.subr.mxu0 0.0
      %2879 = vmatpush1.msra.mxu0 0.0
      %2880 = vmatprep.subr.mxu0 0.0
      %2881 = vmatpush1.msra.mxu0 0.0
      %2882 = vmatprep.subr.mxu0 0.0
      %2883 = vmatpush1.msra.mxu0 0.0
      %2884 = vmatprep.subr.mxu0 0.0
      %2885 = vmatpush1.msra.mxu0 0.0
      %2886 = vmatprep.subr.mxu0 0.0
      %2887 = vmatpush1.msra.mxu0 0.0
      %2888 = vmatprep.subr.mxu0 0.0
      %2889 = vmatpush1.msra.mxu0 0.0
      %2890 = vmatprep.subr.mxu0 0.0
      %2891 = vmatpush1.msra.mxu0 0.0
      %2892 = vmatprep.subr.mxu0 0.0
      %2893 = vmatpush1.msra.mxu0 0.0
      %2894 = vmatprep.subr.mxu0 0.0
      %2895 = vmatpush1.msra.mxu0 %v2877
      %2896 = vmatprep.subr.mxu0 0.0
      %2897 = vmatpush1.msra.mxu0 %v2876
      %2898 = vmatprep.subr.mxu0 0.0
      %2899 = vmatpush1.msra.mxu0 %v2875
      %2900 = vmatprep.subr.mxu0 0.0
      %2901 = vmatpush1.msra.mxu0 %v2874
      %2902 = vmatprep.subr.mxu0 0.0
      %2903 = vmatpush1.msra.mxu0 %v2873
      %2904 = vmatprep.subr.mxu0 0.0
      %2905 = vmatpush1.msra.mxu0 %v2872
      %2906 = vmatprep.subr.mxu0 0.0
      %2907 = vmatpush1.msra.mxu0 %v2871
      %2908 = vmatprep.subr.mxu0 0.0
      %2909 = vmatpush1.msra.mxu0 %v2870
      %2910 = vmatprep.subr.mxu0 0.0
      %2911 = vmatpush2.msra.mxu0 0.0
      %2912 = vmatprep.subr.mxu0 0.0
      %2913 = vmatpush2.msra.mxu0 0.0
      %2914 = vmatprep.subr.mxu0 0.0
      %2915 = vmatpush2.msra.mxu0 0.0
      %2916 = vmatprep.subr.mxu0 0.0
      %2917 = vmatpush2.msra.mxu0 0.0
      %2918 = vmatprep.subr.mxu0 0.0
      %2919 = vmatpush2.msra.mxu0 0.0
      %2920 = vmatprep.subr.mxu0 0.0
      %2921 = vmatpush2.msra.mxu0 0.0
      %2922 = vmatprep.subr.mxu0 0.0
      %2923 = vmatpush2.msra.mxu0 0.0
      %2924 = vmatprep.subr.mxu0 0.0
      %2925 = vmatpush2.msra.mxu0 0.0
      %2926 = vmatprep.subr.mxu0 0.0
      %2927 = vmatpush2.msra.mxu0 0.0
      %2928 = vmatprep.subr.mxu0 0.0
      %2929 = vmatpush2.msra.mxu0 0.0
      %2930 = vmatprep.subr.mxu0 0.0
      %2931 = vmatpush2.msra.mxu0 0.0
      %2932 = vmatprep.subr.mxu0 0.0
      %2933 = vmatpush2.msra.mxu0 0.0
      %2934 = vmatprep.subr.mxu0 0.0
      %2935 = vmatpush2.msra.mxu0 0.0
      %2936 = vmatprep.subr.mxu0 0.0
      %2937 = vmatpush2.msra.mxu0 0.0
      %2938 = vmatprep.subr.mxu0 0.0
      %2939 = vmatpush2.msra.mxu0 0.0
      %2940 = vmatprep.subr.mxu0 0.0
      %2941 = vmatpush2.msra.mxu0 0.0
      %2942 = vmatprep.mubr.f32.mxu0 0.0
      %2943 = vmatmul.mubr.f32.gmra.mxu0 %v2250
      %v2944 = vpop.f32.mrf.mxu0
      %v2945 = vadd.f32 0.0, %v2944
      %v2946 = vpop.f32.mrf.mxu0
      %2947 = vmatprep.mubr.f32.mxu0 0.0
      %2948 = vmatmul.mubr.f32.gmra.mxu0 %v2253
      %v2949 = vpop.f32.mrf.mxu0
      %v2950 = vadd.f32 0.0, %v2949
      %v2951 = vpop.f32.mrf.mxu0
      %2952 = vdwg.mxu0
      %v2954 = vsel %vm1452, %v2864, 0
      %v2957 = vsel %vm1452, %v2865, 0
      %2959 = vmatprep.subr.mxu0 0.0
      %2960 = vmatpush1.msra.mxu0 0.0
      %2961 = vmatprep.subr.mxu0 0.0
      %2962 = vmatpush1.msra.mxu0 0.0
      %2963 = vmatprep.subr.mxu0 0.0
      %2964 = vmatpush1.msra.mxu0 0.0
      %2965 = vmatprep.subr.mxu0 0.0
      %2966 = vmatpush1.msra.mxu0 0.0
      %2967 = vmatprep.subr.mxu0 0.0
      %2968 = vmatpush1.msra.mxu0 0.0
      %2969 = vmatprep.subr.mxu0 0.0
      %2970 = vmatpush1.msra.mxu0 0.0
      %2971 = vmatprep.subr.mxu0 0.0
      %2972 = vmatpush1.msra.mxu0 0.0
      %2973 = vmatprep.subr.mxu0 0.0
      %2974 = vmatpush1.msra.mxu0 0.0
      %2975 = vmatprep.subr.mxu0 0.0
      %2976 = vmatpush1.msra.mxu0 0.0
      %2977 = vmatprep.subr.mxu0 0.0
      %2978 = vmatpush1.msra.mxu0 0.0
      %2979 = vmatprep.subr.mxu0 0.0
      %2980 = vmatpush1.msra.mxu0 0.0
      %2981 = vmatprep.subr.mxu0 0.0
      %2982 = vmatpush1.msra.mxu0 0.0
      %2983 = vmatprep.subr.mxu0 0.0
      %2984 = vmatpush1.msra.mxu0 %v2869
      %2985 = vmatprep.subr.mxu0 0.0
      %2986 = vmatpush1.msra.mxu0 %v2868
      %2987 = vmatprep.subr.mxu0 0.0
      %2988 = vmatpush1.msra.mxu0 %v2867
      %2989 = vmatprep.subr.mxu0 0.0
      %2990 = vmatpush1.msra.mxu0 %v2866
      %2991 = vmatprep.subr.mxu0 0.0
      %2992 = vmatpush2.msra.mxu0 0.0
      %2993 = vmatprep.subr.mxu0 0.0
      %2994 = vmatpush2.msra.mxu0 0.0
      %2995 = vmatprep.subr.mxu0 0.0
      %2996 = vmatpush2.msra.mxu0 0.0
      %2997 = vmatprep.subr.mxu0 0.0
      %2998 = vmatpush2.msra.mxu0 0.0
      %2999 = vmatprep.subr.mxu0 0.0
      %3000 = vmatpush2.msra.mxu0 0.0
      %3001 = vmatprep.subr.mxu0 0.0
      %3002 = vmatpush2.msra.mxu0 0.0
      %3003 = vmatprep.subr.mxu0 0.0
      %3004 = vmatpush2.msra.mxu0 0.0
      %3005 = vmatprep.subr.mxu0 0.0
      %3006 = vmatpush2.msra.mxu0 0.0
      %3007 = vmatprep.subr.mxu0 0.0
      %3008 = vmatpush2.msra.mxu0 0.0
      %3009 = vmatprep.subr.mxu0 0.0
      %3010 = vmatpush2.msra.mxu0 0.0
      %3011 = vmatprep.subr.mxu0 0.0
      %3012 = vmatpush2.msra.mxu0 0.0
      %3013 = vmatprep.subr.mxu0 0.0
      %3014 = vmatpush2.msra.mxu0 0.0
      %3015 = vmatprep.subr.mxu0 0.0
      %3016 = vmatpush2.msra.mxu0 0.0
      %3017 = vmatprep.subr.mxu0 0.0
      %3018 = vmatpush2.msra.mxu0 0.0
      %3019 = vmatprep.subr.mxu0 0.0
      %3020 = vmatpush2.msra.mxu0 0.0
      %3021 = vmatprep.subr.mxu0 0.0
      %3022 = vmatpush2.msra.mxu0 0.0
      %3023 = vmatprep.mubr.f32.mxu0 0.0
      %3024 = vmatmul.mubr.f32.gmra.mxu0 %v2954
      %v3025 = vpop.f32.mrf.mxu0
      %v3026 = vadd.f32 %v2945, %v3025
      %v3027 = vpop.f32.mrf.mxu0
      %3028 = vmatprep.mubr.f32.mxu0 0.0
      %3029 = vmatmul.mubr.f32.gmra.mxu0 %v2957
      %v3030 = vpop.f32.mrf.mxu0
      %v3031 = vadd.f32 %v2950, %v3030
      %v3032 = vpop.f32.mrf.mxu0
      %3033 = vdwg.mxu0
      %v3034 = vld [vmem:[%s17] sm:$0x1]
      %v3036 = vlaneseq
      %v3037 = vshrl.u32 %v3036, 7
      %v3038 = vsub.s32 0, %v3037
      %v3039 = vrot.slane %v3034, %v3038
      %v3041 = vadd.f32 %v3026, %v3039
      %v3042 = vadd.f32 %v3031, %v3039
      %v3043 = vmax.f32 %v3041, 0.0
      %v3044 = vmax.f32 %v3042, 0.0
      %v3045 = vld [vmem:[%s18] sm:$0xff]
      %v3046 = vld [vmem:[%s18 + $0x8] sm:$0xff]
      %v3047 = vld [vmem:[%s18 + $0x10] sm:$0xff]
      %v3048 = vld [vmem:[%s18 + $0x18] sm:$0xff]
      %v3049 = vld [vmem:[%s18 + $0x20] sm:$0xff]
      %v3050 = vld [vmem:[%s18 + $0x28] sm:$0xff]
      %v3051 = vld [vmem:[%s18 + $0x30] sm:$0xff]
      %v3052 = vld [vmem:[%s18 + $0x38] sm:$0xff]
      %v3053 = vld [vmem:[%s19] sm:$0x1]
      %v3055 = vlaneseq
      %v3056 = vshrl.u32 %v3055, 7
      %v3057 = vsub.s32 0, %v3056
      %v3058 = vrot.slane %v3053, %v3057
      %v3061 = vsel %vm2248, %v3043, 0
      %v3064 = vsel %vm2248, %v3044, 0
      %3066 = vmatprep.subr.mxu0 0.0
      %3067 = vmatpush1.msra.mxu0 0.0
      %3068 = vmatprep.subr.mxu0 0.0
      %3069 = vmatpush1.msra.mxu0 0.0
      %3070 = vmatprep.subr.mxu0 0.0
      %3071 = vmatpush1.msra.mxu0 0.0
      %3072 = vmatprep.subr.mxu0 0.0
      %3073 = vmatpush1.msra.mxu0 0.0
      %3074 = vmatprep.subr.mxu0 0.0
      %3075 = vmatpush1.msra.mxu0 0.0
      %3076 = vmatprep.subr.mxu0 0.0
      %3077 = vmatpush1.msra.mxu0 0.0
      %3078 = vmatprep.subr.mxu0 0.0
      %3079 = vmatpush1.msra.mxu0 0.0
      %3080 = vmatprep.subr.mxu0 0.0
      %3081 = vmatpush1.msra.mxu0 0.0
      %3082 = vmatprep.subr.mxu0 0.0
      %3083 = vmatpush1.msra.mxu0 %v3052
      %3084 = vmatprep.subr.mxu0 0.0
      %3085 = vmatpush1.msra.mxu0 %v3051
      %3086 = vmatprep.subr.mxu0 0.0
      %3087 = vmatpush1.msra.mxu0 %v3050
      %3088 = vmatprep.subr.mxu0 0.0
      %3089 = vmatpush1.msra.mxu0 %v3049
      %3090 = vmatprep.subr.mxu0 0.0
      %3091 = vmatpush1.msra.mxu0 %v3048
      %3092 = vmatprep.subr.mxu0 0.0
      %3093 = vmatpush1.msra.mxu0 %v3047
      %3094 = vmatprep.subr.mxu0 0.0
      %3095 = vmatpush1.msra.mxu0 %v3046
      %3096 = vmatprep.subr.mxu0 0.0
      %3097 = vmatpush1.msra.mxu0 %v3045
      %3098 = vmatprep.subr.mxu0 0.0
      %3099 = vmatpush2.msra.mxu0 0.0
      %3100 = vmatprep.subr.mxu0 0.0
      %3101 = vmatpush2.msra.mxu0 0.0
      %3102 = vmatprep.subr.mxu0 0.0
      %3103 = vmatpush2.msra.mxu0 0.0
      %3104 = vmatprep.subr.mxu0 0.0
      %3105 = vmatpush2.msra.mxu0 0.0
      %3106 = vmatprep.subr.mxu0 0.0
      %3107 = vmatpush2.msra.mxu0 0.0
      %3108 = vmatprep.subr.mxu0 0.0
      %3109 = vmatpush2.msra.mxu0 0.0
      %3110 = vmatprep.subr.mxu0 0.0
      %3111 = vmatpush2.msra.mxu0 0.0
      %3112 = vmatprep.subr.mxu0 0.0
      %3113 = vmatpush2.msra.mxu0 0.0
      %3114 = vmatprep.subr.mxu0 0.0
      %3115 = vmatpush2.msra.mxu0 0.0
      %3116 = vmatprep.subr.mxu0 0.0
      %3117 = vmatpush2.msra.mxu0 0.0
      %3118 = vmatprep.subr.mxu0 0.0
      %3119 = vmatpush2.msra.mxu0 0.0
      %3120 = vmatprep.subr.mxu0 0.0
      %3121 = vmatpush2.msra.mxu0 0.0
      %3122 = vmatprep.subr.mxu0 0.0
      %3123 = vmatpush2.msra.mxu0 0.0
      %3124 = vmatprep.subr.mxu0 0.0
      %3125 = vmatpush2.msra.mxu0 0.0
      %3126 = vmatprep.subr.mxu0 0.0
      %3127 = vmatpush2.msra.mxu0 0.0
      %3128 = vmatprep.subr.mxu0 0.0
      %3129 = vmatpush2.msra.mxu0 0.0
      %3130 = vmatprep.mubr.f32.mxu0 0.0
      %3131 = vmatmul.mubr.f32.gmra.mxu0 %v3061
      %v3132 = vpop.f32.mrf.mxu0
      %v3133 = vadd.f32 %v3058, %v3132
      %v3134 = vpop.f32.mrf.mxu0
      %3135 = vmatprep.mubr.f32.mxu0 0.0
      %3136 = vmatmul.mubr.f32.gmra.mxu0 %v3064
      %v3137 = vpop.f32.mrf.mxu0
      %v3138 = vadd.f32 %v3058, %v3137
      %v3139 = vpop.f32.mrf.mxu0
      %3140 = vdwg.mxu0
      %v3141 = vmax.f32 %v3133, 0.0
      %v3142 = vmax.f32 %v3138, 0.0
      %v3143 = vld [vmem:[%s20] sm:$0xff]
      %v3144 = vld [vmem:[%s20 + $0x8] sm:$0xff]
      %v3145 = vld [vmem:[%s20 + $0x10] sm:$0xff]
      %v3146 = vld [vmem:[%s20 + $0x18] sm:$0xff]
      %v3147 = vld [vmem:[%s21] sm:$0x1]
      %v3149 = vlaneseq
      %v3150 = vshrl.u32 %v3149, 7
      %v3151 = vsub.s32 0, %v3150
      %v3152 = vrot.slane %v3147, %v3151
      %v3155 = vsel %vm1452, %v3141, 0
      %v3158 = vsel %vm1452, %v3142, 0
      %3160 = vmatprep.subr.mxu0 0.0
      %3161 = vmatpush1.msra.mxu0 0.0
      %3162 = vmatprep.subr.mxu0 0.0
      %3163 = vmatpush1.msra.mxu0 0.0
      %3164 = vmatprep.subr.mxu0 0.0
      %3165 = vmatpush1.msra.mxu0 0.0
      %3166 = vmatprep.subr.mxu0 0.0
      %3167 = vmatpush1.msra.mxu0 0.0
      %3168 = vmatprep.subr.mxu0 0.0
      %3169 = vmatpush1.msra.mxu0 0.0
      %3170 = vmatprep.subr.mxu0 0.0
      %3171 = vmatpush1.msra.mxu0 0.0
      %3172 = vmatprep.subr.mxu0 0.0
      %3173 = vmatpush1.msra.mxu0 0.0
      %3174 = vmatprep.subr.mxu0 0.0
      %3175 = vmatpush1.msra.mxu0 0.0
      %3176 = vmatprep.subr.mxu0 0.0
      %3177 = vmatpush1.msra.mxu0 0.0
      %3178 = vmatprep.subr.mxu0 0.0
      %3179 = vmatpush1.msra.mxu0 0.0
      %3180 = vmatprep.subr.mxu0 0.0
      %3181 = vmatpush1.msra.mxu0 0.0
      %3182 = vmatprep.subr.mxu0 0.0
      %3183 = vmatpush1.msra.mxu0 0.0
      %3184 = vmatprep.subr.mxu0 0.0
      %3185 = vmatpush1.msra.mxu0 %v3146
      %3186 = vmatprep.subr.mxu0 0.0
      %3187 = vmatpush1.msra.mxu0 %v3145
      %3188 = vmatprep.subr.mxu0 0.0
      %3189 = vmatpush1.msra.mxu0 %v3144
      %3190 = vmatprep.subr.mxu0 0.0
      %3191 = vmatpush1.msra.mxu0 %v3143
      %3192 = vmatprep.subr.mxu0 0.0
      %3193 = vmatpush2.msra.mxu0 0.0
      %3194 = vmatprep.subr.mxu0 0.0
      %3195 = vmatpush2.msra.mxu0 0.0
      %3196 = vmatprep.subr.mxu0 0.0
      %3197 = vmatpush2.msra.mxu0 0.0
      %3198 = vmatprep.subr.mxu0 0.0
      %3199 = vmatpush2.msra.mxu0 0.0
      %3200 = vmatprep.subr.mxu0 0.0
      %3201 = vmatpush2.msra.mxu0 0.0
      %3202 = vmatprep.subr.mxu0 0.0
      %3203 = vmatpush2.msra.mxu0 0.0
      %3204 = vmatprep.subr.mxu0 0.0
      %3205 = vmatpush2.msra.mxu0 0.0
      %3206 = vmatprep.subr.mxu0 0.0
      %3207 = vmatpush2.msra.mxu0 0.0
      %3208 = vmatprep.subr.mxu0 0.0
      %3209 = vmatpush2.msra.mxu0 0.0
      %3210 = vmatprep.subr.mxu0 0.0
      %3211 = vmatpush2.msra.mxu0 0.0
      %3212 = vmatprep.subr.mxu0 0.0
      %3213 = vmatpush2.msra.mxu0 0.0
      %3214 = vmatprep.subr.mxu0 0.0
      %3215 = vmatpush2.msra.mxu0 0.0
      %3216 = vmatprep.subr.mxu0 0.0
      %3217 = vmatpush2.msra.mxu0 0.0
      %3218 = vmatprep.subr.mxu0 0.0
      %3219 = vmatpush2.msra.mxu0 0.0
      %3220 = vmatprep.subr.mxu0 0.0
      %3221 = vmatpush2.msra.mxu0 0.0
      %3222 = vmatprep.subr.mxu0 0.0
      %3223 = vmatpush2.msra.mxu0 0.0
      %3224 = vmatprep.mubr.f32.mxu0 0.0
      %3225 = vmatmul.mubr.f32.gmra.mxu0 %v3155
      %v3226 = vpop.f32.mrf.mxu0
      %v3227 = vadd.f32 %v3152, %v3226
      %v3228 = vpop.f32.mrf.mxu0
      %3229 = vmatprep.mubr.f32.mxu0 0.0
      %3230 = vmatmul.mubr.f32.gmra.mxu0 %v3158
      %v3231 = vpop.f32.mrf.mxu0
      %v3232 = vadd.f32 %v3152, %v3231
      %v3233 = vpop.f32.mrf.mxu0
      %3234 = vdwg.mxu0
      %vm3235 = vcmask 15360
      %v3236 = vsel %vm3235, %v3227, -inf
      %3237 = vmax.xlane.f32.xlu0 %v3236
      %v3238 = vpop.xlane.xlu0 %3237
      %vm3239 = vcmask 9216
      %v3240 = vsel %vm3239, %v3232, -inf
      %3241 = vmax.xlane.f32.xlu0 %v3240
      %v3242 = vpop.xlane.xlu0 %3241
      %v3243 = vsub.f32 %v3227, %v3238
      %v3244 = vsub.f32 %v3232, %v3242
      %v3245 = vmul.f32 %v3243, 1.442695
      %v3246 = vpow.pop %v3245
      %v3247 = vmul.f32 %v3244, 1.442695
      %v3248 = vpow.pop %v3247
      %v3249 = vsel %vm3235, %v3246, 0.0
      %3250 = vadd.xlane.f32.xlu0 %v3249
      %v3251 = vpop.xlane.xlu0 %3250
      %v3252 = vsel %vm3239, %v3248, 0.0
      %3253 = vadd.xlane.f32.xlu0 %v3252
      %v3254 = vpop.xlane.xlu0 %3253
      %v3255 = vrcp.pop %v3251
      %v3256 = vmul.f32 %v3246, %v3255
      %v3257 = vrcp.pop %v3254
      %v3258 = vmul.f32 %v3248, %v3257
      %3259 = vst.msk [vmem:[%s703] sm:$0xff] %vm3235, %v3256
      %3260 = vst.msk [vmem:[%s703 + $0x8] sm:$0x3] %vm3239, %v3258
      %p3261 = scmp.lt.s32.totalorder %s33, 1
      %s3262 = scalar_select %p3261, %s33, 1
      %s3263 = smul.addr %s3262, 2
      %s3264 = smul.addr %s3263, 8
      %s3265 = scalar_lea.vmem %s22, %s3264
      // Predicated region
      $region109: #{gatv2_forward.1} parent=107 // pred_check
        %p3266 = pneg %p523
      $region110: #{gatv2_forward.1} parent=107 // pred_check_branch
        %3268 = sbr.rel (%p3266) target = $region112
      $region111: #{gatv2_forward.1} parent=107 // pred_region
        _
      $region112: #{gatv2_forward.1} parent=107 // pred_fallthru
        _
    $region108: #{gatv2_forward.1} parent=5 // pred_fallthru
      _
    %p3269 = scmp.le.s32.totalorder 2, %s28
    // Predicated region
    $region113: #{gatv2_forward.1} parent=5 // pred_check
      %p3270 = pneg %p3269
    $region114: #{gatv2_forward.1} parent=5 // pred_check_branch
      %3272 = sbr.rel (%p3270) target = $region116
    $region115: #{gatv2_forward.1} parent=5 // pred_region
      %s3273 = ssub.s32 %s28, 2
      // Predicated region
      $region117: #{gatv2_forward.1} parent=115 // pred_check
        %p3274 = pneg %p529
      $region118: #{gatv2_forward.1} parent=115 // pred_check_branch
        %3276 = sbr.rel (%p3274) target = $region120
      $region119: #{gatv2_forward.1} parent=115 // pred_region
        %p3277 = scmp.lt.s32.totalorder %s34, 1
        %s3278 = scalar_select %p3277, %s34, 1
        %s3279 = smul.addr %s3278, 2
        %s3280 = smul.addr %s3279, 8
        %s3281 = scalar_lea.vmem %s22, %s3280
      $region120: #{gatv2_forward.1} parent=115 // pred_fallthru
        _
    $region116: #{gatv2_forward.1} parent=5 // pred_fallthru
      _
  $region6: #{gatv2_forward.1} parent=0 // loop_footer
    %s32 = sadd.s32 1, %s28
  $region7: #{gatv2_forward.1} parent=0 // loop_footer_branch
    %27 = sbr.rel target = $region3
  $region8: #{gatv2_forward.1} parent=0 // loop_exit
    _

</llo_original>
